<compile_context>
chip_gen: v5e
topology: v5e:2x2
jax: 0.10.0
libtpu: 0.0.40
codegen_flags: <defaults>
</compile_context>

<pallas_src>
import functools

import jax
import jax.numpy as jnp
import numpy as np
from jax import lax
from jax.experimental import pallas as pl
from jax.experimental.pallas import tpu as pltpu


_MM_DTYPE = jnp.float32   # matmul operand dtype (bf16 is a one-line switch on v6e/v7x)


def _mm(a, b):
    return jnp.dot(a.astype(_MM_DTYPE), b.astype(_MM_DTYPE),
                   preferred_element_type=jnp.float32)


def _gelu_tanh(x):
    return 0.5 * x * (1.0 + jnp.tanh(0.7978845608028654 * (x + 0.044715 * x * x * x)))


# ------------------------------------------------------------------ kernel ---
def _mixer_block_kernel(
    temp_ref,                       # SMEM (heads,)            raw temperature
    mask_ref,                       # (N, 9)                   3x3 border-validity mask
    fx_ref,                         # (1, N, C)                residual stream
    ln1_g_ref, ln1_b_ref,           # (1, C)
    conv_w_ref, conv_b_ref,         # (9*C, 2*inner), (1, 2*inner)   merged x|fx conv
    gate_w_ref, gate_b_ref,         # (inner, heads*G), (1, heads*G) block-diag gate
    inver_ref,                      # (N, G)
    ln2_g_ref, ln2_b_ref,           # (G, Dh)
    wtrans_ref,                     # (Dh, Dh)
    out_w_ref, out_b_ref,           # (inner, C), (1, C)
    lnm_g_ref, lnm_b_ref,           # (1, C)                   ln_2 before MLP
    mlp_w1_ref, mlp_b1_ref,         # (C, Hm), (1, Hm)
    mlp_w2_ref, mlp_b2_ref,         # (Hm, C), (1, C)
    o_ref,                          # (1, N, C)
    *, heads, dim_head, H, W):
    f32 = jnp.float32
    N, C = fx_ref.shape[1], fx_ref.shape[2]
    inner = heads * dim_head
    G = inver_ref.shape[1]

    fx = fx_ref[0]                                               # (N, C)

    # ---- LayerNorm ln_1 --------------------------------------------------
    mu = jnp.mean(fx, axis=-1, keepdims=True)
    var = jnp.mean(jnp.square(fx - mu), axis=-1, keepdims=True)
    x_ln = (fx - mu) * lax.rsqrt(var + 1e-5) * ln1_g_ref[...] + ln1_b_ref[...]

    # ---- 3x3 SAME conv as roll-based im2col + ONE wide matmul -------------
    # gathered_t[n] = x_ln[n + oy*W + ox]  (zeroed outside the image via mask)
    mask = mask_ref[...]                                         # (N, 9)
    cols = []
    for t in range(9):
        oy, ox = t // 3 - 1, t % 3 - 1
        d = oy * W + ox
        if d == 0:
            cols.append(x_ln)                                    # center tap, always valid
        else:
            rolled = pltpu.roll(x_ln, (-d) % N, axis=0)          # XLU sublane rotate
            cols.append(rolled * mask[:, t:t + 1])
    im2col = jnp.concatenate(cols, axis=-1)                      # (N, 9C)
    proj = _mm(im2col, conv_w_ref[...]) + conv_b_ref[...]        # (N, 2*inner)
    x_mid = proj[:, :inner]                                      # (N, inner)
    fx_mid = proj[:, inner:]                                     # (N, inner)

    # ---- eigen-gate logits for ALL heads (one block-diagonal matmul) ------
    logits = _mm(x_mid, gate_w_ref[...]) + gate_b_ref[...]       # (N, heads*G)

    inver = inver_ref[...]
    g2 = ln2_g_ref[...]
    b2 = ln2_b_ref[...]
    w_t = wtrans_ref[...]

    # ---- per-head spectral mixer ------------------------------------------
    outs = []
    for h in range(heads):
        t_c = jnp.clip(temp_ref[h], 0.1, 5.0)                    # scalar from SMEM
        lg = logits[:, h * G:(h + 1) * G] / t_c                  # (N, G)
        lmax = jnp.max(lg, axis=-1, keepdims=True)
        e = jnp.exp(lg - lmax)
        gate = e * pl.reciprocal(jnp.sum(e, axis=-1, keepdims=True), approx=True)
        eig = gate * inver                                       # (N, G)

        fxm = fx_mid[:, h * dim_head:(h + 1) * dim_head]         # (N, Dh)
        # 'bhnc,bhng->bhgc': contract over n, LHS transposed (no eig.T materialized)
        spec = lax.dot_general(eig.astype(_MM_DTYPE), fxm.astype(_MM_DTYPE),
                               (((0,), (0,)), ((), ())),
                               preferred_element_type=f32)       # (G, Dh)

        # LayerNorm over the whole (G, Dh) slab
        s_mu = jnp.mean(spec)
        s_var = jnp.mean(jnp.square(spec - s_mu))
        sn = (spec - s_mu) * lax.rsqrt(s_var + 1e-5) * g2 + b2

        out_spec = _mm(sn, w_t)                                  # (G, Dh)
        outs.append(_mm(eig, out_spec))                          # (N, Dh)

    # ---- to_out (single matmul over all heads) + residual ------------------
    out_cat = jnp.concatenate(outs, axis=-1)                     # (N, inner)
    attn = fx + _mm(out_cat, out_w_ref[...]) + out_b_ref[...]    # (N, C)

    # ---- LayerNorm ln_2 + MLP (+ residual) --------------------------------
    mu2 = jnp.mean(attn, axis=-1, keepdims=True)
    var2 = jnp.mean(jnp.square(attn - mu2), axis=-1, keepdims=True)
    x2 = (attn - mu2) * lax.rsqrt(var2 + 1e-5) * lnm_g_ref[...] + lnm_b_ref[...]
    h1 = _gelu_tanh(_mm(x2, mlp_w1_ref[...]) + mlp_b1_ref[...])
    o_ref[0] = _mm(h1, mlp_w2_ref[...]) + mlp_b2_ref[...] + attn


# -------------------------------------------------------------- wrapper ------
@functools.lru_cache(maxsize=None)
def _border_mask(H, W):
    """(N, 9) mask: entry [n, t] is 1 iff the (dy,dx)=divmod(t,3)-1 neighbour of
    flattened position n lies inside the HxW image (zero-padded 3x3 SAME conv)."""
    N = H * W
    n = np.arange(N)
    y, x = n // W, n % W
    m = np.zeros((N, 9), np.float32)
    for t in range(9):
        oy, ox = t // 3 - 1, t % 3 - 1
        ok = (y + oy >= 0) & (y + oy < H) & (x + ox >= 0) & (x + ox < W)
        m[:, t] = ok.astype(np.float32)
    return m


def fuse_params(p, cfg):
    """One-time fusion of structural constants and weights (call once, reuse)."""
    H, W = cfg["H"], cfg["W"]
    heads, Dh, G = cfg["heads"], cfg["dim_head"], cfg["freq_num"]
    C = p["ln1_g"].shape[0]
    inner = heads * Dh
    # merged conv weights: (3,3,C,2*inner) -> (9C, 2*inner) for the im2col matmul
    conv_w = jnp.concatenate([p["convx_w"], p["convfx_w"]], axis=-1).reshape(9 * C, 2 * inner)
    conv_b = jnp.concatenate([p["convx_b"], p["convfx_b"]], axis=-1).reshape(1, 2 * inner)
    # block-diagonal gate weight: one matmul produces logits for all heads
    gate_w_bd = jnp.kron(jnp.eye(heads, dtype=p["gate_w"].dtype), p["gate_w"])   # (inner, heads*G)
    gate_b_bd = jnp.tile(p["gate_b"], heads).reshape(1, heads * G)
    return {
        "temperature": p["temperature"],
        "mask": jnp.asarray(_border_mask(H, W)),
        "ln1_g": p["ln1_g"].reshape(1, C), "ln1_b": p["ln1_b"].reshape(1, C),
        "conv_w": conv_w, "conv_b": conv_b,
        "gate_w": gate_w_bd, "gate_b": gate_b_bd,
        "inver": p["inver"],
        "ln2_g": p["ln2_g"], "ln2_b": p["ln2_b"],
        "w_trans": p["w_trans"],
        "out_w": p["out_w"], "out_b": p["out_b"].reshape(1, C),
        "ln2m_g": p["ln2m_g"].reshape(1, C), "ln2m_b": p["ln2m_b"].reshape(1, C),
        "mlp_w1": p["mlp_w1"], "mlp_b1": p["mlp_b1"].reshape(1, -1),
        "mlp_w2": p["mlp_w2"], "mlp_b2": p["mlp_b2"].reshape(1, C),
    }


def mixer_block_forward(fx, fp, cfg):
    B, N, C = fx.shape
    H, W = cfg["H"], cfg["W"]
    heads, Dh, G = cfg["heads"], cfg["dim_head"], cfg["freq_num"]
    inner = heads * Dh
    Hm = fp["mlp_w1"].shape[1]

    def bcast(shape):
        nd = len(shape)
        return pl.BlockSpec(tuple(shape), lambda b: (0,) * nd)

    kernel = functools.partial(_mixer_block_kernel, heads=heads, dim_head=Dh, H=H, W=W)

    return pl.pallas_call(
        kernel,
        out_shape=jax.ShapeDtypeStruct((B, N, C), jnp.float32),
        grid=(B,),
        in_specs=[
            pl.BlockSpec(memory_space=pltpu.MemorySpace.SMEM),   # temperature
            bcast((N, 9)),                                       # border mask
            pl.BlockSpec((1, N, C), lambda b: (b, 0, 0)),        # fx
            bcast((1, C)), bcast((1, C)),                        # ln_1 g/b
            bcast((9 * C, 2 * inner)), bcast((1, 2 * inner)),    # merged conv w/b
            bcast((inner, heads * G)), bcast((1, heads * G)),    # block-diag gate w/b
            bcast((N, G)),                                       # inver
            bcast((G, Dh)), bcast((G, Dh)),                      # layernorm2 g/b
            bcast((Dh, Dh)),                                     # w_trans
            bcast((inner, C)), bcast((1, C)),                    # to_out w/b
            bcast((1, C)), bcast((1, C)),                        # ln_2 (pre-MLP) g/b
            bcast((C, Hm)), bcast((1, Hm)),                      # mlp w1/b1
            bcast((Hm, C)), bcast((1, C)),                       # mlp w2/b2
        ],
        out_specs=pl.BlockSpec((1, N, C), lambda b: (b, 0, 0)),
        compiler_params=pltpu.CompilerParams(
            dimension_semantics=("parallel",),
            vmem_limit_bytes=32 * 1024 * 1024),
    )(
        fp["temperature"], fp["mask"], fx,
        fp["ln1_g"], fp["ln1_b"],
        fp["conv_w"], fp["conv_b"],
        fp["gate_w"], fp["gate_b"],
        fp["inver"],
        fp["ln2_g"], fp["ln2_b"],
        fp["w_trans"],
        fp["out_w"], fp["out_b"],
        fp["ln2m_g"], fp["ln2m_b"],
        fp["mlp_w1"], fp["mlp_b1"],
        fp["mlp_w2"], fp["mlp_b2"],
    )


# ------------------------------------------------------- pure-JAX reference --
def reference_forward(fx, p, cfg):
    hp = jax.lax.Precision.HIGHEST
    B, N, C = fx.shape
    H, W = cfg["H"], cfg["W"]
    heads, Dh, G = cfg["heads"], cfg["dim_head"], cfg["freq_num"]
    inner = heads * Dh

    def ln(x, g, b, axes):
        mu = x.mean(axes, keepdims=True)
        var = ((x - mu) ** 2).mean(axes, keepdims=True)
        return (x - mu) / jnp.sqrt(var + 1e-5) * g + b

    def conv(x, w, b):
        y = jax.lax.conv_general_dilated(
            x, w, (1, 1), "SAME",
            dimension_numbers=("NHWC", "HWIO", "NHWC"), precision=hp)
        return y + b

    x_ln = ln(fx, p["ln1_g"], p["ln1_b"], -1)
    x_img = x_ln.reshape(B, H, W, C)
    x_mid = conv(x_img, p["convx_w"], p["convx_b"]).reshape(B, N, heads, Dh).transpose(0, 2, 1, 3)
    fx_mid = conv(x_img, p["convfx_w"], p["convfx_b"]).reshape(B, N, heads, Dh).transpose(0, 2, 1, 3)

    t = jnp.clip(p["temperature"], 0.1, 5.0).reshape(1, heads, 1, 1)
    logits = (jnp.einsum("bhnd,dg->bhng", x_mid, p["gate_w"], precision=hp)
              + p["gate_b"]) / t
    gate = jax.nn.softmax(logits, axis=-1)
    eigens = gate * p["inver"][None, None]
    spec = jnp.einsum("bhnc,bhng->bhgc", fx_mid, eigens, precision=hp)
    spec = ln(spec, p["ln2_g"], p["ln2_b"], (-2, -1))
    out_spec = jnp.einsum("bhgi,io->bhgo", spec, p["w_trans"], precision=hp)
    out_x = jnp.einsum("bhgc,bhng->bhnc", out_spec, eigens, precision=hp)
    out_x = out_x.transpose(0, 2, 1, 3).reshape(B, N, inner)
    attn = jnp.einsum("bni,ic->bnc", out_x, p["out_w"], precision=hp) + p["out_b"]
    fx = attn + fx

    x2 = ln(fx, p["ln2m_g"], p["ln2m_b"], -1)
    h = _gelu_tanh(jnp.einsum("bnc,ch->bnh", x2, p["mlp_w1"], precision=hp) + p["mlp_b1"])
    fx = jnp.einsum("bnh,hc->bnc", h, p["mlp_w2"], precision=hp) + p["mlp_b2"] + fx
    return fx


# -------------------------------------------------------------------- main ---
if __name__ == "__main__":
    B, heads, C = 2, 4, 32       # B>=2 keeps both v7x TensorCores busy
    H, W = 8, 8
    N = H * W
    G = 16                       # freq_num
    mlp_ratio = 4
    Dh = C // heads
    inner = heads * Dh
    cfg = dict(H=H, W=W, heads=heads, dim_head=Dh, freq_num=G)

    key = jax.random.PRNGKey(0)
    ks = jax.random.split(key, 16)

    def u(k, shape, scale):
        return jax.random.uniform(k, shape, jnp.float32, -scale, scale)

    # TODO(synk): robust_spectral.grid_spectral_points is unavailable; the fixed
    # spectral basis `inver` is replaced by deterministic random rows L2-normalized
    # along the last dim (matching F.normalize(p=2, dim=-1)).
    inver_raw = jax.random.normal(ks[6], (N, G), jnp.float32)
    inver = inver_raw / jnp.linalg.norm(inver_raw, axis=-1, keepdims=True)

    params = {
        "ln1_g": jnp.ones((C,), jnp.float32), "ln1_b": jnp.zeros((C,), jnp.float32),
        "convx_w": u(ks[0], (3, 3, C, inner), 1.0 / np.sqrt(9 * C)),
        "convx_b": u(ks[1], (inner,), 1.0 / np.sqrt(9 * C)),
        "convfx_w": u(ks[2], (3, 3, C, inner), 1.0 / np.sqrt(9 * C)),
        "convfx_b": u(ks[3], (inner,), 1.0 / np.sqrt(9 * C)),
        "gate_w": u(ks[4], (Dh, G), 1.0 / np.sqrt(Dh)),
        "gate_b": u(ks[5], (G,), 1.0 / np.sqrt(Dh)),
        "temperature": 0.5 * jnp.ones((heads,), jnp.float32),
        "inver": inver,
        "ln2_g": jnp.ones((G, Dh), jnp.float32), "ln2_b": jnp.zeros((G, Dh), jnp.float32),
        "w_trans": u(ks[7], (Dh, Dh), np.sqrt(6.0 / Dh)),
        "out_w": u(ks[8], (inner, C), 1.0 / np.sqrt(inner)),
        "out_b": u(ks[9], (C,), 1.0 / np.sqrt(inner)),
        "ln2m_g": jnp.ones((C,), jnp.float32), "ln2m_b": jnp.zeros((C,), jnp.float32),
        "mlp_w1": u(ks[10], (C, C * mlp_ratio), 1.0 / np.sqrt(C)),
        "mlp_b1": u(ks[11], (C * mlp_ratio,), 1.0 / np.sqrt(C)),
        "mlp_w2": u(ks[12], (C * mlp_ratio, C), 1.0 / np.sqrt(C * mlp_ratio)),
        "mlp_b2": u(ks[13], (C,), 1.0 / np.sqrt(C * mlp_ratio)),
    }

    fx = jax.random.normal(ks[15], (B, N, C), jnp.float32)

    fused = fuse_params(params, cfg)                  # one-time weight / constant fusion
    out = jax.block_until_ready(mixer_block_forward(fx, fused, cfg))
    ref = jax.block_until_ready(reference_forward(fx, params, cfg))
    np.testing.assert_allclose(np.asarray(out), np.asarray(ref), rtol=2e-2, atol=2e-2)
    print("KERNEL_OK")
</pallas_src>

<mosaic_0001>
module attributes {stable_mosaic.version = 11 : i64} {
  func.func @_mixer_block_kernel(%arg0: i32, %arg1: memref<4xf32, #tpu.memory_space<smem>>, %arg2: memref<64x9xf32, #tpu.memory_space<vmem>>, %arg3: memref<1x64x32xf32, #tpu.memory_space<vmem>>, %arg4: memref<1x32xf32, #tpu.memory_space<vmem>>, %arg5: memref<1x32xf32, #tpu.memory_space<vmem>>, %arg6: memref<288x64xf32, #tpu.memory_space<vmem>>, %arg7: memref<1x64xf32, #tpu.memory_space<vmem>>, %arg8: memref<32x64xf32, #tpu.memory_space<vmem>>, %arg9: memref<1x64xf32, #tpu.memory_space<vmem>>, %arg10: memref<64x16xf32, #tpu.memory_space<vmem>>, %arg11: memref<16x8xf32, #tpu.memory_space<vmem>>, %arg12: memref<16x8xf32, #tpu.memory_space<vmem>>, %arg13: memref<8x8xf32, #tpu.memory_space<vmem>>, %arg14: memref<32x32xf32, #tpu.memory_space<vmem>>, %arg15: memref<1x32xf32, #tpu.memory_space<vmem>>, %arg16: memref<1x32xf32, #tpu.memory_space<vmem>>, %arg17: memref<1x32xf32, #tpu.memory_space<vmem>>, %arg18: memref<32x128xf32, #tpu.memory_space<vmem>>, %arg19: memref<1x128xf32, #tpu.memory_space<vmem>>, %arg20: memref<128x32xf32, #tpu.memory_space<vmem>>, %arg21: memref<1x32xf32, #tpu.memory_space<vmem>>, %arg22: memref<1x64x32xf32, #tpu.memory_space<vmem>>) attributes {dimension_semantics = [#tpu.dimension_semantics<parallel>], iteration_bounds = array<i64: 2>, scalar_prefetch = 0 : i64, scratch_operands = 0 : i64, tpu.core_type = #tpu.core_type<tc>, window_params = [{transform_indices = @transform_0, window_bounds = array<i64: 4>}, {pipeline_mode = #tpu.pipeline_mode<synchronous>, transform_indices = @transform_1, window_bounds = array<i64: 64, 9>}, {transform_indices = @transform_2, window_bounds = array<i64: 1, 64, 32>}, {pipeline_mode = #tpu.pipeline_mode<synchronous>, transform_indices = @transform_3, window_bounds = array<i64: 1, 32>}, {pipeline_mode = #tpu.pipeline_mode<synchronous>, transform_indices = @transform_4, window_bounds = array<i64: 1, 32>}, {pipeline_mode = #tpu.pipeline_mode<synchronous>, transform_indices = @transform_5, window_bounds = array<i64: 288, 64>}, {pipeline_mode = #tpu.pipeline_mode<synchronous>, transform_indices = @transform_6, window_bounds = array<i64: 1, 64>}, {pipeline_mode = #tpu.pipeline_mode<synchronous>, transform_indices = @transform_7, window_bounds = array<i64: 32, 64>}, {pipeline_mode = #tpu.pipeline_mode<synchronous>, transform_indices = @transform_8, window_bounds = array<i64: 1, 64>}, {pipeline_mode = #tpu.pipeline_mode<synchronous>, transform_indices = @transform_9, window_bounds = array<i64: 64, 16>}, {pipeline_mode = #tpu.pipeline_mode<synchronous>, transform_indices = @transform_10, window_bounds = array<i64: 16, 8>}, {pipeline_mode = #tpu.pipeline_mode<synchronous>, transform_indices = @transform_11, window_bounds = array<i64: 16, 8>}, {pipeline_mode = #tpu.pipeline_mode<synchronous>, transform_indices = @transform_12, window_bounds = array<i64: 8, 8>}, {pipeline_mode = #tpu.pipeline_mode<synchronous>, transform_indices = @transform_13, window_bounds = array<i64: 32, 32>}, {pipeline_mode = #tpu.pipeline_mode<synchronous>, transform_indices = @transform_14, window_bounds = array<i64: 1, 32>}, {pipeline_mode = #tpu.pipeline_mode<synchronous>, transform_indices = @transform_15, window_bounds = array<i64: 1, 32>}, {pipeline_mode = #tpu.pipeline_mode<synchronous>, transform_indices = @transform_16, window_bounds = array<i64: 1, 32>}, {pipeline_mode = #tpu.pipeline_mode<synchronous>, transform_indices = @transform_17, window_bounds = array<i64: 32, 128>}, {pipeline_mode = #tpu.pipeline_mode<synchronous>, transform_indices = @transform_18, window_bounds = array<i64: 1, 128>}, {pipeline_mode = #tpu.pipeline_mode<synchronous>, transform_indices = @transform_19, window_bounds = array<i64: 128, 32>}, {pipeline_mode = #tpu.pipeline_mode<synchronous>, transform_indices = @transform_20, window_bounds = array<i64: 1, 32>}, {transform_indices = @transform_21, window_bounds = array<i64: 1, 64, 32>}]} {
    %c0 = arith.constant 0 : index
    %c0_0 = arith.constant 0 : index
    %c0_1 = arith.constant 0 : index
    %0 = vector.load %arg3[%c0, %c0_0, %c0_1] : memref<1x64x32xf32, #tpu.memory_space<vmem>>, vector<1x64x32xf32>
    %1 = vector.shape_cast %0 : vector<1x64x32xf32> to vector<64x32xf32>
    %cst = arith.constant dense<0.000000e+00> : vector<64xf32>
    %2 = vector.multi_reduction <add>, %1, %cst [1] : vector<64x32xf32> to vector<64xf32>
    %3 = vector.shape_cast %2 : vector<64xf32> to vector<64x1xf32>
    %cst_2 = arith.constant 3.200000e+01 : f32
    %4 = vector.broadcast %cst_2 : f32 to vector<64x1xf32>
    %5 = arith.divf %3, %4 : vector<64x1xf32>
    %6 = vector.broadcast %5 : vector<64x1xf32> to vector<64x32xf32>
    %7 = arith.subf %1, %6 : vector<64x32xf32>
    %8 = arith.mulf %7, %7 : vector<64x32xf32>
    %cst_3 = arith.constant dense<0.000000e+00> : vector<64xf32>
    %9 = vector.multi_reduction <add>, %8, %cst_3 [1] : vector<64x32xf32> to vector<64xf32>
    %10 = vector.shape_cast %9 : vector<64xf32> to vector<64x1xf32>
    %cst_4 = arith.constant 3.200000e+01 : f32
    %11 = vector.broadcast %cst_4 : f32 to vector<64x1xf32>
    %12 = arith.divf %10, %11 : vector<64x1xf32>
    %13 = vector.broadcast %5 : vector<64x1xf32> to vector<64x32xf32>
    %14 = arith.subf %1, %13 : vector<64x32xf32>
    %cst_5 = arith.constant 9.99999974E-6 : f32
    %15 = vector.broadcast %cst_5 : f32 to vector<64x1xf32>
    %16 = arith.addf %12, %15 : vector<64x1xf32>
    %17 = math.rsqrt %16 : vector<64x1xf32>
    %18 = vector.broadcast %17 : vector<64x1xf32> to vector<64x32xf32>
    %19 = arith.mulf %14, %18 : vector<64x32xf32>
    %c0_6 = arith.constant 0 : index
    %c0_7 = arith.constant 0 : index
    %20 = vector.load %arg4[%c0_6, %c0_7] : memref<1x32xf32, #tpu.memory_space<vmem>>, vector<1x32xf32>
    %21 = vector.broadcast %20 : vector<1x32xf32> to vector<64x32xf32>
    %22 = arith.mulf %19, %21 : vector<64x32xf32>
    %c0_8 = arith.constant 0 : index
    %c0_9 = arith.constant 0 : index
    %23 = vector.load %arg5[%c0_8, %c0_9] : memref<1x32xf32, #tpu.memory_space<vmem>>, vector<1x32xf32>
    %24 = vector.broadcast %23 : vector<1x32xf32> to vector<64x32xf32>
    %25 = arith.addf %22, %24 : vector<64x32xf32>
    %c0_10 = arith.constant 0 : index
    %c0_11 = arith.constant 0 : index
    %26 = vector.load %arg2[%c0_10, %c0_11] : memref<64x9xf32, #tpu.memory_space<vmem>>, vector<64x9xf32>
    %c9_i32 = arith.constant 9 : i32
    %27 = tpu.dynamic_rotate %25 by %c9_i32 dim 0 : vector<64x32xf32>, i32 -> vector<64x32xf32>
    %28 = vector.extract_strided_slice %26 {offsets = [0, 0], sizes = [64, 1], strides = [1, 1]} : vector<64x9xf32> to vector<64x1xf32>
    %29 = vector.broadcast %28 : vector<64x1xf32> to vector<64x32xf32>
    %30 = arith.mulf %27, %29 : vector<64x32xf32>
    %c8_i32 = arith.constant 8 : i32
    %31 = tpu.dynamic_rotate %25 by %c8_i32 dim 0 : vector<64x32xf32>, i32 -> vector<64x32xf32>
    %32 = vector.extract_strided_slice %26 {offsets = [0, 1], sizes = [64, 1], strides = [1, 1]} : vector<64x9xf32> to vector<64x1xf32>
    %33 = vector.broadcast %32 : vector<64x1xf32> to vector<64x32xf32>
    %34 = arith.mulf %31, %33 : vector<64x32xf32>
    %c7_i32 = arith.constant 7 : i32
    %35 = tpu.dynamic_rotate %25 by %c7_i32 dim 0 : vector<64x32xf32>, i32 -> vector<64x32xf32>
    %36 = vector.extract_strided_slice %26 {offsets = [0, 2], sizes = [64, 1], strides = [1, 1]} : vector<64x9xf32> to vector<64x1xf32>
    %37 = vector.broadcast %36 : vector<64x1xf32> to vector<64x32xf32>
    %38 = arith.mulf %35, %37 : vector<64x32xf32>
    %c1_i32 = arith.constant 1 : i32
    %39 = tpu.dynamic_rotate %25 by %c1_i32 dim 0 : vector<64x32xf32>, i32 -> vector<64x32xf32>
    %40 = vector.extract_strided_slice %26 {offsets = [0, 3], sizes = [64, 1], strides = [1, 1]} : vector<64x9xf32> to vector<64x1xf32>
    %41 = vector.broadcast %40 : vector<64x1xf32> to vector<64x32xf32>
    %42 = arith.mulf %39, %41 : vector<64x32xf32>
    %c63_i32 = arith.constant 63 : i32
    %43 = tpu.dynamic_rotate %25 by %c63_i32 dim 0 : vector<64x32xf32>, i32 -> vector<64x32xf32>
    %44 = vector.extract_strided_slice %26 {offsets = [0, 5], sizes = [64, 1], strides = [1, 1]} : vector<64x9xf32> to vector<64x1xf32>
    %45 = vector.broadcast %44 : vector<64x1xf32> to vector<64x32xf32>
    %46 = arith.mulf %43, %45 : vector<64x32xf32>
    %c57_i32 = arith.constant 57 : i32
    %47 = tpu.dynamic_rotate %25 by %c57_i32 dim 0 : vector<64x32xf32>, i32 -> vector<64x32xf32>
    %48 = vector.extract_strided_slice %26 {offsets = [0, 6], sizes = [64, 1], strides = [1, 1]} : vector<64x9xf32> to vector<64x1xf32>
    %49 = vector.broadcast %48 : vector<64x1xf32> to vector<64x32xf32>
    %50 = arith.mulf %47, %49 : vector<64x32xf32>
    %c56_i32 = arith.constant 56 : i32
    %51 = tpu.dynamic_rotate %25 by %c56_i32 dim 0 : vector<64x32xf32>, i32 -> vector<64x32xf32>
    %52 = vector.extract_strided_slice %26 {offsets = [0, 7], sizes = [64, 1], strides = [1, 1]} : vector<64x9xf32> to vector<64x1xf32>
    %53 = vector.broadcast %52 : vector<64x1xf32> to vector<64x32xf32>
    %54 = arith.mulf %51, %53 : vector<64x32xf32>
    %c55_i32 = arith.constant 55 : i32
    %55 = tpu.dynamic_rotate %25 by %c55_i32 dim 0 : vector<64x32xf32>, i32 -> vector<64x32xf32>
    %56 = vector.extract_strided_slice %26 {offsets = [0, 8], sizes = [64, 1], strides = [1, 1]} : vector<64x9xf32> to vector<64x1xf32>
    %57 = vector.broadcast %56 : vector<64x1xf32> to vector<64x32xf32>
    %58 = arith.mulf %55, %57 : vector<64x32xf32>
    %59 = tpu.concatenate %30, %34, %38, %42, %25, %46, %50, %54, %58 in 1 : vector<64x32xf32>, vector<64x32xf32>, vector<64x32xf32>, vector<64x32xf32>, vector<64x32xf32>, vector<64x32xf32>, vector<64x32xf32>, vector<64x32xf32>, vector<64x32xf32> -> vector<64x288xf32>
    %c0_12 = arith.constant 0 : index
    %c0_13 = arith.constant 0 : index
    %60 = vector.load %arg6[%c0_12, %c0_13] : memref<288x64xf32, #tpu.memory_space<vmem>>, vector<288x64xf32>
    %cst_14 = arith.constant dense<0.000000e+00> : vector<64x64xf32>
    %61 = tpu.matmul %59, %60, %cst_14 {dimension_numbers = #tpu.dot_dimension_numbers<[1], [0], [0], [1], [0, 0, 1, 1], [], []>} : vector<64x288xf32>, vector<288x64xf32>, vector<64x64xf32> -> vector<64x64xf32>
    %c0_15 = arith.constant 0 : index
    %c0_16 = arith.constant 0 : index
    %62 = vector.load %arg7[%c0_15, %c0_16] : memref<1x64xf32, #tpu.memory_space<vmem>>, vector<1x64xf32>
    %63 = vector.broadcast %62 : vector<1x64xf32> to vector<64x64xf32>
    %64 = arith.addf %61, %63 : vector<64x64xf32>
    %65 = vector.extract_strided_slice %64 {offsets = [0, 0], sizes = [64, 32], strides = [1, 1]} : vector<64x64xf32> to vector<64x32xf32>
    %66 = vector.extract_strided_slice %64 {offsets = [0, 32], sizes = [64, 32], strides = [1, 1]} : vector<64x64xf32> to vector<64x32xf32>
    %c0_17 = arith.constant 0 : index
    %c0_18 = arith.constant 0 : index
    %67 = vector.load %arg8[%c0_17, %c0_18] : memref<32x64xf32, #tpu.memory_space<vmem>>, vector<32x64xf32>
    %cst_19 = arith.constant dense<0.000000e+00> : vector<64x64xf32>
    %68 = tpu.matmul %65, %67, %cst_19 {dimension_numbers = #tpu.dot_dimension_numbers<[1], [0], [0], [1], [0, 0, 1, 1], [], []>} : vector<64x32xf32>, vector<32x64xf32>, vector<64x64xf32> -> vector<64x64xf32>
    %c0_20 = arith.constant 0 : index
    %c0_21 = arith.constant 0 : index
    %69 = vector.load %arg9[%c0_20, %c0_21] : memref<1x64xf32, #tpu.memory_space<vmem>>, vector<1x64xf32>
    %70 = vector.broadcast %69 : vector<1x64xf32> to vector<64x64xf32>
    %71 = arith.addf %68, %70 : vector<64x64xf32>
    %c0_22 = arith.constant 0 : index
    %c0_23 = arith.constant 0 : index
    %72 = vector.load %arg10[%c0_22, %c0_23] : memref<64x16xf32, #tpu.memory_space<vmem>>, vector<64x16xf32>
    %c0_24 = arith.constant 0 : index
    %c0_25 = arith.constant 0 : index
    %73 = vector.load %arg11[%c0_24, %c0_25] : memref<16x8xf32, #tpu.memory_space<vmem>>, vector<16x8xf32>
    %c0_26 = arith.constant 0 : index
    %c0_27 = arith.constant 0 : index
    %74 = vector.load %arg12[%c0_26, %c0_27] : memref<16x8xf32, #tpu.memory_space<vmem>>, vector<16x8xf32>
    %c0_28 = arith.constant 0 : index
    %c0_29 = arith.constant 0 : index
    %75 = vector.load %arg13[%c0_28, %c0_29] : memref<8x8xf32, #tpu.memory_space<vmem>>, vector<8x8xf32>
    %c0_30 = arith.constant 0 : index
    %76 = memref.load %arg1[%c0_30] : memref<4xf32, #tpu.memory_space<smem>>
    %cst_31 = arith.constant 1.000000e-01 : f32
    %cst_32 = arith.constant 5.000000e+00 : f32
    %77 = arith.maximumf %cst_31, %76 : f32
    %78 = arith.minimumf %cst_32, %77 : f32
    %79 = vector.extract_strided_slice %71 {offsets = [0, 0], sizes = [64, 16], strides = [1, 1]} : vector<64x64xf32> to vector<64x16xf32>
    %80 = vector.broadcast %78 : f32 to vector<64x16xf32>
    %81 = arith.divf %79, %80 : vector<64x16xf32>
    %cst_33 = arith.constant dense<0xFF800000> : vector<64xf32>
    %82 = vector.multi_reduction <maximumf>, %81, %cst_33 [1] : vector<64x16xf32> to vector<64xf32>
    %83 = vector.shape_cast %82 : vector<64xf32> to vector<64x1xf32>
    %84 = vector.broadcast %83 : vector<64x1xf32> to vector<64x16xf32>
    %85 = arith.subf %81, %84 : vector<64x16xf32>
    %86 = math.exp %85 : vector<64x16xf32>
    %cst_34 = arith.constant dense<0.000000e+00> : vector<64xf32>
    %87 = vector.multi_reduction <add>, %86, %cst_34 [1] : vector<64x16xf32> to vector<64xf32>
    %88 = vector.shape_cast %87 : vector<64xf32> to vector<64x1xf32>
    %89 = tpu.reciprocal %88 {approx = true} : vector<64x1xf32> -> vector<64x1xf32>
    %90 = vector.broadcast %89 : vector<64x1xf32> to vector<64x16xf32>
    %91 = arith.mulf %86, %90 : vector<64x16xf32>
    %92 = arith.mulf %91, %72 : vector<64x16xf32>
    %93 = vector.extract_strided_slice %66 {offsets = [0, 0], sizes = [64, 8], strides = [1, 1]} : vector<64x32xf32> to vector<64x8xf32>
    %cst_35 = arith.constant dense<0.000000e+00> : vector<16x8xf32>
    %94 = tpu.matmul %92, %93, %cst_35 {dimension_numbers = #tpu.dot_dimension_numbers<[0], [0], [1], [1], [0, 1, 1, 1], [], []>} : vector<64x16xf32>, vector<64x8xf32>, vector<16x8xf32> -> vector<16x8xf32>
    %95 = vector.shape_cast %94 : vector<16x8xf32> to vector<1x16x8xf32>
    %cst_36 = arith.constant dense<0.000000e+00> : vector<1xf32>
    %96 = vector.multi_reduction <add>, %95, %cst_36 [1, 2] : vector<1x16x8xf32> to vector<1xf32>
    %97 = vector.shape_cast %96 : vector<1xf32> to vector<1x1x1xf32>
    %98 = vector.extract %97[0, 0, 0] : f32 from vector<1x1x1xf32>
    %cst_37 = arith.constant 1.280000e+02 : f32
    %99 = arith.divf %98, %cst_37 : f32
    %100 = vector.broadcast %99 : f32 to vector<16x8xf32>
    %101 = arith.subf %94, %100 : vector<16x8xf32>
    %102 = arith.mulf %101, %101 : vector<16x8xf32>
    %103 = vector.shape_cast %102 : vector<16x8xf32> to vector<1x16x8xf32>
    %cst_38 = arith.constant dense<0.000000e+00> : vector<1xf32>
    %104 = vector.multi_reduction <add>, %103, %cst_38 [1, 2] : vector<1x16x8xf32> to vector<1xf32>
    %105 = vector.shape_cast %104 : vector<1xf32> to vector<1x1x1xf32>
    %106 = vector.extract %105[0, 0, 0] : f32 from vector<1x1x1xf32>
    %cst_39 = arith.constant 1.280000e+02 : f32
    %107 = arith.divf %106, %cst_39 : f32
    %108 = vector.broadcast %99 : f32 to vector<16x8xf32>
    %109 = arith.subf %94, %108 : vector<16x8xf32>
    %cst_40 = arith.constant 9.99999974E-6 : f32
    %110 = arith.addf %107, %cst_40 : f32
    %111 = math.rsqrt %110 : f32
    %112 = vector.broadcast %111 : f32 to vector<16x8xf32>
    %113 = arith.mulf %109, %112 : vector<16x8xf32>
    %114 = arith.mulf %113, %73 : vector<16x8xf32>
    %115 = arith.addf %114, %74 : vector<16x8xf32>
    %cst_41 = arith.constant dense<0.000000e+00> : vector<16x8xf32>
    %116 = tpu.matmul %115, %75, %cst_41 {dimension_numbers = #tpu.dot_dimension_numbers<[1], [0], [0], [1], [0, 0, 1, 1], [], []>} : vector<16x8xf32>, vector<8x8xf32>, vector<16x8xf32> -> vector<16x8xf32>
    %cst_42 = arith.constant dense<0.000000e+00> : vector<64x8xf32>
    %117 = tpu.matmul %92, %116, %cst_42 {dimension_numbers = #tpu.dot_dimension_numbers<[1], [0], [0], [1], [0, 0, 1, 1], [], []>} : vector<64x16xf32>, vector<16x8xf32>, vector<64x8xf32> -> vector<64x8xf32>
    %c1 = arith.constant 1 : index
    %118 = memref.load %arg1[%c1] : memref<4xf32, #tpu.memory_space<smem>>
    %cst_43 = arith.constant 1.000000e-01 : f32
    %cst_44 = arith.constant 5.000000e+00 : f32
    %119 = arith.maximumf %cst_43, %118 : f32
    %120 = arith.minimumf %cst_44, %119 : f32
    %121 = vector.extract_strided_slice %71 {offsets = [0, 16], sizes = [64, 16], strides = [1, 1]} : vector<64x64xf32> to vector<64x16xf32>
    %122 = vector.broadcast %120 : f32 to vector<64x16xf32>
    %123 = arith.divf %121, %122 : vector<64x16xf32>
    %cst_45 = arith.constant dense<0xFF800000> : vector<64xf32>
    %124 = vector.multi_reduction <maximumf>, %123, %cst_45 [1] : vector<64x16xf32> to vector<64xf32>
    %125 = vector.shape_cast %124 : vector<64xf32> to vector<64x1xf32>
    %126 = vector.broadcast %125 : vector<64x1xf32> to vector<64x16xf32>
    %127 = arith.subf %123, %126 : vector<64x16xf32>
    %128 = math.exp %127 : vector<64x16xf32>
    %cst_46 = arith.constant dense<0.000000e+00> : vector<64xf32>
    %129 = vector.multi_reduction <add>, %128, %cst_46 [1] : vector<64x16xf32> to vector<64xf32>
    %130 = vector.shape_cast %129 : vector<64xf32> to vector<64x1xf32>
    %131 = tpu.reciprocal %130 {approx = true} : vector<64x1xf32> -> vector<64x1xf32>
    %132 = vector.broadcast %131 : vector<64x1xf32> to vector<64x16xf32>
    %133 = arith.mulf %128, %132 : vector<64x16xf32>
    %134 = arith.mulf %133, %72 : vector<64x16xf32>
    %135 = vector.extract_strided_slice %66 {offsets = [0, 8], sizes = [64, 8], strides = [1, 1]} : vector<64x32xf32> to vector<64x8xf32>
    %cst_47 = arith.constant dense<0.000000e+00> : vector<16x8xf32>
    %136 = tpu.matmul %134, %135, %cst_47 {dimension_numbers = #tpu.dot_dimension_numbers<[0], [0], [1], [1], [0, 1, 1, 1], [], []>} : vector<64x16xf32>, vector<64x8xf32>, vector<16x8xf32> -> vector<16x8xf32>
    %137 = vector.shape_cast %136 : vector<16x8xf32> to vector<1x16x8xf32>
    %cst_48 = arith.constant dense<0.000000e+00> : vector<1xf32>
    %138 = vector.multi_reduction <add>, %137, %cst_48 [1, 2] : vector<1x16x8xf32> to vector<1xf32>
    %139 = vector.shape_cast %138 : vector<1xf32> to vector<1x1x1xf32>
    %140 = vector.extract %139[0, 0, 0] : f32 from vector<1x1x1xf32>
    %cst_49 = arith.constant 1.280000e+02 : f32
    %141 = arith.divf %140, %cst_49 : f32
    %142 = vector.broadcast %141 : f32 to vector<16x8xf32>
    %143 = arith.subf %136, %142 : vector<16x8xf32>
    %144 = arith.mulf %143, %143 : vector<16x8xf32>
    %145 = vector.shape_cast %144 : vector<16x8xf32> to vector<1x16x8xf32>
    %cst_50 = arith.constant dense<0.000000e+00> : vector<1xf32>
    %146 = vector.multi_reduction <add>, %145, %cst_50 [1, 2] : vector<1x16x8xf32> to vector<1xf32>
    %147 = vector.shape_cast %146 : vector<1xf32> to vector<1x1x1xf32>
    %148 = vector.extract %147[0, 0, 0] : f32 from vector<1x1x1xf32>
    %cst_51 = arith.constant 1.280000e+02 : f32
    %149 = arith.divf %148, %cst_51 : f32
    %150 = vector.broadcast %141 : f32 to vector<16x8xf32>
    %151 = arith.subf %136, %150 : vector<16x8xf32>
    %cst_52 = arith.constant 9.99999974E-6 : f32
    %152 = arith.addf %149, %cst_52 : f32
    %153 = math.rsqrt %152 : f32
    %154 = vector.broadcast %153 : f32 to vector<16x8xf32>
    %155 = arith.mulf %151, %154 : vector<16x8xf32>
    %156 = arith.mulf %155, %73 : vector<16x8xf32>
    %157 = arith.addf %156, %74 : vector<16x8xf32>
    %cst_53 = arith.constant dense<0.000000e+00> : vector<16x8xf32>
    %158 = tpu.matmul %157, %75, %cst_53 {dimension_numbers = #tpu.dot_dimension_numbers<[1], [0], [0], [1], [0, 0, 1, 1], [], []>} : vector<16x8xf32>, vector<8x8xf32>, vector<16x8xf32> -> vector<16x8xf32>
    %cst_54 = arith.constant dense<0.000000e+00> : vector<64x8xf32>
    %159 = tpu.matmul %134, %158, %cst_54 {dimension_numbers = #tpu.dot_dimension_numbers<[1], [0], [0], [1], [0, 0, 1, 1], [], []>} : vector<64x16xf32>, vector<16x8xf32>, vector<64x8xf32> -> vector<64x8xf32>
    %c2 = arith.constant 2 : index
    %160 = memref.load %arg1[%c2] : memref<4xf32, #tpu.memory_space<smem>>
    %cst_55 = arith.constant 1.000000e-01 : f32
    %cst_56 = arith.constant 5.000000e+00 : f32
    %161 = arith.maximumf %cst_55, %160 : f32
    %162 = arith.minimumf %cst_56, %161 : f32
    %163 = vector.extract_strided_slice %71 {offsets = [0, 32], sizes = [64, 16], strides = [1, 1]} : vector<64x64xf32> to vector<64x16xf32>
    %164 = vector.broadcast %162 : f32 to vector<64x16xf32>
    %165 = arith.divf %163, %164 : vector<64x16xf32>
    %cst_57 = arith.constant dense<0xFF800000> : vector<64xf32>
    %166 = vector.multi_reduction <maximumf>, %165, %cst_57 [1] : vector<64x16xf32> to vector<64xf32>
    %167 = vector.shape_cast %166 : vector<64xf32> to vector<64x1xf32>
    %168 = vector.broadcast %167 : vector<64x1xf32> to vector<64x16xf32>
    %169 = arith.subf %165, %168 : vector<64x16xf32>
    %170 = math.exp %169 : vector<64x16xf32>
    %cst_58 = arith.constant dense<0.000000e+00> : vector<64xf32>
    %171 = vector.multi_reduction <add>, %170, %cst_58 [1] : vector<64x16xf32> to vector<64xf32>
    %172 = vector.shape_cast %171 : vector<64xf32> to vector<64x1xf32>
    %173 = tpu.reciprocal %172 {approx = true} : vector<64x1xf32> -> vector<64x1xf32>
    %174 = vector.broadcast %173 : vector<64x1xf32> to vector<64x16xf32>
    %175 = arith.mulf %170, %174 : vector<64x16xf32>
    %176 = arith.mulf %175, %72 : vector<64x16xf32>
    %177 = vector.extract_strided_slice %66 {offsets = [0, 16], sizes = [64, 8], strides = [1, 1]} : vector<64x32xf32> to vector<64x8xf32>
    %cst_59 = arith.constant dense<0.000000e+00> : vector<16x8xf32>
    %178 = tpu.matmul %176, %177, %cst_59 {dimension_numbers = #tpu.dot_dimension_numbers<[0], [0], [1], [1], [0, 1, 1, 1], [], []>} : vector<64x16xf32>, vector<64x8xf32>, vector<16x8xf32> -> vector<16x8xf32>
    %179 = vector.shape_cast %178 : vector<16x8xf32> to vector<1x16x8xf32>
    %cst_60 = arith.constant dense<0.000000e+00> : vector<1xf32>
    %180 = vector.multi_reduction <add>, %179, %cst_60 [1, 2] : vector<1x16x8xf32> to vector<1xf32>
    %181 = vector.shape_cast %180 : vector<1xf32> to vector<1x1x1xf32>
    %182 = vector.extract %181[0, 0, 0] : f32 from vector<1x1x1xf32>
    %cst_61 = arith.constant 1.280000e+02 : f32
    %183 = arith.divf %182, %cst_61 : f32
    %184 = vector.broadcast %183 : f32 to vector<16x8xf32>
    %185 = arith.subf %178, %184 : vector<16x8xf32>
    %186 = arith.mulf %185, %185 : vector<16x8xf32>
    %187 = vector.shape_cast %186 : vector<16x8xf32> to vector<1x16x8xf32>
    %cst_62 = arith.constant dense<0.000000e+00> : vector<1xf32>
    %188 = vector.multi_reduction <add>, %187, %cst_62 [1, 2] : vector<1x16x8xf32> to vector<1xf32>
    %189 = vector.shape_cast %188 : vector<1xf32> to vector<1x1x1xf32>
    %190 = vector.extract %189[0, 0, 0] : f32 from vector<1x1x1xf32>
    %cst_63 = arith.constant 1.280000e+02 : f32
    %191 = arith.divf %190, %cst_63 : f32
    %192 = vector.broadcast %183 : f32 to vector<16x8xf32>
    %193 = arith.subf %178, %192 : vector<16x8xf32>
    %cst_64 = arith.constant 9.99999974E-6 : f32
    %194 = arith.addf %191, %cst_64 : f32
    %195 = math.rsqrt %194 : f32
    %196 = vector.broadcast %195 : f32 to vector<16x8xf32>
    %197 = arith.mulf %193, %196 : vector<16x8xf32>
    %198 = arith.mulf %197, %73 : vector<16x8xf32>
    %199 = arith.addf %198, %74 : vector<16x8xf32>
    %cst_65 = arith.constant dense<0.000000e+00> : vector<16x8xf32>
    %200 = tpu.matmul %199, %75, %cst_65 {dimension_numbers = #tpu.dot_dimension_numbers<[1], [0], [0], [1], [0, 0, 1, 1], [], []>} : vector<16x8xf32>, vector<8x8xf32>, vector<16x8xf32> -> vector<16x8xf32>
    %cst_66 = arith.constant dense<0.000000e+00> : vector<64x8xf32>
    %201 = tpu.matmul %176, %200, %cst_66 {dimension_numbers = #tpu.dot_dimension_numbers<[1], [0], [0], [1], [0, 0, 1, 1], [], []>} : vector<64x16xf32>, vector<16x8xf32>, vector<64x8xf32> -> vector<64x8xf32>
    %c3 = arith.constant 3 : index
    %202 = memref.load %arg1[%c3] : memref<4xf32, #tpu.memory_space<smem>>
    %cst_67 = arith.constant 1.000000e-01 : f32
    %cst_68 = arith.constant 5.000000e+00 : f32
    %203 = arith.maximumf %cst_67, %202 : f32
    %204 = arith.minimumf %cst_68, %203 : f32
    %205 = vector.extract_strided_slice %71 {offsets = [0, 48], sizes = [64, 16], strides = [1, 1]} : vector<64x64xf32> to vector<64x16xf32>
    %206 = vector.broadcast %204 : f32 to vector<64x16xf32>
    %207 = arith.divf %205, %206 : vector<64x16xf32>
    %cst_69 = arith.constant dense<0xFF800000> : vector<64xf32>
    %208 = vector.multi_reduction <maximumf>, %207, %cst_69 [1] : vector<64x16xf32> to vector<64xf32>
    %209 = vector.shape_cast %208 : vector<64xf32> to vector<64x1xf32>
    %210 = vector.broadcast %209 : vector<64x1xf32> to vector<64x16xf32>
    %211 = arith.subf %207, %210 : vector<64x16xf32>
    %212 = math.exp %211 : vector<64x16xf32>
    %cst_70 = arith.constant dense<0.000000e+00> : vector<64xf32>
    %213 = vector.multi_reduction <add>, %212, %cst_70 [1] : vector<64x16xf32> to vector<64xf32>
    %214 = vector.shape_cast %213 : vector<64xf32> to vector<64x1xf32>
    %215 = tpu.reciprocal %214 {approx = true} : vector<64x1xf32> -> vector<64x1xf32>
    %216 = vector.broadcast %215 : vector<64x1xf32> to vector<64x16xf32>
    %217 = arith.mulf %212, %216 : vector<64x16xf32>
    %218 = arith.mulf %217, %72 : vector<64x16xf32>
    %219 = vector.extract_strided_slice %66 {offsets = [0, 24], sizes = [64, 8], strides = [1, 1]} : vector<64x32xf32> to vector<64x8xf32>
    %cst_71 = arith.constant dense<0.000000e+00> : vector<16x8xf32>
    %220 = tpu.matmul %218, %219, %cst_71 {dimension_numbers = #tpu.dot_dimension_numbers<[0], [0], [1], [1], [0, 1, 1, 1], [], []>} : vector<64x16xf32>, vector<64x8xf32>, vector<16x8xf32> -> vector<16x8xf32>
    %221 = vector.shape_cast %220 : vector<16x8xf32> to vector<1x16x8xf32>
    %cst_72 = arith.constant dense<0.000000e+00> : vector<1xf32>
    %222 = vector.multi_reduction <add>, %221, %cst_72 [1, 2] : vector<1x16x8xf32> to vector<1xf32>
    %223 = vector.shape_cast %222 : vector<1xf32> to vector<1x1x1xf32>
    %224 = vector.extract %223[0, 0, 0] : f32 from vector<1x1x1xf32>
    %cst_73 = arith.constant 1.280000e+02 : f32
    %225 = arith.divf %224, %cst_73 : f32
    %226 = vector.broadcast %225 : f32 to vector<16x8xf32>
    %227 = arith.subf %220, %226 : vector<16x8xf32>
    %228 = arith.mulf %227, %227 : vector<16x8xf32>
    %229 = vector.shape_cast %228 : vector<16x8xf32> to vector<1x16x8xf32>
    %cst_74 = arith.constant dense<0.000000e+00> : vector<1xf32>
    %230 = vector.multi_reduction <add>, %229, %cst_74 [1, 2] : vector<1x16x8xf32> to vector<1xf32>
    %231 = vector.shape_cast %230 : vector<1xf32> to vector<1x1x1xf32>
    %232 = vector.extract %231[0, 0, 0] : f32 from vector<1x1x1xf32>
    %cst_75 = arith.constant 1.280000e+02 : f32
    %233 = arith.divf %232, %cst_75 : f32
    %234 = vector.broadcast %225 : f32 to vector<16x8xf32>
    %235 = arith.subf %220, %234 : vector<16x8xf32>
    %cst_76 = arith.constant 9.99999974E-6 : f32
    %236 = arith.addf %233, %cst_76 : f32
    %237 = math.rsqrt %236 : f32
    %238 = vector.broadcast %237 : f32 to vector<16x8xf32>
    %239 = arith.mulf %235, %238 : vector<16x8xf32>
    %240 = arith.mulf %239, %73 : vector<16x8xf32>
    %241 = arith.addf %240, %74 : vector<16x8xf32>
    %cst_77 = arith.constant dense<0.000000e+00> : vector<16x8xf32>
    %242 = tpu.matmul %241, %75, %cst_77 {dimension_numbers = #tpu.dot_dimension_numbers<[1], [0], [0], [1], [0, 0, 1, 1], [], []>} : vector<16x8xf32>, vector<8x8xf32>, vector<16x8xf32> -> vector<16x8xf32>
    %cst_78 = arith.constant dense<0.000000e+00> : vector<64x8xf32>
    %243 = tpu.matmul %218, %242, %cst_78 {dimension_numbers = #tpu.dot_dimension_numbers<[1], [0], [0], [1], [0, 0, 1, 1], [], []>} : vector<64x16xf32>, vector<16x8xf32>, vector<64x8xf32> -> vector<64x8xf32>
    %244 = tpu.concatenate %117, %159, %201, %243 in 1 : vector<64x8xf32>, vector<64x8xf32>, vector<64x8xf32>, vector<64x8xf32> -> vector<64x32xf32>
    %c0_79 = arith.constant 0 : index
    %c0_80 = arith.constant 0 : index
    %245 = vector.load %arg14[%c0_79, %c0_80] : memref<32x32xf32, #tpu.memory_space<vmem>>, vector<32x32xf32>
    %cst_81 = arith.constant dense<0.000000e+00> : vector<64x32xf32>
    %246 = tpu.matmul %244, %245, %cst_81 {dimension_numbers = #tpu.dot_dimension_numbers<[1], [0], [0], [1], [0, 0, 1, 1], [], []>} : vector<64x32xf32>, vector<32x32xf32>, vector<64x32xf32> -> vector<64x32xf32>
    %247 = arith.addf %1, %246 : vector<64x32xf32>
    %c0_82 = arith.constant 0 : index
    %c0_83 = arith.constant 0 : index
    %248 = vector.load %arg15[%c0_82, %c0_83] : memref<1x32xf32, #tpu.memory_space<vmem>>, vector<1x32xf32>
    %249 = vector.broadcast %248 : vector<1x32xf32> to vector<64x32xf32>
    %250 = arith.addf %247, %249 : vector<64x32xf32>
    %cst_84 = arith.constant dense<0.000000e+00> : vector<64xf32>
    %251 = vector.multi_reduction <add>, %250, %cst_84 [1] : vector<64x32xf32> to vector<64xf32>
    %252 = vector.shape_cast %251 : vector<64xf32> to vector<64x1xf32>
    %cst_85 = arith.constant 3.200000e+01 : f32
    %253 = vector.broadcast %cst_85 : f32 to vector<64x1xf32>
    %254 = arith.divf %252, %253 : vector<64x1xf32>
    %255 = vector.broadcast %254 : vector<64x1xf32> to vector<64x32xf32>
    %256 = arith.subf %250, %255 : vector<64x32xf32>
    %257 = arith.mulf %256, %256 : vector<64x32xf32>
    %cst_86 = arith.constant dense<0.000000e+00> : vector<64xf32>
    %258 = vector.multi_reduction <add>, %257, %cst_86 [1] : vector<64x32xf32> to vector<64xf32>
    %259 = vector.shape_cast %258 : vector<64xf32> to vector<64x1xf32>
    %cst_87 = arith.constant 3.200000e+01 : f32
    %260 = vector.broadcast %cst_87 : f32 to vector<64x1xf32>
    %261 = arith.divf %259, %260 : vector<64x1xf32>
    %262 = vector.broadcast %254 : vector<64x1xf32> to vector<64x32xf32>
    %263 = arith.subf %250, %262 : vector<64x32xf32>
    %cst_88 = arith.constant 9.99999974E-6 : f32
    %264 = vector.broadcast %cst_88 : f32 to vector<64x1xf32>
    %265 = arith.addf %261, %264 : vector<64x1xf32>
    %266 = math.rsqrt %265 : vector<64x1xf32>
    %267 = vector.broadcast %266 : vector<64x1xf32> to vector<64x32xf32>
    %268 = arith.mulf %263, %267 : vector<64x32xf32>
    %c0_89 = arith.constant 0 : index
    %c0_90 = arith.constant 0 : index
    %269 = vector.load %arg16[%c0_89, %c0_90] : memref<1x32xf32, #tpu.memory_space<vmem>>, vector<1x32xf32>
    %270 = vector.broadcast %269 : vector<1x32xf32> to vector<64x32xf32>
    %271 = arith.mulf %268, %270 : vector<64x32xf32>
    %c0_91 = arith.constant 0 : index
    %c0_92 = arith.constant 0 : index
    %272 = vector.load %arg17[%c0_91, %c0_92] : memref<1x32xf32, #tpu.memory_space<vmem>>, vector<1x32xf32>
    %273 = vector.broadcast %272 : vector<1x32xf32> to vector<64x32xf32>
    %274 = arith.addf %271, %273 : vector<64x32xf32>
    %c0_93 = arith.constant 0 : index
    %c0_94 = arith.constant 0 : index
    %275 = vector.load %arg18[%c0_93, %c0_94] : memref<32x128xf32, #tpu.memory_space<vmem>>, vector<32x128xf32>
    %cst_95 = arith.constant dense<0.000000e+00> : vector<64x128xf32>
    %276 = tpu.matmul %274, %275, %cst_95 {dimension_numbers = #tpu.dot_dimension_numbers<[1], [0], [0], [1], [0, 0, 1, 1], [], []>} : vector<64x32xf32>, vector<32x128xf32>, vector<64x128xf32> -> vector<64x128xf32>
    %c0_96 = arith.constant 0 : index
    %c0_97 = arith.constant 0 : index
    %277 = vector.load %arg19[%c0_96, %c0_97] : memref<1x128xf32, #tpu.memory_space<vmem>>, vector<1x128xf32>
    %278 = vector.broadcast %277 : vector<1x128xf32> to vector<64x128xf32>
    %279 = arith.addf %276, %278 : vector<64x128xf32>
    %cst_98 = arith.constant 5.000000e-01 : f32
    %280 = vector.broadcast %cst_98 : f32 to vector<64x128xf32>
    %281 = arith.mulf %280, %279 : vector<64x128xf32>
    %cst_99 = arith.constant 4.471500e-02 : f32
    %282 = vector.broadcast %cst_99 : f32 to vector<64x128xf32>
    %283 = arith.mulf %282, %279 : vector<64x128xf32>
    %284 = arith.mulf %283, %279 : vector<64x128xf32>
    %285 = arith.mulf %284, %279 : vector<64x128xf32>
    %286 = arith.addf %279, %285 : vector<64x128xf32>
    %cst_100 = arith.constant 0.797884583 : f32
    %287 = vector.broadcast %cst_100 : f32 to vector<64x128xf32>
    %288 = arith.mulf %287, %286 : vector<64x128xf32>
    %289 = math.tanh %288 : vector<64x128xf32>
    %cst_101 = arith.constant 1.000000e+00 : f32
    %290 = vector.broadcast %cst_101 : f32 to vector<64x128xf32>
    %291 = arith.addf %290, %289 : vector<64x128xf32>
    %292 = arith.mulf %281, %291 : vector<64x128xf32>
    %c0_102 = arith.constant 0 : index
    %c0_103 = arith.constant 0 : index
    %293 = vector.load %arg20[%c0_102, %c0_103] : memref<128x32xf32, #tpu.memory_space<vmem>>, vector<128x32xf32>
    %cst_104 = arith.constant dense<0.000000e+00> : vector<64x32xf32>
    %294 = tpu.matmul %292, %293, %cst_104 {dimension_numbers = #tpu.dot_dimension_numbers<[1], [0], [0], [1], [0, 0, 1, 1], [], []>} : vector<64x128xf32>, vector<128x32xf32>, vector<64x32xf32> -> vector<64x32xf32>
    %c0_105 = arith.constant 0 : index
    %c0_106 = arith.constant 0 : index
    %295 = vector.load %arg21[%c0_105, %c0_106] : memref<1x32xf32, #tpu.memory_space<vmem>>, vector<1x32xf32>
    %296 = vector.broadcast %295 : vector<1x32xf32> to vector<64x32xf32>
    %297 = arith.addf %294, %296 : vector<64x32xf32>
    %298 = arith.addf %297, %250 : vector<64x32xf32>
    %c0_107 = arith.constant 0 : index
    %c0_108 = arith.constant 0 : index
    %c0_109 = arith.constant 0 : index
    %299 = vector.load %arg22[%c0_107, %c0_108, %c0_109] : memref<1x64x32xf32, #tpu.memory_space<vmem>>, vector<1x64x32xf32>
    %300 = vector.shape_cast %299 : vector<1x64x32xf32> to vector<64x32xf32>
    %301 = vector.shape_cast %298 : vector<64x32xf32> to vector<1x64x32xf32>
    tpu.vector_store %arg22[%c0_107, %c0_108, %c0_109], %301 {strides = array<i32>} : memref<1x64x32xf32, #tpu.memory_space<vmem>>, vector<1x64x32xf32>,
    return
  }
  func.func @transform_0(%arg0: i32) -> i32 {
    %c0_i32 = arith.constant 0 : i32
    %c0_i32_0 = arith.constant 0 : i32
    return %c0_i32 : i32
  }
  func.func @transform_1(%arg0: i32) -> (i32, i32) {
    %c0_i32 = arith.constant 0 : i32
    %c0_i32_0 = arith.constant 0 : i32
    %c0_i32_1 = arith.constant 0 : i32
    return %c0_i32, %c0_i32_0 : i32, i32
  }
  func.func @transform_2(%arg0: i32) -> (i32, i32, i32) {
    %c0_i32 = arith.constant 0 : i32
    %c0_i32_0 = arith.constant 0 : i32
    %c0_i32_1 = arith.constant 0 : i32
    return %arg0, %c0_i32, %c0_i32_0 : i32, i32, i32
  }
  func.func @transform_3(%arg0: i32) -> (i32, i32) {
    %c0_i32 = arith.constant 0 : i32
    %c0_i32_0 = arith.constant 0 : i32
    %c0_i32_1 = arith.constant 0 : i32
    return %c0_i32, %c0_i32_0 : i32, i32
  }
  func.func @transform_4(%arg0: i32) -> (i32, i32) {
    %c0_i32 = arith.constant 0 : i32
    %c0_i32_0 = arith.constant 0 : i32
    %c0_i32_1 = arith.constant 0 : i32
    return %c0_i32, %c0_i32_0 : i32, i32
  }
  func.func @transform_5(%arg0: i32) -> (i32, i32) {
    %c0_i32 = arith.constant 0 : i32
    %c0_i32_0 = arith.constant 0 : i32
    %c0_i32_1 = arith.constant 0 : i32
    return %c0_i32, %c0_i32_0 : i32, i32
  }
  func.func @transform_6(%arg0: i32) -> (i32, i32) {
    %c0_i32 = arith.constant 0 : i32
    %c0_i32_0 = arith.constant 0 : i32
    %c0_i32_1 = arith.constant 0 : i32
    return %c0_i32, %c0_i32_0 : i32, i32
  }
  func.func @transform_7(%arg0: i32) -> (i32, i32) {
    %c0_i32 = arith.constant 0 : i32
    %c0_i32_0 = arith.constant 0 : i32
    %c0_i32_1 = arith.constant 0 : i32
    return %c0_i32, %c0_i32_0 : i32, i32
  }
  func.func @transform_8(%arg0: i32) -> (i32, i32) {
    %c0_i32 = arith.constant 0 : i32
    %c0_i32_0 = arith.constant 0 : i32
    %c0_i32_1 = arith.constant 0 : i32
    return %c0_i32, %c0_i32_0 : i32, i32
  }
  func.func @transform_9(%arg0: i32) -> (i32, i32) {
    %c0_i32 = arith.constant 0 : i32
    %c0_i32_0 = arith.constant 0 : i32
    %c0_i32_1 = arith.constant 0 : i32
    return %c0_i32, %c0_i32_0 : i32, i32
  }
  func.func @transform_10(%arg0: i32) -> (i32, i32) {
    %c0_i32 = arith.constant 0 : i32
    %c0_i32_0 = arith.constant 0 : i32
    %c0_i32_1 = arith.constant 0 : i32
    return %c0_i32, %c0_i32_0 : i32, i32
  }
  func.func @transform_11(%arg0: i32) -> (i32, i32) {
    %c0_i32 = arith.constant 0 : i32
    %c0_i32_0 = arith.constant 0 : i32
    %c0_i32_1 = arith.constant 0 : i32
    return %c0_i32, %c0_i32_0 : i32, i32
  }
  func.func @transform_12(%arg0: i32) -> (i32, i32) {
    %c0_i32 = arith.constant 0 : i32
    %c0_i32_0 = arith.constant 0 : i32
    %c0_i32_1 = arith.constant 0 : i32
    return %c0_i32, %c0_i32_0 : i32, i32
  }
  func.func @transform_13(%arg0: i32) -> (i32, i32) {
    %c0_i32 = arith.constant 0 : i32
    %c0_i32_0 = arith.constant 0 : i32
    %c0_i32_1 = arith.constant 0 : i32
    return %c0_i32, %c0_i32_0 : i32, i32
  }
  func.func @transform_14(%arg0: i32) -> (i32, i32) {
    %c0_i32 = arith.constant 0 : i32
    %c0_i32_0 = arith.constant 0 : i32
    %c0_i32_1 = arith.constant 0 : i32
    return %c0_i32, %c0_i32_0 : i32, i32
  }
  func.func @transform_15(%arg0: i32) -> (i32, i32) {
    %c0_i32 = arith.constant 0 : i32
    %c0_i32_0 = arith.constant 0 : i32
    %c0_i32_1 = arith.constant 0 : i32
    return %c0_i32, %c0_i32_0 : i32, i32
  }
  func.func @transform_16(%arg0: i32) -> (i32, i32) {
    %c0_i32 = arith.constant 0 : i32
    %c0_i32_0 = arith.constant 0 : i32
    %c0_i32_1 = arith.constant 0 : i32
    return %c0_i32, %c0_i32_0 : i32, i32
  }
  func.func @transform_17(%arg0: i32) -> (i32, i32) {
    %c0_i32 = arith.constant 0 : i32
    %c0_i32_0 = arith.constant 0 : i32
    %c0_i32_1 = arith.constant 0 : i32
    return %c0_i32, %c0_i32_0 : i32, i32
  }
  func.func @transform_18(%arg0: i32) -> (i32, i32) {
    %c0_i32 = arith.constant 0 : i32
    %c0_i32_0 = arith.constant 0 : i32
    %c0_i32_1 = arith.constant 0 : i32
    return %c0_i32, %c0_i32_0 : i32, i32
  }
  func.func @transform_19(%arg0: i32) -> (i32, i32) {
    %c0_i32 = arith.constant 0 : i32
    %c0_i32_0 = arith.constant 0 : i32
    %c0_i32_1 = arith.constant 0 : i32
    return %c0_i32, %c0_i32_0 : i32, i32
  }
  func.func @transform_20(%arg0: i32) -> (i32, i32) {
    %c0_i32 = arith.constant 0 : i32
    %c0_i32_0 = arith.constant 0 : i32
    %c0_i32_1 = arith.constant 0 : i32
    return %c0_i32, %c0_i32_0 : i32, i32
  }
  func.func @transform_21(%arg0: i32) -> (i32, i32, i32) {
    %c0_i32 = arith.constant 0 : i32
    %c0_i32_0 = arith.constant 0 : i32
    %c0_i32_1 = arith.constant 0 : i32
    return %arg0, %c0_i32, %c0_i32_0 : i32, i32, i32
  }
}

</mosaic_0001>

<llo_original>
// kernel: tpu_custom_call.1
$region0: #{tpu_custom_call.1}
  #allocation0 [shape = 'u32[]', space=smem, size = 0x4, offset = 0x4, fixed_abs, tag = 'smem constant byte address 0x4 - core index']
  #allocation1 [shape = 'u32[72,128]{1,0:T(1,128)}', space=vmem, size = 0x9000, scoped, tag = 'internal scratch']
  %s0 = inlined_call_operand.vmem [shape: f32[4], index: 0, kind: input, shape index: {}]
  %s1 = inlined_call_operand.vmem [shape: f32[64,9], index: 1, kind: input, shape index: {}]
  %s2 = inlined_call_operand.vmem [shape: f32[2,64,32], index: 2, kind: input, shape index: {}]
  %s3 = inlined_call_operand.vmem [shape: f32[1,32], index: 3, kind: input, shape index: {}]
  %s4 = inlined_call_operand.vmem [shape: f32[1,32], index: 4, kind: input, shape index: {}]
  %s5 = inlined_call_operand.vmem [shape: f32[288,64], index: 5, kind: input, shape index: {}]
  %s6 = inlined_call_operand.vmem [shape: f32[1,64], index: 6, kind: input, shape index: {}]
  %s7 = inlined_call_operand.vmem [shape: f32[32,64], index: 7, kind: input, shape index: {}]
  %s8 = inlined_call_operand.vmem [shape: f32[1,64], index: 8, kind: input, shape index: {}]
  %s9 = inlined_call_operand.vmem [shape: f32[64,16], index: 9, kind: input, shape index: {}]
  %s10 = inlined_call_operand.vmem [shape: f32[16,8], index: 10, kind: input, shape index: {}]
  %s11 = inlined_call_operand.vmem [shape: f32[16,8], index: 11, kind: input, shape index: {}]
  %s12 = inlined_call_operand.vmem [shape: f32[8,8], index: 12, kind: input, shape index: {}]
  %s13 = inlined_call_operand.vmem [shape: f32[32,32], index: 13, kind: input, shape index: {}]
  %s14 = inlined_call_operand.vmem [shape: f32[1,32], index: 14, kind: input, shape index: {}]
  %s15 = inlined_call_operand.vmem [shape: f32[1,32], index: 15, kind: input, shape index: {}]
  %s16 = inlined_call_operand.vmem [shape: f32[1,32], index: 16, kind: input, shape index: {}]
  %s17 = inlined_call_operand.vmem [shape: f32[32,128], index: 17, kind: input, shape index: {}]
  %s18 = inlined_call_operand.vmem [shape: f32[1,128], index: 18, kind: input, shape index: {}]
  %s19 = inlined_call_operand.vmem [shape: f32[128,32], index: 19, kind: input, shape index: {}]
  %s20 = inlined_call_operand.vmem [shape: f32[1,32], index: 20, kind: input, shape index: {}]
  %s21 = inlined_call_operand.vmem [shape: f32[2,64,32], index: 21, kind: output, shape index: {}]
  %s22 = sld [smem:[#allocation0]]
  $region121: #{tpu_custom_call.1} parent=0
    _
  %s24 = ssub.s32 1, %s22
  %s25 = scalar_select 0, %s24, %s22
  $region1: #{tpu_custom_call.1} parent=0
    #allocation2 [shape = 'u8[512]{0}', space=smem, size = 0x200, scoped, tag = 'input window, operand 0, single buffered']
    #allocation3 [shape = 's32[2]{0}', space=sflag, size = 0x8, scoped, tag = 'scoped memory for tpu_custom_call.1']
    %26 = vsyncpa [#allocation3], 0
    loop: start=0, step=1, limit=4
    $region2: #{tpu_custom_call.1} parent=1 // loop_pre_header
      _
    $region3: #{tpu_custom_call.1} parent=1 // loop_header
      %s28 = sphi 0, %s32
      %p29 = scmp.ge.s32.totalorder %s28, 4
      %s36 = sphi 0, %s36
      %s38 = sphi 0, %s36
      %s39 = sphi 0, %s38
      %s53 = sphi 0, %s39
      %s57 = sphi 0, %s57
      %s59 = sphi 0, %s57
      %s60 = sphi 0, %s59
      %s74 = sphi 0, %s60
      %s80 = sphi 0, %s82
      %s83 = sphi 0, %s80
      %s84 = sphi 0, %s83
      %s100 = sphi 0, %s84
      %s104 = sphi 0, %s104
      %s106 = sphi 0, %s104
      %s107 = sphi 0, %s106
      %s121 = sphi 0, %s107
      %s125 = sphi 0, %s125
      %s127 = sphi 0, %s125
      %s128 = sphi 0, %s127
      %s142 = sphi 0, %s128
      %s146 = sphi 0, %s146
      %s148 = sphi 0, %s146
      %s149 = sphi 0, %s148
      %s163 = sphi 0, %s149
      %s167 = sphi 0, %s167
      %s169 = sphi 0, %s167
      %s170 = sphi 0, %s169
      %s184 = sphi 0, %s170
      %s188 = sphi 0, %s188
      %s190 = sphi 0, %s188
      %s191 = sphi 0, %s190
      %s205 = sphi 0, %s191
      %s209 = sphi 0, %s209
      %s211 = sphi 0, %s209
      %s212 = sphi 0, %s211
      %s226 = sphi 0, %s212
      %s230 = sphi 0, %s230
      %s232 = sphi 0, %s230
      %s233 = sphi 0, %s232
      %s247 = sphi 0, %s233
      %s251 = sphi 0, %s251
      %s253 = sphi 0, %s251
      %s254 = sphi 0, %s253
      %s268 = sphi 0, %s254
      %s272 = sphi 0, %s272
      %s274 = sphi 0, %s272
      %s275 = sphi 0, %s274
      %s289 = sphi 0, %s275
      %s293 = sphi 0, %s293
      %s295 = sphi 0, %s293
      %s296 = sphi 0, %s295
      %s310 = sphi 0, %s296
      %s314 = sphi 0, %s314
      %s316 = sphi 0, %s314
      %s317 = sphi 0, %s316
      %s331 = sphi 0, %s317
      %s335 = sphi 0, %s335
      %s337 = sphi 0, %s335
      %s338 = sphi 0, %s337
      %s352 = sphi 0, %s338
      %s356 = sphi 0, %s356
      %s358 = sphi 0, %s356
      %s359 = sphi 0, %s358
      %s373 = sphi 0, %s359
      %s377 = sphi 0, %s377
      %s379 = sphi 0, %s377
      %s380 = sphi 0, %s379
      %s394 = sphi 0, %s380
      %s398 = sphi 0, %s398
      %s400 = sphi 0, %s398
      %s401 = sphi 0, %s400
      %s415 = sphi 0, %s401
      %s419 = sphi 0, %s419
      %s421 = sphi 0, %s419
      %s422 = sphi 0, %s421
      %s436 = sphi 0, %s422
      %s440 = sphi 0, %s440
      %s442 = sphi 0, %s440
      %s443 = sphi 0, %s442
      %s457 = sphi 0, %s443
      %s461 = sphi 0, %s461
      %s463 = sphi 0, %s461
      %s464 = sphi 0, %s463
      %s478 = sphi 0, %s464
      %s484 = sphi 0, %s486
      %s487 = sphi 0, %s484
      %s488 = sphi 0, %s487
      %s504 = sphi 0, %s488
    $region4: #{tpu_custom_call.1} parent=1 // loop_header_branch
      %31 = sbr.rel (%p29) target = $region8
    $region5: #{tpu_custom_call.1} parent=1 // loop_body
      %s33 = ssub.s32 %s28, 1
      %s34 = ssub.s32 %s28, 2
      %s35 = sadd.s32 %s28, 1
      %s37 = sadd.s32 %s36, 1
      %p40 = scmp.eq.s32.totalorder %s28, 1
      %p41 = scmp.ne.s32.totalorder %s36, %s38
      %p42 = scmp.eq.s32.totalorder %s28, 0
      %p43 = por %p41, %p42
      %p44 = scmp.ne.s32.totalorder %s36, %s38
      %p45 = scmp.eq.s32.totalorder %s33, 1
      %p46 = por %p44, %p45
      %p47 = scmp.ne.s32.totalorder %s38, %s39
      %p48 = scmp.eq.s32.totalorder %s33, 0
      %p49 = por %p47, %p48
      %p50 = scmp.ne.s32.totalorder %s38, %s39
      %p51 = scmp.eq.s32.totalorder %s34, 1
      %p52 = por %p50, %p51
      %p54 = scmp.ne.s32.totalorder %s39, %s53
      %p55 = scmp.eq.s32.totalorder %s34, 0
      %p56 = por %p54, %p55
      %s58 = sadd.s32 %s57, 1
      %p61 = scmp.eq.s32.totalorder %s28, 1
      %p62 = scmp.ne.s32.totalorder %s57, %s59
      %p63 = scmp.eq.s32.totalorder %s28, 0
      %p64 = por %p62, %p63
      %p65 = scmp.ne.s32.totalorder %s57, %s59
      %p66 = scmp.eq.s32.totalorder %s33, 1
      %p67 = por %p65, %p66
      %p68 = scmp.ne.s32.totalorder %s59, %s60
      %p69 = scmp.eq.s32.totalorder %s33, 0
      %p70 = por %p68, %p69
      %p71 = scmp.ne.s32.totalorder %s59, %s60
      %p72 = scmp.eq.s32.totalorder %s34, 1
      %p73 = por %p71, %p72
      %p75 = scmp.ne.s32.totalorder %s60, %s74
      %p76 = scmp.eq.s32.totalorder %s34, 0
      %p77 = por %p75, %p76
      %s78 = ssub.s32 %s28, %s35
      %p79 = scmp.eq.s32.totalorder %s78, 0
      %s81 = sadd.s32 %s80, 1
      %s82 = scalar_select %p79, %s80, %s81
      %p85 = pneg %p79
      %p86 = scmp.eq.s32.totalorder %s28, 1
      %p87 = por %p85, %p86
      %p88 = scmp.ne.s32.totalorder %s80, %s83
      %p89 = scmp.eq.s32.totalorder %s28, 0
      %p90 = por %p88, %p89
      %p91 = scmp.ne.s32.totalorder %s80, %s83
      %p92 = scmp.eq.s32.totalorder %s33, 1
      %p93 = por %p91, %p92
      %p94 = scmp.ne.s32.totalorder %s83, %s84
      %p95 = scmp.eq.s32.totalorder %s33, 0
      %p96 = por %p94, %p95
      %p97 = scmp.ne.s32.totalorder %s83, %s84
      %p98 = scmp.eq.s32.totalorder %s34, 1
      %p99 = por %p97, %p98
      %p101 = scmp.ne.s32.totalorder %s84, %s100
      %p102 = scmp.eq.s32.totalorder %s34, 0
      %p103 = por %p101, %p102
      %s105 = sadd.s32 %s104, 1
      %p108 = scmp.eq.s32.totalorder %s28, 1
      %p109 = scmp.ne.s32.totalorder %s104, %s106
      %p110 = scmp.eq.s32.totalorder %s28, 0
      %p111 = por %p109, %p110
      %p112 = scmp.ne.s32.totalorder %s104, %s106
      %p113 = scmp.eq.s32.totalorder %s33, 1
      %p114 = por %p112, %p113
      %p115 = scmp.ne.s32.totalorder %s106, %s107
      %p116 = scmp.eq.s32.totalorder %s33, 0
      %p117 = por %p115, %p116
      %p118 = scmp.ne.s32.totalorder %s106, %s107
      %p119 = scmp.eq.s32.totalorder %s34, 1
      %p120 = por %p118, %p119
      %p122 = scmp.ne.s32.totalorder %s107, %s121
      %p123 = scmp.eq.s32.totalorder %s34, 0
      %p124 = por %p122, %p123
      %s126 = sadd.s32 %s125, 1
      %p129 = scmp.eq.s32.totalorder %s28, 1
      %p130 = scmp.ne.s32.totalorder %s125, %s127
      %p131 = scmp.eq.s32.totalorder %s28, 0
      %p132 = por %p130, %p131
      %p133 = scmp.ne.s32.totalorder %s125, %s127
      %p134 = scmp.eq.s32.totalorder %s33, 1
      %p135 = por %p133, %p134
      %p136 = scmp.ne.s32.totalorder %s127, %s128
      %p137 = scmp.eq.s32.totalorder %s33, 0
      %p138 = por %p136, %p137
      %p139 = scmp.ne.s32.totalorder %s127, %s128
      %p140 = scmp.eq.s32.totalorder %s34, 1
      %p141 = por %p139, %p140
      %p143 = scmp.ne.s32.totalorder %s128, %s142
      %p144 = scmp.eq.s32.totalorder %s34, 0
      %p145 = por %p143, %p144
      %s147 = sadd.s32 %s146, 1
      %p150 = scmp.eq.s32.totalorder %s28, 1
      %p151 = scmp.ne.s32.totalorder %s146, %s148
      %p152 = scmp.eq.s32.totalorder %s28, 0
      %p153 = por %p151, %p152
      %p154 = scmp.ne.s32.totalorder %s146, %s148
      %p155 = scmp.eq.s32.totalorder %s33, 1
      %p156 = por %p154, %p155
      %p157 = scmp.ne.s32.totalorder %s148, %s149
      %p158 = scmp.eq.s32.totalorder %s33, 0
      %p159 = por %p157, %p158
      %p160 = scmp.ne.s32.totalorder %s148, %s149
      %p161 = scmp.eq.s32.totalorder %s34, 1
      %p162 = por %p160, %p161
      %p164 = scmp.ne.s32.totalorder %s149, %s163
      %p165 = scmp.eq.s32.totalorder %s34, 0
      %p166 = por %p164, %p165
      %s168 = sadd.s32 %s167, 1
      %p171 = scmp.eq.s32.totalorder %s28, 1
      %p172 = scmp.ne.s32.totalorder %s167, %s169
      %p173 = scmp.eq.s32.totalorder %s28, 0
      %p174 = por %p172, %p173
      %p175 = scmp.ne.s32.totalorder %s167, %s169
      %p176 = scmp.eq.s32.totalorder %s33, 1
      %p177 = por %p175, %p176
      %p178 = scmp.ne.s32.totalorder %s169, %s170
      %p179 = scmp.eq.s32.totalorder %s33, 0
      %p180 = por %p178, %p179
      %p181 = scmp.ne.s32.totalorder %s169, %s170
      %p182 = scmp.eq.s32.totalorder %s34, 1
      %p183 = por %p181, %p182
      %p185 = scmp.ne.s32.totalorder %s170, %s184
      %p186 = scmp.eq.s32.totalorder %s34, 0
      %p187 = por %p185, %p186
      %s189 = sadd.s32 %s188, 1
      %p192 = scmp.eq.s32.totalorder %s28, 1
      %p193 = scmp.ne.s32.totalorder %s188, %s190
      %p194 = scmp.eq.s32.totalorder %s28, 0
      %p195 = por %p193, %p194
      %p196 = scmp.ne.s32.totalorder %s188, %s190
      %p197 = scmp.eq.s32.totalorder %s33, 1
      %p198 = por %p196, %p197
      %p199 = scmp.ne.s32.totalorder %s190, %s191
      %p200 = scmp.eq.s32.totalorder %s33, 0
      %p201 = por %p199, %p200
      %p202 = scmp.ne.s32.totalorder %s190, %s191
      %p203 = scmp.eq.s32.totalorder %s34, 1
      %p204 = por %p202, %p203
      %p206 = scmp.ne.s32.totalorder %s191, %s205
      %p207 = scmp.eq.s32.totalorder %s34, 0
      %p208 = por %p206, %p207
      %s210 = sadd.s32 %s209, 1
      %p213 = scmp.eq.s32.totalorder %s28, 1
      %p214 = scmp.ne.s32.totalorder %s209, %s211
      %p215 = scmp.eq.s32.totalorder %s28, 0
      %p216 = por %p214, %p215
      %p217 = scmp.ne.s32.totalorder %s209, %s211
      %p218 = scmp.eq.s32.totalorder %s33, 1
      %p219 = por %p217, %p218
      %p220 = scmp.ne.s32.totalorder %s211, %s212
      %p221 = scmp.eq.s32.totalorder %s33, 0
      %p222 = por %p220, %p221
      %p223 = scmp.ne.s32.totalorder %s211, %s212
      %p224 = scmp.eq.s32.totalorder %s34, 1
      %p225 = por %p223, %p224
      %p227 = scmp.ne.s32.totalorder %s212, %s226
      %p228 = scmp.eq.s32.totalorder %s34, 0
      %p229 = por %p227, %p228
      %s231 = sadd.s32 %s230, 1
      %p234 = scmp.eq.s32.totalorder %s28, 1
      %p235 = scmp.ne.s32.totalorder %s230, %s232
      %p236 = scmp.eq.s32.totalorder %s28, 0
      %p237 = por %p235, %p236
      %p238 = scmp.ne.s32.totalorder %s230, %s232
      %p239 = scmp.eq.s32.totalorder %s33, 1
      %p240 = por %p238, %p239
      %p241 = scmp.ne.s32.totalorder %s232, %s233
      %p242 = scmp.eq.s32.totalorder %s33, 0
      %p243 = por %p241, %p242
      %p244 = scmp.ne.s32.totalorder %s232, %s233
      %p245 = scmp.eq.s32.totalorder %s34, 1
      %p246 = por %p244, %p245
      %p248 = scmp.ne.s32.totalorder %s233, %s247
      %p249 = scmp.eq.s32.totalorder %s34, 0
      %p250 = por %p248, %p249
      %s252 = sadd.s32 %s251, 1
      %p255 = scmp.eq.s32.totalorder %s28, 1
      %p256 = scmp.ne.s32.totalorder %s251, %s253
      %p257 = scmp.eq.s32.totalorder %s28, 0
      %p258 = por %p256, %p257
      %p259 = scmp.ne.s32.totalorder %s251, %s253
      %p260 = scmp.eq.s32.totalorder %s33, 1
      %p261 = por %p259, %p260
      %p262 = scmp.ne.s32.totalorder %s253, %s254
      %p263 = scmp.eq.s32.totalorder %s33, 0
      %p264 = por %p262, %p263
      %p265 = scmp.ne.s32.totalorder %s253, %s254
      %p266 = scmp.eq.s32.totalorder %s34, 1
      %p267 = por %p265, %p266
      %p269 = scmp.ne.s32.totalorder %s254, %s268
      %p270 = scmp.eq.s32.totalorder %s34, 0
      %p271 = por %p269, %p270
      %s273 = sadd.s32 %s272, 1
      %p276 = scmp.eq.s32.totalorder %s28, 1
      %p277 = scmp.ne.s32.totalorder %s272, %s274
      %p278 = scmp.eq.s32.totalorder %s28, 0
      %p279 = por %p277, %p278
      %p280 = scmp.ne.s32.totalorder %s272, %s274
      %p281 = scmp.eq.s32.totalorder %s33, 1
      %p282 = por %p280, %p281
      %p283 = scmp.ne.s32.totalorder %s274, %s275
      %p284 = scmp.eq.s32.totalorder %s33, 0
      %p285 = por %p283, %p284
      %p286 = scmp.ne.s32.totalorder %s274, %s275
      %p287 = scmp.eq.s32.totalorder %s34, 1
      %p288 = por %p286, %p287
      %p290 = scmp.ne.s32.totalorder %s275, %s289
      %p291 = scmp.eq.s32.totalorder %s34, 0
      %p292 = por %p290, %p291
      %s294 = sadd.s32 %s293, 1
      %p297 = scmp.eq.s32.totalorder %s28, 1
      %p298 = scmp.ne.s32.totalorder %s293, %s295
      %p299 = scmp.eq.s32.totalorder %s28, 0
      %p300 = por %p298, %p299
      %p301 = scmp.ne.s32.totalorder %s293, %s295
      %p302 = scmp.eq.s32.totalorder %s33, 1
      %p303 = por %p301, %p302
      %p304 = scmp.ne.s32.totalorder %s295, %s296
      %p305 = scmp.eq.s32.totalorder %s33, 0
      %p306 = por %p304, %p305
      %p307 = scmp.ne.s32.totalorder %s295, %s296
      %p308 = scmp.eq.s32.totalorder %s34, 1
      %p309 = por %p307, %p308
      %p311 = scmp.ne.s32.totalorder %s296, %s310
      %p312 = scmp.eq.s32.totalorder %s34, 0
      %p313 = por %p311, %p312
      %s315 = sadd.s32 %s314, 1
      %p318 = scmp.eq.s32.totalorder %s28, 1
      %p319 = scmp.ne.s32.totalorder %s314, %s316
      %p320 = scmp.eq.s32.totalorder %s28, 0
      %p321 = por %p319, %p320
      %p322 = scmp.ne.s32.totalorder %s314, %s316
      %p323 = scmp.eq.s32.totalorder %s33, 1
      %p324 = por %p322, %p323
      %p325 = scmp.ne.s32.totalorder %s316, %s317
      %p326 = scmp.eq.s32.totalorder %s33, 0
      %p327 = por %p325, %p326
      %p328 = scmp.ne.s32.totalorder %s316, %s317
      %p329 = scmp.eq.s32.totalorder %s34, 1
      %p330 = por %p328, %p329
      %p332 = scmp.ne.s32.totalorder %s317, %s331
      %p333 = scmp.eq.s32.totalorder %s34, 0
      %p334 = por %p332, %p333
      %s336 = sadd.s32 %s335, 1
      %p339 = scmp.eq.s32.totalorder %s28, 1
      %p340 = scmp.ne.s32.totalorder %s335, %s337
      %p341 = scmp.eq.s32.totalorder %s28, 0
      %p342 = por %p340, %p341
      %p343 = scmp.ne.s32.totalorder %s335, %s337
      %p344 = scmp.eq.s32.totalorder %s33, 1
      %p345 = por %p343, %p344
      %p346 = scmp.ne.s32.totalorder %s337, %s338
      %p347 = scmp.eq.s32.totalorder %s33, 0
      %p348 = por %p346, %p347
      %p349 = scmp.ne.s32.totalorder %s337, %s338
      %p350 = scmp.eq.s32.totalorder %s34, 1
      %p351 = por %p349, %p350
      %p353 = scmp.ne.s32.totalorder %s338, %s352
      %p354 = scmp.eq.s32.totalorder %s34, 0
      %p355 = por %p353, %p354
      %s357 = sadd.s32 %s356, 1
      %p360 = scmp.eq.s32.totalorder %s28, 1
      %p361 = scmp.ne.s32.totalorder %s356, %s358
      %p362 = scmp.eq.s32.totalorder %s28, 0
      %p363 = por %p361, %p362
      %p364 = scmp.ne.s32.totalorder %s356, %s358
      %p365 = scmp.eq.s32.totalorder %s33, 1
      %p366 = por %p364, %p365
      %p367 = scmp.ne.s32.totalorder %s358, %s359
      %p368 = scmp.eq.s32.totalorder %s33, 0
      %p369 = por %p367, %p368
      %p370 = scmp.ne.s32.totalorder %s358, %s359
      %p371 = scmp.eq.s32.totalorder %s34, 1
      %p372 = por %p370, %p371
      %p374 = scmp.ne.s32.totalorder %s359, %s373
      %p375 = scmp.eq.s32.totalorder %s34, 0
      %p376 = por %p374, %p375
      %s378 = sadd.s32 %s377, 1
      %p381 = scmp.eq.s32.totalorder %s28, 1
      %p382 = scmp.ne.s32.totalorder %s377, %s379
      %p383 = scmp.eq.s32.totalorder %s28, 0
      %p384 = por %p382, %p383
      %p385 = scmp.ne.s32.totalorder %s377, %s379
      %p386 = scmp.eq.s32.totalorder %s33, 1
      %p387 = por %p385, %p386
      %p388 = scmp.ne.s32.totalorder %s379, %s380
      %p389 = scmp.eq.s32.totalorder %s33, 0
      %p390 = por %p388, %p389
      %p391 = scmp.ne.s32.totalorder %s379, %s380
      %p392 = scmp.eq.s32.totalorder %s34, 1
      %p393 = por %p391, %p392
      %p395 = scmp.ne.s32.totalorder %s380, %s394
      %p396 = scmp.eq.s32.totalorder %s34, 0
      %p397 = por %p395, %p396
      %s399 = sadd.s32 %s398, 1
      %p402 = scmp.eq.s32.totalorder %s28, 1
      %p403 = scmp.ne.s32.totalorder %s398, %s400
      %p404 = scmp.eq.s32.totalorder %s28, 0
      %p405 = por %p403, %p404
      %p406 = scmp.ne.s32.totalorder %s398, %s400
      %p407 = scmp.eq.s32.totalorder %s33, 1
      %p408 = por %p406, %p407
      %p409 = scmp.ne.s32.totalorder %s400, %s401
      %p410 = scmp.eq.s32.totalorder %s33, 0
      %p411 = por %p409, %p410
      %p412 = scmp.ne.s32.totalorder %s400, %s401
      %p413 = scmp.eq.s32.totalorder %s34, 1
      %p414 = por %p412, %p413
      %p416 = scmp.ne.s32.totalorder %s401, %s415
      %p417 = scmp.eq.s32.totalorder %s34, 0
      %p418 = por %p416, %p417
      %s420 = sadd.s32 %s419, 1
      %p423 = scmp.eq.s32.totalorder %s28, 1
      %p424 = scmp.ne.s32.totalorder %s419, %s421
      %p425 = scmp.eq.s32.totalorder %s28, 0
      %p426 = por %p424, %p425
      %p427 = scmp.ne.s32.totalorder %s419, %s421
      %p428 = scmp.eq.s32.totalorder %s33, 1
      %p429 = por %p427, %p428
      %p430 = scmp.ne.s32.totalorder %s421, %s422
      %p431 = scmp.eq.s32.totalorder %s33, 0
      %p432 = por %p430, %p431
      %p433 = scmp.ne.s32.totalorder %s421, %s422
      %p434 = scmp.eq.s32.totalorder %s34, 1
      %p435 = por %p433, %p434
      %p437 = scmp.ne.s32.totalorder %s422, %s436
      %p438 = scmp.eq.s32.totalorder %s34, 0
      %p439 = por %p437, %p438
      %s441 = sadd.s32 %s440, 1
      %p444 = scmp.eq.s32.totalorder %s28, 1
      %p445 = scmp.ne.s32.totalorder %s440, %s442
      %p446 = scmp.eq.s32.totalorder %s28, 0
      %p447 = por %p445, %p446
      %p448 = scmp.ne.s32.totalorder %s440, %s442
      %p449 = scmp.eq.s32.totalorder %s33, 1
      %p450 = por %p448, %p449
      %p451 = scmp.ne.s32.totalorder %s442, %s443
      %p452 = scmp.eq.s32.totalorder %s33, 0
      %p453 = por %p451, %p452
      %p454 = scmp.ne.s32.totalorder %s442, %s443
      %p455 = scmp.eq.s32.totalorder %s34, 1
      %p456 = por %p454, %p455
      %p458 = scmp.ne.s32.totalorder %s443, %s457
      %p459 = scmp.eq.s32.totalorder %s34, 0
      %p460 = por %p458, %p459
      %s462 = sadd.s32 %s461, 1
      %p465 = scmp.eq.s32.totalorder %s28, 1
      %p466 = scmp.ne.s32.totalorder %s461, %s463
      %p467 = scmp.eq.s32.totalorder %s28, 0
      %p468 = por %p466, %p467
      %p469 = scmp.ne.s32.totalorder %s461, %s463
      %p470 = scmp.eq.s32.totalorder %s33, 1
      %p471 = por %p469, %p470
      %p472 = scmp.ne.s32.totalorder %s463, %s464
      %p473 = scmp.eq.s32.totalorder %s33, 0
      %p474 = por %p472, %p473
      %p475 = scmp.ne.s32.totalorder %s463, %s464
      %p476 = scmp.eq.s32.totalorder %s34, 1
      %p477 = por %p475, %p476
      %p479 = scmp.ne.s32.totalorder %s464, %s478
      %p480 = scmp.eq.s32.totalorder %s34, 0
      %p481 = por %p479, %p480
      %s482 = ssub.s32 %s28, %s35
      %p483 = scmp.eq.s32.totalorder %s482, 0
      %s485 = sadd.s32 %s484, 1
      %s486 = scalar_select %p483, %s484, %s485
      %p489 = pneg %p483
      %p490 = scmp.eq.s32.totalorder %s28, 1
      %p491 = por %p489, %p490
      %p492 = scmp.ne.s32.totalorder %s484, %s487
      %p493 = scmp.eq.s32.totalorder %s28, 0
      %p494 = por %p492, %p493
      %p495 = scmp.ne.s32.totalorder %s484, %s487
      %p496 = scmp.eq.s32.totalorder %s33, 1
      %p497 = por %p495, %p496
      %p498 = scmp.ne.s32.totalorder %s487, %s488
      %p499 = scmp.eq.s32.totalorder %s33, 0
      %p500 = por %p498, %p499
      %p501 = scmp.ne.s32.totalorder %s487, %s488
      %p502 = scmp.eq.s32.totalorder %s34, 1
      %p503 = por %p501, %p502
      %p505 = scmp.ne.s32.totalorder %s488, %s504
      %p506 = scmp.eq.s32.totalorder %s34, 0
      %p507 = por %p505, %p506
      %p508 = scmp.le.s32.totalorder 1, %s28
      %p509 = scmp.lt.s32.totalorder %s28, 3
      %p510 = pnand %p508, %p509
      %p511 = pneg %p510
      // Predicated region
      $region9: #{tpu_custom_call.1} parent=5 // pred_check
        _
      $region10: #{tpu_custom_call.1} parent=5 // pred_check_branch
        %513 = sbr.rel (%p510) target = $region12
      $region11: #{tpu_custom_call.1} parent=5 // pred_region
        %s514 = ssub.s32 %s28, 1
        // Predicated region
        $region13: #{tpu_custom_call.1} parent=11 // pred_check
          %p515 = pneg %p49
        $region14: #{tpu_custom_call.1} parent=11 // pred_check_branch
          %517 = sbr.rel (%p515) target = $region16
        $region15: #{tpu_custom_call.1} parent=11 // pred_region
          %519 = vsyncadd [#allocation3], 0
          %s521 = sshll.u32 %s0, 4
          %s522 = int_to_ptr.vmem [resolvable:$true] %s521
          %524 = dma.vmem_to_smem %s522, 16, [#allocation2], [#allocation3]
        $region16: #{tpu_custom_call.1} parent=11 // pred_fallthru
          _
        // Predicated region
        $region17: #{tpu_custom_call.1} parent=11 // pred_check
          %p525 = pneg %p70
        $region18: #{tpu_custom_call.1} parent=11 // pred_check_branch
          %527 = sbr.rel (%p525) target = $region20
        $region19: #{tpu_custom_call.1} parent=11 // pred_region
          _
        $region20: #{tpu_custom_call.1} parent=11 // pred_fallthru
          _
        // Predicated region
        $region21: #{tpu_custom_call.1} parent=11 // pred_check
          %p528 = pneg %p117
        $region22: #{tpu_custom_call.1} parent=11 // pred_check_branch
          %530 = sbr.rel (%p528) target = $region24
        $region23: #{tpu_custom_call.1} parent=11 // pred_region
          _
        $region24: #{tpu_custom_call.1} parent=11 // pred_fallthru
          _
        // Predicated region
        $region25: #{tpu_custom_call.1} parent=11 // pred_check
          %p531 = pneg %p138
        $region26: #{tpu_custom_call.1} parent=11 // pred_check_branch
          %533 = sbr.rel (%p531) target = $region28
        $region27: #{tpu_custom_call.1} parent=11 // pred_region
          _
        $region28: #{tpu_custom_call.1} parent=11 // pred_fallthru
          _
        // Predicated region
        $region29: #{tpu_custom_call.1} parent=11 // pred_check
          %p534 = pneg %p159
        $region30: #{tpu_custom_call.1} parent=11 // pred_check_branch
          %536 = sbr.rel (%p534) target = $region32
        $region31: #{tpu_custom_call.1} parent=11 // pred_region
          _
        $region32: #{tpu_custom_call.1} parent=11 // pred_fallthru
          _
        // Predicated region
        $region33: #{tpu_custom_call.1} parent=11 // pred_check
          %p537 = pneg %p180
        $region34: #{tpu_custom_call.1} parent=11 // pred_check_branch
          %539 = sbr.rel (%p537) target = $region36
        $region35: #{tpu_custom_call.1} parent=11 // pred_region
          _
        $region36: #{tpu_custom_call.1} parent=11 // pred_fallthru
          _
        // Predicated region
        $region37: #{tpu_custom_call.1} parent=11 // pred_check
          %p540 = pneg %p201
        $region38: #{tpu_custom_call.1} parent=11 // pred_check_branch
          %542 = sbr.rel (%p540) target = $region40
        $region39: #{tpu_custom_call.1} parent=11 // pred_region
          _
        $region40: #{tpu_custom_call.1} parent=11 // pred_fallthru
          _
        // Predicated region
        $region41: #{tpu_custom_call.1} parent=11 // pred_check
          %p543 = pneg %p222
        $region42: #{tpu_custom_call.1} parent=11 // pred_check_branch
          %545 = sbr.rel (%p543) target = $region44
        $region43: #{tpu_custom_call.1} parent=11 // pred_region
          _
        $region44: #{tpu_custom_call.1} parent=11 // pred_fallthru
          _
        // Predicated region
        $region45: #{tpu_custom_call.1} parent=11 // pred_check
          %p546 = pneg %p243
        $region46: #{tpu_custom_call.1} parent=11 // pred_check_branch
          %548 = sbr.rel (%p546) target = $region48
        $region47: #{tpu_custom_call.1} parent=11 // pred_region
          _
        $region48: #{tpu_custom_call.1} parent=11 // pred_fallthru
          _
        // Predicated region
        $region49: #{tpu_custom_call.1} parent=11 // pred_check
          %p549 = pneg %p264
        $region50: #{tpu_custom_call.1} parent=11 // pred_check_branch
          %551 = sbr.rel (%p549) target = $region52
        $region51: #{tpu_custom_call.1} parent=11 // pred_region
          _
        $region52: #{tpu_custom_call.1} parent=11 // pred_fallthru
          _
        // Predicated region
        $region53: #{tpu_custom_call.1} parent=11 // pred_check
          %p552 = pneg %p285
        $region54: #{tpu_custom_call.1} parent=11 // pred_check_branch
          %554 = sbr.rel (%p552) target = $region56
        $region55: #{tpu_custom_call.1} parent=11 // pred_region
          _
        $region56: #{tpu_custom_call.1} parent=11 // pred_fallthru
          _
        // Predicated region
        $region57: #{tpu_custom_call.1} parent=11 // pred_check
          %p555 = pneg %p306
        $region58: #{tpu_custom_call.1} parent=11 // pred_check_branch
          %557 = sbr.rel (%p555) target = $region60
        $region59: #{tpu_custom_call.1} parent=11 // pred_region
          _
        $region60: #{tpu_custom_call.1} parent=11 // pred_fallthru
          _
        // Predicated region
        $region61: #{tpu_custom_call.1} parent=11 // pred_check
          %p558 = pneg %p327
        $region62: #{tpu_custom_call.1} parent=11 // pred_check_branch
          %560 = sbr.rel (%p558) target = $region64
        $region63: #{tpu_custom_call.1} parent=11 // pred_region
          _
        $region64: #{tpu_custom_call.1} parent=11 // pred_fallthru
          _
        // Predicated region
        $region65: #{tpu_custom_call.1} parent=11 // pred_check
          %p561 = pneg %p348
        $region66: #{tpu_custom_call.1} parent=11 // pred_check_branch
          %563 = sbr.rel (%p561) target = $region68
        $region67: #{tpu_custom_call.1} parent=11 // pred_region
          _
        $region68: #{tpu_custom_call.1} parent=11 // pred_fallthru
          _
        // Predicated region
        $region69: #{tpu_custom_call.1} parent=11 // pred_check
          %p564 = pneg %p369
        $region70: #{tpu_custom_call.1} parent=11 // pred_check_branch
          %566 = sbr.rel (%p564) target = $region72
        $region71: #{tpu_custom_call.1} parent=11 // pred_region
          _
        $region72: #{tpu_custom_call.1} parent=11 // pred_fallthru
          _
        // Predicated region
        $region73: #{tpu_custom_call.1} parent=11 // pred_check
          %p567 = pneg %p390
        $region74: #{tpu_custom_call.1} parent=11 // pred_check_branch
          %569 = sbr.rel (%p567) target = $region76
        $region75: #{tpu_custom_call.1} parent=11 // pred_region
          _
        $region76: #{tpu_custom_call.1} parent=11 // pred_fallthru
          _
        // Predicated region
        $region77: #{tpu_custom_call.1} parent=11 // pred_check
          %p570 = pneg %p411
        $region78: #{tpu_custom_call.1} parent=11 // pred_check_branch
          %572 = sbr.rel (%p570) target = $region80
        $region79: #{tpu_custom_call.1} parent=11 // pred_region
          _
        $region80: #{tpu_custom_call.1} parent=11 // pred_fallthru
          _
        // Predicated region
        $region81: #{tpu_custom_call.1} parent=11 // pred_check
          %p573 = pneg %p432
        $region82: #{tpu_custom_call.1} parent=11 // pred_check_branch
          %575 = sbr.rel (%p573) target = $region84
        $region83: #{tpu_custom_call.1} parent=11 // pred_region
          _
        $region84: #{tpu_custom_call.1} parent=11 // pred_fallthru
          _
        // Predicated region
        $region85: #{tpu_custom_call.1} parent=11 // pred_check
          %p576 = pneg %p453
        $region86: #{tpu_custom_call.1} parent=11 // pred_check_branch
          %578 = sbr.rel (%p576) target = $region88
        $region87: #{tpu_custom_call.1} parent=11 // pred_region
          _
        $region88: #{tpu_custom_call.1} parent=11 // pred_fallthru
          _
        // Predicated region
        $region89: #{tpu_custom_call.1} parent=11 // pred_check
          %p579 = pneg %p474
        $region90: #{tpu_custom_call.1} parent=11 // pred_check_branch
          %581 = sbr.rel (%p579) target = $region92
        $region91: #{tpu_custom_call.1} parent=11 // pred_region
          _
        $region92: #{tpu_custom_call.1} parent=11 // pred_fallthru
          _
      $region12: #{tpu_custom_call.1} parent=5 // pred_fallthru
        _
      %p582 = scmp.lt.s32.totalorder %s28, 2
      // Predicated region
      $region93: #{tpu_custom_call.1} parent=5 // pred_check
        %p583 = pneg %p582
      $region94: #{tpu_custom_call.1} parent=5 // pred_check_branch
        %585 = sbr.rel (%p583) target = $region96
      $region95: #{tpu_custom_call.1} parent=5 // pred_region
        // Predicated region
        $region97: #{tpu_custom_call.1} parent=95 // pred_check
          %p586 = pneg %p90
        $region98: #{tpu_custom_call.1} parent=95 // pred_check_branch
          %588 = sbr.rel (%p586) target = $region100
        $region99: #{tpu_custom_call.1} parent=95 // pred_region
          %p589 = scmp.lt.s32.totalorder %s28, 1
          %s590 = scalar_select %p589, %s28, 1
          %s591 = smul.addr %s590, 8
          %s592 = smul.addr %s591, 8
          %s593 = scalar_lea.vmem %s2, %s592
        $region100: #{tpu_custom_call.1} parent=95 // pred_fallthru
          _
      $region96: #{tpu_custom_call.1} parent=5 // pred_fallthru
        _
      %p594 = scmp.le.s32.totalorder 1, %s28
      %p595 = scmp.lt.s32.totalorder %s28, 3
      %p596 = pnand %p594, %p595
      %p597 = pneg %p596
      // Predicated region
      $region101: #{tpu_custom_call.1} parent=5 // pred_check
        _
      $region102: #{tpu_custom_call.1} parent=5 // pred_check_branch
        %599 = sbr.rel (%p596) target = $region104
      $region103: #{tpu_custom_call.1} parent=5 // pred_region
        %s600 = ssub.s32 %s28, 1
        // Predicated region
        $region105: #{tpu_custom_call.1} parent=103 // pred_check
          %p601 = pneg %p49
        $region106: #{tpu_custom_call.1} parent=103 // pred_check_branch
          %603 = sbr.rel (%p601) target = $region108
        $region107: #{tpu_custom_call.1} parent=103 // pred_region
          %605 = dma.done [#allocation3], 16
        $region108: #{tpu_custom_call.1} parent=103 // pred_fallthru
          _
        %606 = sfence
        %p607 = pneg %p49
        %p608 = pneg %p46
        %p609 = pneg %p70
        %p610 = pneg %p67
        %p611 = scmp.lt.s32.totalorder %s33, 1
        %s612 = scalar_select %p611, %s33, 1
        %s613 = smul.addr %s612, 8
        %s614 = smul.addr %s613, 8
        %s615 = scalar_lea.vmem %s2, %s614
        %p616 = pneg %p96
        %p617 = pneg %p93
        %p618 = pneg %p117
        %p619 = pneg %p114
        %p620 = pneg %p138
        %p621 = pneg %p135
        %p622 = pneg %p159
        %p623 = pneg %p156
        %p624 = pneg %p180
        %p625 = pneg %p177
        %p626 = pneg %p201
        %p627 = pneg %p198
        %p628 = pneg %p222
        %p629 = pneg %p219
        %p630 = pneg %p243
        %p631 = pneg %p240
        %p632 = pneg %p264
        %p633 = pneg %p261
        %p634 = pneg %p285
        %p635 = pneg %p282
        %p636 = pneg %p306
        %p637 = pneg %p303
        %p638 = pneg %p327
        %p639 = pneg %p324
        %p640 = pneg %p348
        %p641 = pneg %p345
        %p642 = pneg %p369
        %p643 = pneg %p366
        %p644 = pneg %p390
        %p645 = pneg %p387
        %p646 = pneg %p411
        %p647 = pneg %p408
        %p648 = pneg %p432
        %p649 = pneg %p429
        %p650 = pneg %p453
        %p651 = pneg %p450
        %p652 = pneg %p474
        %p653 = pneg %p471
        %p654 = pneg %p500
        %p655 = pneg %p497
        %p656 = scmp.lt.s32.totalorder %s33, 1
        %s657 = scalar_select %p656, %s33, 1
        %s658 = smul.addr %s657, 8
        %s659 = smul.addr %s658, 8
        %s660 = scalar_lea.vmem %s21, %s659
        %p661 = scmp.lt.s32.totalorder %s33, 1
        %s662 = scalar_select %p661, %s33, 1
        %s663 = smul.addr %s662, 8
        %s664 = smul.addr %s663, 8
        %s665 = scalar_lea.vmem %s2, %s664
        %p666 = scmp.lt.s32.totalorder %s33, 1
        %s667 = scalar_select %p666, %s33, 1
        %s668 = smul.addr %s667, 8
        %s669 = smul.addr %s668, 8
        %s670 = scalar_lea.vmem %s21, %s669
        %v671 = vld [vmem:[%s665] sm:$0xff]
        %v672 = vld [vmem:[%s665 + $0x8] sm:$0xff]
        %v673 = vld [vmem:[%s665 + $0x10] sm:$0xff]
        %v674 = vld [vmem:[%s665 + $0x18] sm:$0xff]
        %v675 = vld [vmem:[%s665 + $0x20] sm:$0xff]
        %v676 = vld [vmem:[%s665 + $0x28] sm:$0xff]
        %v677 = vld [vmem:[%s665 + $0x30] sm:$0xff]
        %v678 = vld [vmem:[%s665 + $0x38] sm:$0xff]
        %vm679 = vcmask 261120
        %v680 = vsel %vm679, %v671, 0.0
        %681 = vadd.xlane.f32.xlu0 %v680
        %v682 = vpop.xlane.xlu0 %681
        %v683 = vsel %vm679, %v672, 0.0
        %684 = vadd.xlane.f32.xlu0 %v683
        %v685 = vpop.xlane.xlu0 %684
        %v686 = vsel %vm679, %v673, 0.0
        %687 = vadd.xlane.f32.xlu0 %v686
        %v688 = vpop.xlane.xlu0 %687
        %v689 = vsel %vm679, %v674, 0.0
        %690 = vadd.xlane.f32.xlu0 %v689
        %v691 = vpop.xlane.xlu0 %690
        %v692 = vsel %vm679, %v675, 0.0
        %693 = vadd.xlane.f32.xlu0 %v692
        %v694 = vpop.xlane.xlu0 %693
        %v695 = vsel %vm679, %v676, 0.0
        %696 = vadd.xlane.f32.xlu0 %v695
        %v697 = vpop.xlane.xlu0 %696
        %v698 = vsel %vm679, %v677, 0.0
        %699 = vadd.xlane.f32.xlu0 %v698
        %v700 = vpop.xlane.xlu0 %699
        %v701 = vsel %vm679, %v678, 0.0
        %702 = vadd.xlane.f32.xlu0 %v701
        %v703 = vpop.xlane.xlu0 %702
        %v704 = vrcp.pop 32.0
        %v705 = vmul.f32 32.0, %v704
        %v706 = vsub.f32 1.0, %v705
        %v707 = vmul.f32 %v704, %v706
        %v708 = vadd.f32 %v704, %v707
        %vm709 = vweird.f32 %v704
        %v710 = vsel %vm709, %v704, %v708
        %v711 = vmul.f32 %v682, %v710
        %v712 = vmul.f32 %v685, %v710
        %v713 = vmul.f32 %v688, %v710
        %v714 = vmul.f32 %v691, %v710
        %v715 = vmul.f32 %v694, %v710
        %v716 = vmul.f32 %v697, %v710
        %v717 = vmul.f32 %v700, %v710
        %v718 = vmul.f32 %v703, %v710
        %v719 = vsub.f32 %v671, %v711
        %v720 = vsub.f32 %v672, %v712
        %v721 = vsub.f32 %v673, %v713
        %v722 = vsub.f32 %v674, %v714
        %v723 = vsub.f32 %v675, %v715
        %v724 = vsub.f32 %v676, %v716
        %v725 = vsub.f32 %v677, %v717
        %v726 = vsub.f32 %v678, %v718
        %v727 = vmul.f32 %v719, %v719
        %v728 = vmul.f32 %v720, %v720
        %v729 = vmul.f32 %v721, %v721
        %v730 = vmul.f32 %v722, %v722
        %v731 = vmul.f32 %v723, %v723
        %v732 = vmul.f32 %v724, %v724
        %v733 = vmul.f32 %v725, %v725
        %v734 = vmul.f32 %v726, %v726
        %v735 = vsel %vm679, %v727, 0.0
        %736 = vadd.xlane.f32.xlu0 %v735
        %v737 = vpop.xlane.xlu0 %736
        %v738 = vsel %vm679, %v728, 0.0
        %739 = vadd.xlane.f32.xlu0 %v738
        %v740 = vpop.xlane.xlu0 %739
        %v741 = vsel %vm679, %v729, 0.0
        %742 = vadd.xlane.f32.xlu0 %v741
        %v743 = vpop.xlane.xlu0 %742
        %v744 = vsel %vm679, %v730, 0.0
        %745 = vadd.xlane.f32.xlu0 %v744
        %v746 = vpop.xlane.xlu0 %745
        %v747 = vsel %vm679, %v731, 0.0
        %748 = vadd.xlane.f32.xlu0 %v747
        %v749 = vpop.xlane.xlu0 %748
        %v750 = vsel %vm679, %v732, 0.0
        %751 = vadd.xlane.f32.xlu0 %v750
        %v752 = vpop.xlane.xlu0 %751
        %v753 = vsel %vm679, %v733, 0.0
        %754 = vadd.xlane.f32.xlu0 %v753
        %v755 = vpop.xlane.xlu0 %754
        %v756 = vsel %vm679, %v734, 0.0
        %757 = vadd.xlane.f32.xlu0 %v756
        %v758 = vpop.xlane.xlu0 %757
        %v759 = vmul.f32 %v737, %v710
        %v760 = vmul.f32 %v740, %v710
        %v761 = vmul.f32 %v743, %v710
        %v762 = vmul.f32 %v746, %v710
        %v763 = vmul.f32 %v749, %v710
        %v764 = vmul.f32 %v752, %v710
        %v765 = vmul.f32 %v755, %v710
        %v766 = vmul.f32 %v758, %v710
        %v767 = vadd.f32 %v759, 1e-05
        %v768 = vadd.f32 %v760, 1e-05
        %v769 = vadd.f32 %v761, 1e-05
        %v770 = vadd.f32 %v762, 1e-05
        %v771 = vadd.f32 %v763, 1e-05
        %v772 = vadd.f32 %v764, 1e-05
        %v773 = vadd.f32 %v765, 1e-05
        %v774 = vadd.f32 %v766, 1e-05
        %v775 = vrsqrt.pop %v767
        %v776 = vmul.f32 %v775, %v767
        %v777 = vmul.f32 %v776, %v775
        %v778 = vmul.f32 0.5, %v777
        %v779 = vsub.f32 1.5, %v778
        %v780 = vmul.f32 %v775, %v779
        %vm781 = vweird.f32 %v767
        %vm782 = vweird.f32 %v775
        %vm783 = vmor %vm781, %vm782
        %v784 = vsel %vm783, %v775, %v780
        %v785 = vrsqrt.pop %v768
        %v786 = vmul.f32 %v785, %v768
        %v787 = vmul.f32 %v786, %v785
        %v788 = vmul.f32 0.5, %v787
        %v789 = vsub.f32 1.5, %v788
        %v790 = vmul.f32 %v785, %v789
        %vm791 = vweird.f32 %v768
        %vm792 = vweird.f32 %v785
        %vm793 = vmor %vm791, %vm792
        %v794 = vsel %vm793, %v785, %v790
        %v795 = vrsqrt.pop %v769
        %v796 = vmul.f32 %v795, %v769
        %v797 = vmul.f32 %v796, %v795
        %v798 = vmul.f32 0.5, %v797
        %v799 = vsub.f32 1.5, %v798
        %v800 = vmul.f32 %v795, %v799
        %vm801 = vweird.f32 %v769
        %vm802 = vweird.f32 %v795
        %vm803 = vmor %vm801, %vm802
        %v804 = vsel %vm803, %v795, %v800
        %v805 = vrsqrt.pop %v770
        %v806 = vmul.f32 %v805, %v770
        %v807 = vmul.f32 %v806, %v805
        %v808 = vmul.f32 0.5, %v807
        %v809 = vsub.f32 1.5, %v808
        %v810 = vmul.f32 %v805, %v809
        %vm811 = vweird.f32 %v770
        %vm812 = vweird.f32 %v805
        %vm813 = vmor %vm811, %vm812
        %v814 = vsel %vm813, %v805, %v810
        %v815 = vrsqrt.pop %v771
        %v816 = vmul.f32 %v815, %v771
        %v817 = vmul.f32 %v816, %v815
        %v818 = vmul.f32 0.5, %v817
        %v819 = vsub.f32 1.5, %v818
        %v820 = vmul.f32 %v815, %v819
        %vm821 = vweird.f32 %v771
        %vm822 = vweird.f32 %v815
        %vm823 = vmor %vm821, %vm822
        %v824 = vsel %vm823, %v815, %v820
        %v825 = vrsqrt.pop %v772
        %v826 = vmul.f32 %v825, %v772
        %v827 = vmul.f32 %v826, %v825
        %v828 = vmul.f32 0.5, %v827
        %v829 = vsub.f32 1.5, %v828
        %v830 = vmul.f32 %v825, %v829
        %vm831 = vweird.f32 %v772
        %vm832 = vweird.f32 %v825
        %vm833 = vmor %vm831, %vm832
        %v834 = vsel %vm833, %v825, %v830
        %v835 = vrsqrt.pop %v773
        %v836 = vmul.f32 %v835, %v773
        %v837 = vmul.f32 %v836, %v835
        %v838 = vmul.f32 0.5, %v837
        %v839 = vsub.f32 1.5, %v838
        %v840 = vmul.f32 %v835, %v839
        %vm841 = vweird.f32 %v773
        %vm842 = vweird.f32 %v835
        %vm843 = vmor %vm841, %vm842
        %v844 = vsel %vm843, %v835, %v840
        %v845 = vrsqrt.pop %v774
        %v846 = vmul.f32 %v845, %v774
        %v847 = vmul.f32 %v846, %v845
        %v848 = vmul.f32 0.5, %v847
        %v849 = vsub.f32 1.5, %v848
        %v850 = vmul.f32 %v845, %v849
        %vm851 = vweird.f32 %v774
        %vm852 = vweird.f32 %v845
        %vm853 = vmor %vm851, %vm852
        %v854 = vsel %vm853, %v845, %v850
        %v855 = vmul.f32 %v719, %v784
        %v856 = vmul.f32 %v720, %v794
        %v857 = vmul.f32 %v721, %v804
        %v858 = vmul.f32 %v722, %v814
        %v859 = vmul.f32 %v723, %v824
        %v860 = vmul.f32 %v724, %v834
        %v861 = vmul.f32 %v725, %v844
        %v862 = vmul.f32 %v726, %v854
        %v863 = vld [vmem:[%s3] sm:$0x1]
        %v865 = vperm.slane %v863, 0
        %v867 = vmul.f32 %v855, %v865
        %v868 = vmul.f32 %v856, %v865
        %v869 = vmul.f32 %v857, %v865
        %v870 = vmul.f32 %v858, %v865
        %v871 = vmul.f32 %v859, %v865
        %v872 = vmul.f32 %v860, %v865
        %v873 = vmul.f32 %v861, %v865
        %v874 = vmul.f32 %v862, %v865
        %v875 = vld [vmem:[%s4] sm:$0x1]
        %v877 = vperm.slane %v875, 0
        %v879 = vadd.f32 %v867, %v877
        %v880 = vadd.f32 %v868, %v877
        %v881 = vadd.f32 %v869, %v877
        %v882 = vadd.f32 %v870, %v877
        %v883 = vadd.f32 %v871, %v877
        %v884 = vadd.f32 %v872, %v877
        %v885 = vadd.f32 %v873, %v877
        %v886 = vadd.f32 %v874, %v877
        %v887 = vld [vmem:[%s1] sm:$0xff]
        %v888 = vld [vmem:[%s1 + $0x8] sm:$0xff]
        %v889 = vld [vmem:[%s1 + $0x10] sm:$0xff]
        %v890 = vld [vmem:[%s1 + $0x18] sm:$0xff]
        %v891 = vld [vmem:[%s1 + $0x20] sm:$0xff]
        %v892 = vld [vmem:[%s1 + $0x28] sm:$0xff]
        %v893 = vld [vmem:[%s1 + $0x30] sm:$0xff]
        %v894 = vld [vmem:[%s1 + $0x38] sm:$0xff]
        %v895 = vrot.slane %v879, 7
        %v896 = vrot.slane %v880, 7
        %v897 = vrot.slane %v881, 7
        %v898 = vrot.slane %v882, 7
        %v899 = vrot.slane %v883, 7
        %v900 = vrot.slane %v884, 7
        %v901 = vrot.slane %v885, 7
        %v902 = vrot.slane %v886, 7
        %v903 = vlaneseq
        %v904 = vshrl.u32 %v903, 7
        %vm905 = vcmp.lt.s32.totalorder %v904, 1
        %v906 = vsel %vm905, %v901, %v902
        %v907 = vsel %vm905, %v900, %v901
        %v908 = vsel %vm905, %v899, %v900
        %v909 = vsel %vm905, %v898, %v899
        %v910 = vsel %vm905, %v897, %v898
        %v911 = vsel %vm905, %v896, %v897
        %v912 = vsel %vm905, %v895, %v896
        %v913 = vsel %vm905, %v902, %v895
        %915 = vset.pattern.permute.xlu0 0
        %916 = vperm.xlu0 %915, %v887
        %v917 = vpop.permute.xlu0 %916
        %920 = vset.pattern.permute.xlu0 0
        %921 = vperm.xlu0 %920, %v888
        %v922 = vpop.permute.xlu0 %921
        %925 = vset.pattern.permute.xlu0 0
        %926 = vperm.xlu0 %925, %v889
        %v927 = vpop.permute.xlu0 %926
        %930 = vset.pattern.permute.xlu0 0
        %931 = vperm.xlu0 %930, %v890
        %v932 = vpop.permute.xlu0 %931
        %935 = vset.pattern.permute.xlu0 0
        %936 = vperm.xlu0 %935, %v891
        %v937 = vpop.permute.xlu0 %936
        %940 = vset.pattern.permute.xlu0 0
        %941 = vperm.xlu0 %940, %v892
        %v942 = vpop.permute.xlu0 %941
        %945 = vset.pattern.permute.xlu0 0
        %946 = vperm.xlu0 %945, %v893
        %v947 = vpop.permute.xlu0 %946
        %950 = vset.pattern.permute.xlu0 0
        %951 = vperm.xlu0 %950, %v894
        %v952 = vpop.permute.xlu0 %951
        %v954 = vmul.f32 %v906, %v917
        %v955 = vmul.f32 %v913, %v922
        %v956 = vmul.f32 %v912, %v927
        %v957 = vmul.f32 %v911, %v932
        %v958 = vmul.f32 %v910, %v937
        %v959 = vmul.f32 %v909, %v942
        %v960 = vmul.f32 %v908, %v947
        %v961 = vmul.f32 %v907, %v952
        %962 = vset.pattern.permute.xlu0 1
        %963 = vperm.xlu0 %962, %v887
        %v964 = vpop.permute.xlu0 %963
        %966 = vset.pattern.permute.xlu0 1
        %967 = vperm.xlu0 %966, %v888
        %v968 = vpop.permute.xlu0 %967
        %970 = vset.pattern.permute.xlu0 1
        %971 = vperm.xlu0 %970, %v889
        %v972 = vpop.permute.xlu0 %971
        %974 = vset.pattern.permute.xlu0 1
        %975 = vperm.xlu0 %974, %v890
        %v976 = vpop.permute.xlu0 %975
        %978 = vset.pattern.permute.xlu0 1
        %979 = vperm.xlu0 %978, %v891
        %v980 = vpop.permute.xlu0 %979
        %982 = vset.pattern.permute.xlu0 1
        %983 = vperm.xlu0 %982, %v892
        %v984 = vpop.permute.xlu0 %983
        %986 = vset.pattern.permute.xlu0 1
        %987 = vperm.xlu0 %986, %v893
        %v988 = vpop.permute.xlu0 %987
        %990 = vset.pattern.permute.xlu0 1
        %991 = vperm.xlu0 %990, %v894
        %v992 = vpop.permute.xlu0 %991
        %v994 = vmul.f32 %v886, %v964
        %v995 = vmul.f32 %v879, %v968
        %v996 = vmul.f32 %v880, %v972
        %v997 = vmul.f32 %v881, %v976
        %v998 = vmul.f32 %v882, %v980
        %v999 = vmul.f32 %v883, %v984
        %v1000 = vmul.f32 %v884, %v988
        %v1001 = vmul.f32 %v885, %v992
        %v1002 = vrot.slane %v879, 1
        %v1003 = vrot.slane %v880, 1
        %v1004 = vrot.slane %v881, 1
        %v1005 = vrot.slane %v882, 1
        %v1006 = vrot.slane %v883, 1
        %v1007 = vrot.slane %v884, 1
        %v1008 = vrot.slane %v885, 1
        %v1009 = vrot.slane %v886, 1
        %vm1010 = vcmp.lt.s32.totalorder %v904, 7
        %v1011 = vsel %vm1010, %v1008, %v1009
        %v1012 = vsel %vm1010, %v1007, %v1008
        %v1013 = vsel %vm1010, %v1006, %v1007
        %v1014 = vsel %vm1010, %v1005, %v1006
        %v1015 = vsel %vm1010, %v1004, %v1005
        %v1016 = vsel %vm1010, %v1003, %v1004
        %v1017 = vsel %vm1010, %v1002, %v1003
        %v1018 = vsel %vm1010, %v1009, %v1002
        %1019 = vset.pattern.permute.xlu0 2
        %1020 = vperm.xlu0 %1019, %v887
        %v1021 = vpop.permute.xlu0 %1020
        %1023 = vset.pattern.permute.xlu0 2
        %1024 = vperm.xlu0 %1023, %v888
        %v1025 = vpop.permute.xlu0 %1024
        %1027 = vset.pattern.permute.xlu0 2
        %1028 = vperm.xlu0 %1027, %v889
        %v1029 = vpop.permute.xlu0 %1028
        %1031 = vset.pattern.permute.xlu0 2
        %1032 = vperm.xlu0 %1031, %v890
        %v1033 = vpop.permute.xlu0 %1032
        %1035 = vset.pattern.permute.xlu0 2
        %1036 = vperm.xlu0 %1035, %v891
        %v1037 = vpop.permute.xlu0 %1036
        %1039 = vset.pattern.permute.xlu0 2
        %1040 = vperm.xlu0 %1039, %v892
        %v1041 = vpop.permute.xlu0 %1040
        %1043 = vset.pattern.permute.xlu0 2
        %1044 = vperm.xlu0 %1043, %v893
        %v1045 = vpop.permute.xlu0 %1044
        %1047 = vset.pattern.permute.xlu0 2
        %1048 = vperm.xlu0 %1047, %v894
        %v1049 = vpop.permute.xlu0 %1048
        %v1051 = vmul.f32 %v1018, %v1021
        %v1052 = vmul.f32 %v1017, %v1025
        %v1053 = vmul.f32 %v1016, %v1029
        %v1054 = vmul.f32 %v1015, %v1033
        %v1055 = vmul.f32 %v1014, %v1037
        %v1056 = vmul.f32 %v1013, %v1041
        %v1057 = vmul.f32 %v1012, %v1045
        %v1058 = vmul.f32 %v1011, %v1049
        %1059 = vset.pattern.permute.xlu0 3
        %1060 = vperm.xlu0 %1059, %v887
        %v1061 = vpop.permute.xlu0 %1060
        %1063 = vset.pattern.permute.xlu0 3
        %1064 = vperm.xlu0 %1063, %v888
        %v1065 = vpop.permute.xlu0 %1064
        %1067 = vset.pattern.permute.xlu0 3
        %1068 = vperm.xlu0 %1067, %v889
        %v1069 = vpop.permute.xlu0 %1068
        %1071 = vset.pattern.permute.xlu0 3
        %1072 = vperm.xlu0 %1071, %v890
        %v1073 = vpop.permute.xlu0 %1072
        %1075 = vset.pattern.permute.xlu0 3
        %1076 = vperm.xlu0 %1075, %v891
        %v1077 = vpop.permute.xlu0 %1076
        %1079 = vset.pattern.permute.xlu0 3
        %1080 = vperm.xlu0 %1079, %v892
        %v1081 = vpop.permute.xlu0 %1080
        %1083 = vset.pattern.permute.xlu0 3
        %1084 = vperm.xlu0 %1083, %v893
        %v1085 = vpop.permute.xlu0 %1084
        %1087 = vset.pattern.permute.xlu0 3
        %1088 = vperm.xlu0 %1087, %v894
        %v1089 = vpop.permute.xlu0 %1088
        %v1091 = vmul.f32 %v913, %v1061
        %v1092 = vmul.f32 %v912, %v1065
        %v1093 = vmul.f32 %v911, %v1069
        %v1094 = vmul.f32 %v910, %v1073
        %v1095 = vmul.f32 %v909, %v1077
        %v1096 = vmul.f32 %v908, %v1081
        %v1097 = vmul.f32 %v907, %v1085
        %v1098 = vmul.f32 %v906, %v1089
        %1099 = vset.pattern.permute.xlu0 5
        %1100 = vperm.xlu0 %1099, %v887
        %v1101 = vpop.permute.xlu0 %1100
        %1103 = vset.pattern.permute.xlu0 5
        %1104 = vperm.xlu0 %1103, %v888
        %v1105 = vpop.permute.xlu0 %1104
        %1107 = vset.pattern.permute.xlu0 5
        %1108 = vperm.xlu0 %1107, %v889
        %v1109 = vpop.permute.xlu0 %1108
        %1111 = vset.pattern.permute.xlu0 5
        %1112 = vperm.xlu0 %1111, %v890
        %v1113 = vpop.permute.xlu0 %1112
        %1115 = vset.pattern.permute.xlu0 5
        %1116 = vperm.xlu0 %1115, %v891
        %v1117 = vpop.permute.xlu0 %1116
        %1119 = vset.pattern.permute.xlu0 5
        %1120 = vperm.xlu0 %1119, %v892
        %v1121 = vpop.permute.xlu0 %1120
        %1123 = vset.pattern.permute.xlu0 5
        %1124 = vperm.xlu0 %1123, %v893
        %v1125 = vpop.permute.xlu0 %1124
        %1127 = vset.pattern.permute.xlu0 5
        %1128 = vperm.xlu0 %1127, %v894
        %v1129 = vpop.permute.xlu0 %1128
        %v1131 = vmul.f32 %v1017, %v1101
        %v1132 = vmul.f32 %v1016, %v1105
        %v1133 = vmul.f32 %v1015, %v1109
        %v1134 = vmul.f32 %v1014, %v1113
        %v1135 = vmul.f32 %v1013, %v1117
        %v1136 = vmul.f32 %v1012, %v1121
        %v1137 = vmul.f32 %v1011, %v1125
        %v1138 = vmul.f32 %v1018, %v1129
        %1139 = vset.pattern.permute.xlu0 6
        %1140 = vperm.xlu0 %1139, %v887
        %v1141 = vpop.permute.xlu0 %1140
        %1143 = vset.pattern.permute.xlu0 6
        %1144 = vperm.xlu0 %1143, %v888
        %v1145 = vpop.permute.xlu0 %1144
        %1147 = vset.pattern.permute.xlu0 6
        %1148 = vperm.xlu0 %1147, %v889
        %v1149 = vpop.permute.xlu0 %1148
        %1151 = vset.pattern.permute.xlu0 6
        %1152 = vperm.xlu0 %1151, %v890
        %v1153 = vpop.permute.xlu0 %1152
        %1155 = vset.pattern.permute.xlu0 6
        %1156 = vperm.xlu0 %1155, %v891
        %v1157 = vpop.permute.xlu0 %1156
        %1159 = vset.pattern.permute.xlu0 6
        %1160 = vperm.xlu0 %1159, %v892
        %v1161 = vpop.permute.xlu0 %1160
        %1163 = vset.pattern.permute.xlu0 6
        %1164 = vperm.xlu0 %1163, %v893
        %v1165 = vpop.permute.xlu0 %1164
        %1167 = vset.pattern.permute.xlu0 6
        %1168 = vperm.xlu0 %1167, %v894
        %v1169 = vpop.permute.xlu0 %1168
        %v1171 = vmul.f32 %v912, %v1141
        %v1172 = vmul.f32 %v911, %v1145
        %v1173 = vmul.f32 %v910, %v1149
        %v1174 = vmul.f32 %v909, %v1153
        %v1175 = vmul.f32 %v908, %v1157
        %v1176 = vmul.f32 %v907, %v1161
        %v1177 = vmul.f32 %v906, %v1165
        %v1178 = vmul.f32 %v913, %v1169
        %1179 = vset.pattern.permute.xlu0 7
        %1180 = vperm.xlu0 %1179, %v887
        %v1181 = vpop.permute.xlu0 %1180
        %1183 = vset.pattern.permute.xlu0 7
        %1184 = vperm.xlu0 %1183, %v888
        %v1185 = vpop.permute.xlu0 %1184
        %1187 = vset.pattern.permute.xlu0 7
        %1188 = vperm.xlu0 %1187, %v889
        %v1189 = vpop.permute.xlu0 %1188
        %1191 = vset.pattern.permute.xlu0 7
        %1192 = vperm.xlu0 %1191, %v890
        %v1193 = vpop.permute.xlu0 %1192
        %1195 = vset.pattern.permute.xlu0 7
        %1196 = vperm.xlu0 %1195, %v891
        %v1197 = vpop.permute.xlu0 %1196
        %1199 = vset.pattern.permute.xlu0 7
        %1200 = vperm.xlu0 %1199, %v892
        %v1201 = vpop.permute.xlu0 %1200
        %1203 = vset.pattern.permute.xlu0 7
        %1204 = vperm.xlu0 %1203, %v893
        %v1205 = vpop.permute.xlu0 %1204
        %1207 = vset.pattern.permute.xlu0 7
        %1208 = vperm.xlu0 %1207, %v894
        %v1209 = vpop.permute.xlu0 %1208
        %v1211 = vmul.f32 %v880, %v1181
        %v1212 = vmul.f32 %v881, %v1185
        %v1213 = vmul.f32 %v882, %v1189
        %v1214 = vmul.f32 %v883, %v1193
        %v1215 = vmul.f32 %v884, %v1197
        %v1216 = vmul.f32 %v885, %v1201
        %v1217 = vmul.f32 %v886, %v1205
        %v1218 = vmul.f32 %v879, %v1209
        %1219 = vset.pattern.permute.xlu0 8
        %1220 = vperm.xlu0 %1219, %v887
        %v1221 = vpop.permute.xlu0 %1220
        %1223 = vset.pattern.permute.xlu0 8
        %1224 = vperm.xlu0 %1223, %v888
        %v1225 = vpop.permute.xlu0 %1224
        %1227 = vset.pattern.permute.xlu0 8
        %1228 = vperm.xlu0 %1227, %v889
        %v1229 = vpop.permute.xlu0 %1228
        %1231 = vset.pattern.permute.xlu0 8
        %1232 = vperm.xlu0 %1231, %v890
        %v1233 = vpop.permute.xlu0 %1232
        %1235 = vset.pattern.permute.xlu0 8
        %1236 = vperm.xlu0 %1235, %v891
        %v1237 = vpop.permute.xlu0 %1236
        %1239 = vset.pattern.permute.xlu0 8
        %1240 = vperm.xlu0 %1239, %v892
        %v1241 = vpop.permute.xlu0 %1240
        %1243 = vset.pattern.permute.xlu0 8
        %1244 = vperm.xlu0 %1243, %v893
        %v1245 = vpop.permute.xlu0 %1244
        %1247 = vset.pattern.permute.xlu0 8
        %1248 = vperm.xlu0 %1247, %v894
        %v1249 = vpop.permute.xlu0 %1248
        %v1251 = vmul.f32 %v1016, %v1221
        %v1252 = vmul.f32 %v1015, %v1225
        %v1253 = vmul.f32 %v1014, %v1229
        %v1254 = vmul.f32 %v1013, %v1233
        %v1255 = vmul.f32 %v1012, %v1237
        %v1256 = vmul.f32 %v1011, %v1241
        %v1257 = vmul.f32 %v1018, %v1245
        %v1258 = vmul.f32 %v1017, %v1249
        %1267 = vrot.lane.b32.xlu0 %v994, 32
        %v1268 = vpop.permute.xlu0 %1267
        %1269 = vrot.lane.b32.xlu0 %v995, 32
        %v1270 = vpop.permute.xlu0 %1269
        %1271 = vrot.lane.b32.xlu0 %v996, 32
        %v1272 = vpop.permute.xlu0 %1271
        %1273 = vrot.lane.b32.xlu0 %v997, 32
        %v1274 = vpop.permute.xlu0 %1273
        %1275 = vrot.lane.b32.xlu0 %v998, 32
        %v1276 = vpop.permute.xlu0 %1275
        %1277 = vrot.lane.b32.xlu0 %v999, 32
        %v1278 = vpop.permute.xlu0 %1277
        %1279 = vrot.lane.b32.xlu0 %v1000, 32
        %v1280 = vpop.permute.xlu0 %1279
        %1281 = vrot.lane.b32.xlu0 %v1001, 32
        %v1282 = vpop.permute.xlu0 %1281
        %1299 = vrot.lane.b32.xlu0 %v1051, 64
        %v1300 = vpop.permute.xlu0 %1299
        %1301 = vrot.lane.b32.xlu0 %v1052, 64
        %v1302 = vpop.permute.xlu0 %1301
        %1303 = vrot.lane.b32.xlu0 %v1053, 64
        %v1304 = vpop.permute.xlu0 %1303
        %1305 = vrot.lane.b32.xlu0 %v1054, 64
        %v1306 = vpop.permute.xlu0 %1305
        %1307 = vrot.lane.b32.xlu0 %v1055, 64
        %v1308 = vpop.permute.xlu0 %1307
        %1309 = vrot.lane.b32.xlu0 %v1056, 64
        %v1310 = vpop.permute.xlu0 %1309
        %1311 = vrot.lane.b32.xlu0 %v1057, 64
        %v1312 = vpop.permute.xlu0 %1311
        %1313 = vrot.lane.b32.xlu0 %v1058, 64
        %v1314 = vpop.permute.xlu0 %1313
        %1331 = vrot.lane.b32.xlu0 %v1091, 96
        %v1332 = vpop.permute.xlu0 %1331
        %1333 = vrot.lane.b32.xlu0 %v1092, 96
        %v1334 = vpop.permute.xlu0 %1333
        %1335 = vrot.lane.b32.xlu0 %v1093, 96
        %v1336 = vpop.permute.xlu0 %1335
        %1337 = vrot.lane.b32.xlu0 %v1094, 96
        %v1338 = vpop.permute.xlu0 %1337
        %1339 = vrot.lane.b32.xlu0 %v1095, 96
        %v1340 = vpop.permute.xlu0 %1339
        %1341 = vrot.lane.b32.xlu0 %v1096, 96
        %v1342 = vpop.permute.xlu0 %1341
        %1343 = vrot.lane.b32.xlu0 %v1097, 96
        %v1344 = vpop.permute.xlu0 %1343
        %1345 = vrot.lane.b32.xlu0 %v1098, 96
        %v1346 = vpop.permute.xlu0 %1345
        %1363 = vrot.lane.b32.xlu0 %v1131, 32
        %v1364 = vpop.permute.xlu0 %1363
        %1365 = vrot.lane.b32.xlu0 %v1132, 32
        %v1366 = vpop.permute.xlu0 %1365
        %1367 = vrot.lane.b32.xlu0 %v1133, 32
        %v1368 = vpop.permute.xlu0 %1367
        %1369 = vrot.lane.b32.xlu0 %v1134, 32
        %v1370 = vpop.permute.xlu0 %1369
        %1371 = vrot.lane.b32.xlu0 %v1135, 32
        %v1372 = vpop.permute.xlu0 %1371
        %1373 = vrot.lane.b32.xlu0 %v1136, 32
        %v1374 = vpop.permute.xlu0 %1373
        %1375 = vrot.lane.b32.xlu0 %v1137, 32
        %v1376 = vpop.permute.xlu0 %1375
        %1377 = vrot.lane.b32.xlu0 %v1138, 32
        %v1378 = vpop.permute.xlu0 %1377
        %1395 = vrot.lane.b32.xlu0 %v1171, 64
        %v1396 = vpop.permute.xlu0 %1395
        %1397 = vrot.lane.b32.xlu0 %v1172, 64
        %v1398 = vpop.permute.xlu0 %1397
        %1399 = vrot.lane.b32.xlu0 %v1173, 64
        %v1400 = vpop.permute.xlu0 %1399
        %1401 = vrot.lane.b32.xlu0 %v1174, 64
        %v1402 = vpop.permute.xlu0 %1401
        %1403 = vrot.lane.b32.xlu0 %v1175, 64
        %v1404 = vpop.permute.xlu0 %1403
        %1405 = vrot.lane.b32.xlu0 %v1176, 64
        %v1406 = vpop.permute.xlu0 %1405
        %1407 = vrot.lane.b32.xlu0 %v1177, 64
        %v1408 = vpop.permute.xlu0 %1407
        %1409 = vrot.lane.b32.xlu0 %v1178, 64
        %v1410 = vpop.permute.xlu0 %1409
        %1427 = vrot.lane.b32.xlu0 %v1211, 96
        %v1428 = vpop.permute.xlu0 %1427
        %1429 = vrot.lane.b32.xlu0 %v1212, 96
        %v1430 = vpop.permute.xlu0 %1429
        %1431 = vrot.lane.b32.xlu0 %v1213, 96
        %v1432 = vpop.permute.xlu0 %1431
        %1433 = vrot.lane.b32.xlu0 %v1214, 96
        %v1434 = vpop.permute.xlu0 %1433
        %1435 = vrot.lane.b32.xlu0 %v1215, 96
        %v1436 = vpop.permute.xlu0 %1435
        %1437 = vrot.lane.b32.xlu0 %v1216, 96
        %v1438 = vpop.permute.xlu0 %1437
        %1439 = vrot.lane.b32.xlu0 %v1217, 96
        %v1440 = vpop.permute.xlu0 %1439
        %1441 = vrot.lane.b32.xlu0 %v1218, 96
        %v1442 = vpop.permute.xlu0 %1441
        %v1451 = vsel %vm679, %v954, %v1268
        %v1452 = vsel %vm679, %v955, %v1270
        %v1453 = vsel %vm679, %v956, %v1272
        %v1454 = vsel %vm679, %v957, %v1274
        %v1455 = vsel %vm679, %v958, %v1276
        %v1456 = vsel %vm679, %v959, %v1278
        %v1457 = vsel %vm679, %v960, %v1280
        %v1458 = vsel %vm679, %v961, %v1282
        %vm1459 = vcmask 523264
        %v1460 = vsel %vm1459, %v1451, %v1300
        %v1461 = vsel %vm1459, %v1452, %v1302
        %v1462 = vsel %vm1459, %v1453, %v1304
        %v1463 = vsel %vm1459, %v1454, %v1306
        %v1464 = vsel %vm1459, %v1455, %v1308
        %v1465 = vsel %vm1459, %v1456, %v1310
        %v1466 = vsel %vm1459, %v1457, %v1312
        %v1467 = vsel %vm1459, %v1458, %v1314
        %vm1468 = vcmask 785408
        %v1469 = vsel %vm1468, %v1460, %v1332
        %v1470 = vsel %vm1468, %v1461, %v1334
        %v1471 = vsel %vm1468, %v1462, %v1336
        %v1472 = vsel %vm1468, %v1463, %v1338
        %v1473 = vsel %vm1468, %v1464, %v1340
        %v1474 = vsel %vm1468, %v1465, %v1342
        %v1475 = vsel %vm1468, %v1466, %v1344
        %v1476 = vsel %vm1468, %v1467, %v1346
        %v1477 = vsel %vm679, %v879, %v1364
        %v1478 = vsel %vm679, %v880, %v1366
        %v1479 = vsel %vm679, %v881, %v1368
        %v1480 = vsel %vm679, %v882, %v1370
        %v1481 = vsel %vm679, %v883, %v1372
        %v1482 = vsel %vm679, %v884, %v1374
        %v1483 = vsel %vm679, %v885, %v1376
        %v1484 = vsel %vm679, %v886, %v1378
        %v1485 = vsel %vm1459, %v1477, %v1396
        %v1486 = vsel %vm1459, %v1478, %v1398
        %v1487 = vsel %vm1459, %v1479, %v1400
        %v1488 = vsel %vm1459, %v1480, %v1402
        %v1489 = vsel %vm1459, %v1481, %v1404
        %v1490 = vsel %vm1459, %v1482, %v1406
        %v1491 = vsel %vm1459, %v1483, %v1408
        %v1492 = vsel %vm1459, %v1484, %v1410
        %v1493 = vsel %vm1468, %v1485, %v1428
        %v1494 = vsel %vm1468, %v1486, %v1430
        %v1495 = vsel %vm1468, %v1487, %v1432
        %v1496 = vsel %vm1468, %v1488, %v1434
        %v1497 = vsel %vm1468, %v1489, %v1436
        %v1498 = vsel %vm1468, %v1490, %v1438
        %v1499 = vsel %vm1468, %v1491, %v1440
        %v1500 = vsel %vm1468, %v1492, %v1442
        %v1501 = vld [vmem:[%s5] sm:$0xff]
        %v1502 = vld [vmem:[%s5 + $0x8] sm:$0xff]
        %v1503 = vld [vmem:[%s5 + $0x10] sm:$0xff]
        %v1504 = vld [vmem:[%s5 + $0x18] sm:$0xff]
        %v1505 = vld [vmem:[%s5 + $0x20] sm:$0xff]
        %v1506 = vld [vmem:[%s5 + $0x28] sm:$0xff]
        %v1507 = vld [vmem:[%s5 + $0x30] sm:$0xff]
        %v1508 = vld [vmem:[%s5 + $0x38] sm:$0xff]
        %v1509 = vld [vmem:[%s5 + $0x40] sm:$0xff]
        %v1510 = vld [vmem:[%s5 + $0x48] sm:$0xff]
        %v1511 = vld [vmem:[%s5 + $0x50] sm:$0xff]
        %v1512 = vld [vmem:[%s5 + $0x58] sm:$0xff]
        %v1513 = vld [vmem:[%s5 + $0x60] sm:$0xff]
        %v1514 = vld [vmem:[%s5 + $0x68] sm:$0xff]
        %v1515 = vld [vmem:[%s5 + $0x70] sm:$0xff]
        %v1516 = vld [vmem:[%s5 + $0x78] sm:$0xff]
        %v1517 = vld [vmem:[%s5 + $0x80] sm:$0xff]
        %v1518 = vld [vmem:[%s5 + $0x88] sm:$0xff]
        %v1519 = vld [vmem:[%s5 + $0x90] sm:$0xff]
        %v1520 = vld [vmem:[%s5 + $0x98] sm:$0xff]
        %v1521 = vld [vmem:[%s5 + $0xa0] sm:$0xff]
        %v1522 = vld [vmem:[%s5 + $0xa8] sm:$0xff]
        %v1523 = vld [vmem:[%s5 + $0xb0] sm:$0xff]
        %v1524 = vld [vmem:[%s5 + $0xb8] sm:$0xff]
        %v1525 = vld [vmem:[%s5 + $0xc0] sm:$0xff]
        %v1526 = vld [vmem:[%s5 + $0xc8] sm:$0xff]
        %v1527 = vld [vmem:[%s5 + $0xd0] sm:$0xff]
        %v1528 = vld [vmem:[%s5 + $0xd8] sm:$0xff]
        %v1529 = vld [vmem:[%s5 + $0xe0] sm:$0xff]
        %v1530 = vld [vmem:[%s5 + $0xe8] sm:$0xff]
        %v1531 = vld [vmem:[%s5 + $0xf0] sm:$0xff]
        %v1532 = vld [vmem:[%s5 + $0xf8] sm:$0xff]
        %v1533 = vld [vmem:[%s5 + $0x100] sm:$0xff]
        %v1534 = vld [vmem:[%s5 + $0x108] sm:$0xff]
        %v1535 = vld [vmem:[%s5 + $0x110] sm:$0xff]
        %v1536 = vld [vmem:[%s5 + $0x118] sm:$0xff]
        %v1537 = vld [vmem:[%s6] sm:$0x1]
        %v1539 = vperm.slane %v1537, 0
        %v1542 = vsel %vm679, %v1251, 0
        %v1545 = vsel %vm679, %v1252, 0
        %v1548 = vsel %vm679, %v1253, 0
        %v1551 = vsel %vm679, %v1254, 0
        %v1554 = vsel %vm679, %v1255, 0
        %v1557 = vsel %vm679, %v1256, 0
        %v1560 = vsel %vm679, %v1257, 0
        %v1563 = vsel %vm679, %v1258, 0
        %1565 = vmatpush.msra.mxu0 %v1516
        %1566 = vmatpush.msra.mxu0 %v1515
        %1567 = vmatpush.msra.mxu0 %v1514
        %1568 = vmatpush.msra.mxu0 %v1513
        %1569 = vmatpush.msra.mxu0 %v1512
        %1570 = vmatpush.msra.mxu0 %v1511
        %1571 = vmatpush.msra.mxu0 %v1510
        %1572 = vmatpush.msra.mxu0 %v1509
        %1573 = vmatpush.msra.mxu0 %v1508
        %1574 = vmatpush.msra.mxu0 %v1507
        %1575 = vmatpush.msra.mxu0 %v1506
        %1576 = vmatpush.msra.mxu0 %v1505
        %1577 = vmatpush.msra.mxu0 %v1504
        %1578 = vmatpush.msra.mxu0 %v1503
        %1579 = vmatpush.msra.mxu0 %v1502
        %1580 = vmatpush.msra.mxu0 %v1501
        %1581 = vmatmul.f32.gmra.mxu0 %v1469
        %v1582 = vpop.f32.mrf.mxu0
        %v1583 = vadd.f32 %v1539, %v1582
        %1584 = vmatmul.f32.gmra.mxu0 %v1470
        %v1585 = vpop.f32.mrf.mxu0
        %v1586 = vadd.f32 %v1539, %v1585
        %1587 = vmatmul.f32.gmra.mxu0 %v1471
        %v1588 = vpop.f32.mrf.mxu0
        %v1589 = vadd.f32 %v1539, %v1588
        %1590 = vmatmul.f32.gmra.mxu0 %v1472
        %v1591 = vpop.f32.mrf.mxu0
        %v1592 = vadd.f32 %v1539, %v1591
        %1593 = vmatmul.f32.gmra.mxu0 %v1473
        %v1594 = vpop.f32.mrf.mxu0
        %v1595 = vadd.f32 %v1539, %v1594
        %1596 = vmatmul.f32.gmra.mxu0 %v1474
        %v1597 = vpop.f32.mrf.mxu0
        %v1598 = vadd.f32 %v1539, %v1597
        %1599 = vmatmul.f32.gmra.mxu0 %v1475
        %v1600 = vpop.f32.mrf.mxu0
        %v1601 = vadd.f32 %v1539, %v1600
        %1602 = vmatmul.f32.gmra.mxu0 %v1476
        %v1603 = vpop.f32.mrf.mxu0
        %v1604 = vadd.f32 %v1539, %v1603
        %1605 = vdwg.mxu0
        %1606 = vmatpush.msra.mxu0 %v1532
        %1607 = vmatpush.msra.mxu0 %v1531
        %1608 = vmatpush.msra.mxu0 %v1530
        %1609 = vmatpush.msra.mxu0 %v1529
        %1610 = vmatpush.msra.mxu0 %v1528
        %1611 = vmatpush.msra.mxu0 %v1527
        %1612 = vmatpush.msra.mxu0 %v1526
        %1613 = vmatpush.msra.mxu0 %v1525
        %1614 = vmatpush.msra.mxu0 %v1524
        %1615 = vmatpush.msra.mxu0 %v1523
        %1616 = vmatpush.msra.mxu0 %v1522
        %1617 = vmatpush.msra.mxu0 %v1521
        %1618 = vmatpush.msra.mxu0 %v1520
        %1619 = vmatpush.msra.mxu0 %v1519
        %1620 = vmatpush.msra.mxu0 %v1518
        %1621 = vmatpush.msra.mxu0 %v1517
        %1622 = vmatmul.f32.gmra.mxu0 %v1493
        %v1623 = vpop.f32.mrf.mxu0
        %v1624 = vadd.f32 %v1583, %v1623
        %1625 = vmatmul.f32.gmra.mxu0 %v1494
        %v1626 = vpop.f32.mrf.mxu0
        %v1627 = vadd.f32 %v1586, %v1626
        %1628 = vmatmul.f32.gmra.mxu0 %v1495
        %v1629 = vpop.f32.mrf.mxu0
        %v1630 = vadd.f32 %v1589, %v1629
        %1631 = vmatmul.f32.gmra.mxu0 %v1496
        %v1632 = vpop.f32.mrf.mxu0
        %v1633 = vadd.f32 %v1592, %v1632
        %1634 = vmatmul.f32.gmra.mxu0 %v1497
        %v1635 = vpop.f32.mrf.mxu0
        %v1636 = vadd.f32 %v1595, %v1635
        %1637 = vmatmul.f32.gmra.mxu0 %v1498
        %v1638 = vpop.f32.mrf.mxu0
        %v1639 = vadd.f32 %v1598, %v1638
        %1640 = vmatmul.f32.gmra.mxu0 %v1499
        %v1641 = vpop.f32.mrf.mxu0
        %v1642 = vadd.f32 %v1601, %v1641
        %1643 = vmatmul.f32.gmra.mxu0 %v1500
        %v1644 = vpop.f32.mrf.mxu0
        %v1645 = vadd.f32 %v1604, %v1644
        %1646 = vdwg.mxu0
        %1647 = vmatpush.msra.mxu0 0.0
        %1648 = vmatpush.msra.mxu0 0.0
        %1649 = vmatpush.msra.mxu0 0.0
        %1650 = vmatpush.msra.mxu0 0.0
        %1651 = vmatpush.msra.mxu0 0.0
        %1652 = vmatpush.msra.mxu0 0.0
        %1653 = vmatpush.msra.mxu0 0.0
        %1654 = vmatpush.msra.mxu0 0.0
        %1655 = vmatpush.msra.mxu0 0.0
        %1656 = vmatpush.msra.mxu0 0.0
        %1657 = vmatpush.msra.mxu0 0.0
        %1658 = vmatpush.msra.mxu0 0.0
        %1659 = vmatpush.msra.mxu0 %v1536
        %1660 = vmatpush.msra.mxu0 %v1535
        %1661 = vmatpush.msra.mxu0 %v1534
        %1662 = vmatpush.msra.mxu0 %v1533
        %1663 = vmatmul.f32.gmra.mxu0 %v1542
        %v1664 = vpop.f32.mrf.mxu0
        %v1665 = vadd.f32 %v1624, %v1664
        %1666 = vmatmul.f32.gmra.mxu0 %v1545
        %v1667 = vpop.f32.mrf.mxu0
        %v1668 = vadd.f32 %v1627, %v1667
        %1669 = vmatmul.f32.gmra.mxu0 %v1548
        %v1670 = vpop.f32.mrf.mxu0
        %v1671 = vadd.f32 %v1630, %v1670
        %1672 = vmatmul.f32.gmra.mxu0 %v1551
        %v1673 = vpop.f32.mrf.mxu0
        %v1674 = vadd.f32 %v1633, %v1673
        %1675 = vmatmul.f32.gmra.mxu0 %v1554
        %v1676 = vpop.f32.mrf.mxu0
        %v1677 = vadd.f32 %v1636, %v1676
        %1678 = vmatmul.f32.gmra.mxu0 %v1557
        %v1679 = vpop.f32.mrf.mxu0
        %v1680 = vadd.f32 %v1639, %v1679
        %1681 = vmatmul.f32.gmra.mxu0 %v1560
        %v1682 = vpop.f32.mrf.mxu0
        %v1683 = vadd.f32 %v1642, %v1682
        %1684 = vmatmul.f32.gmra.mxu0 %v1563
        %v1685 = vpop.f32.mrf.mxu0
        %v1686 = vadd.f32 %v1645, %v1685
        %1687 = vdwg.mxu0
        %v1688 = vld [vmem:[%s7] sm:$0xff]
        %v1689 = vld [vmem:[%s7 + $0x8] sm:$0xff]
        %v1690 = vld [vmem:[%s7 + $0x10] sm:$0xff]
        %v1691 = vld [vmem:[%s7 + $0x18] sm:$0xff]
        %v1692 = vld [vmem:[%s8] sm:$0x1]
        %v1694 = vperm.slane %v1692, 0
        %v1697 = vsel %vm679, %v1665, 0
        %v1700 = vsel %vm679, %v1668, 0
        %v1703 = vsel %vm679, %v1671, 0
        %v1706 = vsel %vm679, %v1674, 0
        %v1709 = vsel %vm679, %v1677, 0
        %v1712 = vsel %vm679, %v1680, 0
        %v1715 = vsel %vm679, %v1683, 0
        %v1718 = vsel %vm679, %v1686, 0
        %1720 = vmatpush.msra.mxu0 0.0
        %1721 = vmatpush.msra.mxu0 0.0
        %1722 = vmatpush.msra.mxu0 0.0
        %1723 = vmatpush.msra.mxu0 0.0
        %1724 = vmatpush.msra.mxu0 0.0
        %1725 = vmatpush.msra.mxu0 0.0
        %1726 = vmatpush.msra.mxu0 0.0
        %1727 = vmatpush.msra.mxu0 0.0
        %1728 = vmatpush.msra.mxu0 0.0
        %1729 = vmatpush.msra.mxu0 0.0
        %1730 = vmatpush.msra.mxu0 0.0
        %1731 = vmatpush.msra.mxu0 0.0
        %1732 = vmatpush.msra.mxu0 %v1691
        %1733 = vmatpush.msra.mxu0 %v1690
        %1734 = vmatpush.msra.mxu0 %v1689
        %1735 = vmatpush.msra.mxu0 %v1688
        %1736 = vmatmul.f32.gmra.mxu0 %v1697
        %v1737 = vpop.f32.mrf.mxu0
        %v1738 = vadd.f32 %v1694, %v1737
        %1739 = vmatmul.f32.gmra.mxu0 %v1700
        %v1740 = vpop.f32.mrf.mxu0
        %v1741 = vadd.f32 %v1694, %v1740
        %1742 = vmatmul.f32.gmra.mxu0 %v1703
        %v1743 = vpop.f32.mrf.mxu0
        %v1744 = vadd.f32 %v1694, %v1743
        %1745 = vmatmul.f32.gmra.mxu0 %v1706
        %v1746 = vpop.f32.mrf.mxu0
        %v1747 = vadd.f32 %v1694, %v1746
        %1748 = vmatmul.f32.gmra.mxu0 %v1709
        %v1749 = vpop.f32.mrf.mxu0
        %v1750 = vadd.f32 %v1694, %v1749
        %1751 = vmatmul.f32.gmra.mxu0 %v1712
        %v1752 = vpop.f32.mrf.mxu0
        %v1753 = vadd.f32 %v1694, %v1752
        %1754 = vmatmul.f32.gmra.mxu0 %v1715
        %v1755 = vpop.f32.mrf.mxu0
        %v1756 = vadd.f32 %v1694, %v1755
        %1757 = vmatmul.f32.gmra.mxu0 %v1718
        %v1758 = vpop.f32.mrf.mxu0
        %v1759 = vadd.f32 %v1694, %v1758
        %1760 = vdwg.mxu0
        %v1761 = vld [vmem:[%s9] sm:$0xff]
        %v1762 = vld [vmem:[%s9 + $0x8] sm:$0xff]
        %v1763 = vld [vmem:[%s9 + $0x10] sm:$0xff]
        %v1764 = vld [vmem:[%s9 + $0x18] sm:$0xff]
        %v1765 = vld [vmem:[%s9 + $0x20] sm:$0xff]
        %v1766 = vld [vmem:[%s9 + $0x28] sm:$0xff]
        %v1767 = vld [vmem:[%s9 + $0x30] sm:$0xff]
        %v1768 = vld [vmem:[%s9 + $0x38] sm:$0xff]
        %v1769 = vld [vmem:[%s10] sm:$0xff]
        %v1770 = vld [vmem:[%s10 + $0x8] sm:$0xff]
        %v1771 = vld [vmem:[%s11] sm:$0xff]
        %v1772 = vld [vmem:[%s11 + $0x8] sm:$0xff]
        %v1773 = vld [vmem:[%s12] sm:$0xff]
        %s1774 = sld [smem:[#allocation2]]
        %s1775 = smax.f32 %s1774, 0.1
        %s1776 = smin.f32 %s1775, 5.0
        %v1777 = vstv %s1776
        %v1778 = vrcp.pop %v1777
        %v1779 = vmul.f32 %v1777, %v1778
        %v1780 = vsub.f32 1.0, %v1779
        %v1781 = vmul.f32 %v1778, %v1780
        %v1782 = vadd.f32 %v1778, %v1781
        %vm1783 = vweird.f32 %v1777
        %vm1784 = vweird.f32 %v1778
        %vm1785 = vmor %vm1783, %vm1784
        %v1786 = vsel %vm1785, %v1778, %v1782
        %v1787 = vand.u32 2147483647, %v1777
        %vm1788 = vcmp.eq.f32.partialorder %v1787, 8.507059e+37
        %v1789 = vand.u32 %v1777, 2147483648
        %v1790 = vor.u32 1.1754944e-38, %v1789
        %v1791 = vsel %vm1788, %v1790, %v1786
        %v1792 = vmul.f32 %v1738, %v1791
        %v1793 = vmul.f32 %v1741, %v1791
        %v1794 = vmul.f32 %v1744, %v1791
        %v1795 = vmul.f32 %v1747, %v1791
        %v1796 = vmul.f32 %v1750, %v1791
        %v1797 = vmul.f32 %v1753, %v1791
        %v1798 = vmul.f32 %v1756, %v1791
        %v1799 = vmul.f32 %v1759, %v1791
        %vm1800 = vcmask 130048
        %v1801 = vsel %vm1800, %v1792, -inf
        %1802 = vmax.xlane.f32.xlu0 %v1801
        %v1803 = vpop.xlane.xlu0 %1802
        %v1804 = vsel %vm1800, %v1793, -inf
        %1805 = vmax.xlane.f32.xlu0 %v1804
        %v1806 = vpop.xlane.xlu0 %1805
        %v1807 = vsel %vm1800, %v1794, -inf
        %1808 = vmax.xlane.f32.xlu0 %v1807
        %v1809 = vpop.xlane.xlu0 %1808
        %v1810 = vsel %vm1800, %v1795, -inf
        %1811 = vmax.xlane.f32.xlu0 %v1810
        %v1812 = vpop.xlane.xlu0 %1811
        %v1813 = vsel %vm1800, %v1796, -inf
        %1814 = vmax.xlane.f32.xlu0 %v1813
        %v1815 = vpop.xlane.xlu0 %1814
        %v1816 = vsel %vm1800, %v1797, -inf
        %1817 = vmax.xlane.f32.xlu0 %v1816
        %v1818 = vpop.xlane.xlu0 %1817
        %v1819 = vsel %vm1800, %v1798, -inf
        %1820 = vmax.xlane.f32.xlu0 %v1819
        %v1821 = vpop.xlane.xlu0 %1820
        %v1822 = vsel %vm1800, %v1799, -inf
        %1823 = vmax.xlane.f32.xlu0 %v1822
        %v1824 = vpop.xlane.xlu0 %1823
        %v1825 = vsub.f32 %v1792, %v1803
        %v1826 = vsub.f32 %v1793, %v1806
        %v1827 = vsub.f32 %v1794, %v1809
        %v1828 = vsub.f32 %v1795, %v1812
        %v1829 = vsub.f32 %v1796, %v1815
        %v1830 = vsub.f32 %v1797, %v1818
        %v1831 = vsub.f32 %v1798, %v1821
        %v1832 = vsub.f32 %v1799, %v1824
        %v1833 = vmul.f32 %v1825, 1.442695
        %v1834 = vpow.pop %v1833
        %v1835 = vmul.f32 %v1826, 1.442695
        %v1836 = vpow.pop %v1835
        %v1837 = vmul.f32 %v1827, 1.442695
        %v1838 = vpow.pop %v1837
        %v1839 = vmul.f32 %v1828, 1.442695
        %v1840 = vpow.pop %v1839
        %v1841 = vmul.f32 %v1829, 1.442695
        %v1842 = vpow.pop %v1841
        %v1843 = vmul.f32 %v1830, 1.442695
        %v1844 = vpow.pop %v1843
        %v1845 = vmul.f32 %v1831, 1.442695
        %v1846 = vpow.pop %v1845
        %v1847 = vmul.f32 %v1832, 1.442695
        %v1848 = vpow.pop %v1847
        %v1849 = vsel %vm1800, %v1834, 0.0
        %1850 = vadd.xlane.f32.xlu0 %v1849
        %v1851 = vpop.xlane.xlu0 %1850
        %v1852 = vsel %vm1800, %v1836, 0.0
        %1853 = vadd.xlane.f32.xlu0 %v1852
        %v1854 = vpop.xlane.xlu0 %1853
        %v1855 = vsel %vm1800, %v1838, 0.0
        %1856 = vadd.xlane.f32.xlu0 %v1855
        %v1857 = vpop.xlane.xlu0 %1856
        %v1858 = vsel %vm1800, %v1840, 0.0
        %1859 = vadd.xlane.f32.xlu0 %v1858
        %v1860 = vpop.xlane.xlu0 %1859
        %v1861 = vsel %vm1800, %v1842, 0.0
        %1862 = vadd.xlane.f32.xlu0 %v1861
        %v1863 = vpop.xlane.xlu0 %1862
        %v1864 = vsel %vm1800, %v1844, 0.0
        %1865 = vadd.xlane.f32.xlu0 %v1864
        %v1866 = vpop.xlane.xlu0 %1865
        %v1867 = vsel %vm1800, %v1846, 0.0
        %1868 = vadd.xlane.f32.xlu0 %v1867
        %v1869 = vpop.xlane.xlu0 %1868
        %v1870 = vsel %vm1800, %v1848, 0.0
        %1871 = vadd.xlane.f32.xlu0 %v1870
        %v1872 = vpop.xlane.xlu0 %1871
        %v1873 = vrcp.pop %v1851
        %v1874 = vrcp.pop %v1854
        %v1875 = vrcp.pop %v1857
        %v1876 = vrcp.pop %v1860
        %v1877 = vrcp.pop %v1863
        %v1878 = vrcp.pop %v1866
        %v1879 = vrcp.pop %v1869
        %v1880 = vrcp.pop %v1872
        %v1881 = vmul.f32 %v1834, %v1873
        %v1882 = vmul.f32 %v1836, %v1874
        %v1883 = vmul.f32 %v1838, %v1875
        %v1884 = vmul.f32 %v1840, %v1876
        %v1885 = vmul.f32 %v1842, %v1877
        %v1886 = vmul.f32 %v1844, %v1878
        %v1887 = vmul.f32 %v1846, %v1879
        %v1888 = vmul.f32 %v1848, %v1880
        %v1889 = vmul.f32 %v1881, %v1761
        %v1890 = vmul.f32 %v1882, %v1762
        %v1891 = vmul.f32 %v1883, %v1763
        %v1892 = vmul.f32 %v1884, %v1764
        %v1893 = vmul.f32 %v1885, %v1765
        %v1894 = vmul.f32 %v1886, %v1766
        %v1895 = vmul.f32 %v1887, %v1767
        %v1896 = vmul.f32 %v1888, %v1768
        %1897 = vxpose.xlu0.b32.start [1/16] %v1889, 128
        %1898 = vxpose.xlu0.b32.cont [2/16] %v1890, 128
        %1899 = vxpose.xlu0.b32.cont [3/16] %v1891, 128
        %1900 = vxpose.xlu0.b32.cont [4/16] %v1892, 128
        %1901 = vxpose.xlu0.b32.cont [5/16] %v1893, 128
        %1902 = vxpose.xlu0.b32.cont [6/16] %v1894, 128
        %1903 = vxpose.xlu0.b32.cont [7/16] %v1895, 128
        %1904 = vxpose.xlu0.b32.cont [8/16] %v1896, 128
        %1905 = vxpose.xlu0.b32.cont [9/16] 0.0, 128
        %1906 = vxpose.xlu0.b32.cont [10/16] 0.0, 128
        %1907 = vxpose.xlu0.b32.cont [11/16] 0.0, 128
        %1908 = vxpose.xlu0.b32.cont [12/16] 0.0, 128
        %1909 = vxpose.xlu0.b32.cont [13/16] 0.0, 128
        %1910 = vxpose.xlu0.b32.cont [14/16] 0.0, 128
        %1911 = vxpose.xlu0.b32.cont [15/16] 0.0, 128
        %1912 = vxpose.xlu0.b32.end [16/16] 0.0, 128
        %v1913 = vpop.trf.xlu0
        %v1914 = vpop.trf.xlu0
        %v1915 = vpop.trf.xlu0
        %v1916 = vpop.trf.xlu0
        %v1917 = vpop.trf.xlu0
        %v1918 = vpop.trf.xlu0
        %v1919 = vpop.trf.xlu0
        %v1920 = vpop.trf.xlu0
        %v1921 = vpop.trf.xlu0
        %v1922 = vpop.trf.xlu0
        %v1923 = vpop.trf.xlu0
        %v1924 = vpop.trf.xlu0
        %v1925 = vpop.trf.xlu0
        %v1926 = vpop.trf.xlu0
        %v1927 = vpop.trf.xlu0
        %v1928 = vpop.trf.xlu0
        %1929 = vrot.lane.b32.xlu0 %v1665, 96
        %v1930 = vpop.permute.xlu0 %1929
        %1931 = vrot.lane.b32.xlu0 %v1668, 96
        %v1932 = vpop.permute.xlu0 %1931
        %1933 = vrot.lane.b32.xlu0 %v1671, 96
        %v1934 = vpop.permute.xlu0 %1933
        %1935 = vrot.lane.b32.xlu0 %v1674, 96
        %v1936 = vpop.permute.xlu0 %1935
        %1937 = vrot.lane.b32.xlu0 %v1677, 96
        %v1938 = vpop.permute.xlu0 %1937
        %1939 = vrot.lane.b32.xlu0 %v1680, 96
        %v1940 = vpop.permute.xlu0 %1939
        %1941 = vrot.lane.b32.xlu0 %v1683, 96
        %v1942 = vpop.permute.xlu0 %1941
        %1943 = vrot.lane.b32.xlu0 %v1686, 96
        %v1944 = vpop.permute.xlu0 %1943
        %v1954 = vsel %vm1459, %v1913, 0
        %v1957 = vsel %vm1459, %v1914, 0
        %1959 = vmatpush.msra.mxu0 0.0
        %1960 = vmatpush.msra.mxu0 0.0
        %1961 = vmatpush.msra.mxu0 0.0
        %1962 = vmatpush.msra.mxu0 0.0
        %1963 = vmatpush.msra.mxu0 0.0
        %1964 = vmatpush.msra.mxu0 0.0
        %1965 = vmatpush.msra.mxu0 0.0
        %1966 = vmatpush.msra.mxu0 0.0
        %1967 = vmatpush.msra.mxu0 %v1944
        %1968 = vmatpush.msra.mxu0 %v1942
        %1969 = vmatpush.msra.mxu0 %v1940
        %1970 = vmatpush.msra.mxu0 %v1938
        %1971 = vmatpush.msra.mxu0 %v1936
        %1972 = vmatpush.msra.mxu0 %v1934
        %1973 = vmatpush.msra.mxu0 %v1932
        %1974 = vmatpush.msra.mxu0 %v1930
        %1975 = vmatmul.f32.gmra.mxu0 %v1954
        %v1976 = vpop.f32.mrf.mxu0
        %v1977 = vadd.f32 0.0, %v1976
        %1978 = vmatmul.f32.gmra.mxu0 %v1957
        %v1979 = vpop.f32.mrf.mxu0
        %v1980 = vadd.f32 0.0, %v1979
        %1981 = vdwg.mxu0
        %vm1982 = vcmask 64512
        %v1983 = vsel %vm1982, %v1977, 0.0
        %v1984 = vsel %vm1982, %v1980, 0.0
        %v1985 = vadd.f32 %v1983, %v1984
        %1986 = vadd.xlane.f32.xlu0 %v1985
        %v1987 = vpop.xlane.xlu0 %1986
        %v1988 = vrot.slane %v1987, 4
        %v1989 = vadd.f32 %v1987, %v1988
        %v1990 = vrot.slane %v1989, 2
        %v1991 = vadd.f32 %v1989, %v1990
        %v1992 = vrot.slane %v1991, 1
        %v1993 = vadd.f32 %v1991, %v1992
        %s1994 = vtos %v1993
        %v1995 = vrcp.pop 128.0
        %v1996 = vmul.f32 128.0, %v1995
        %v1997 = vsub.f32 1.0, %v1996
        %v1998 = vmul.f32 %v1995, %v1997
        %v1999 = vadd.f32 %v1995, %v1998
        %vm2000 = vweird.f32 %v1995
        %v2001 = vsel %vm2000, %v1995, %v1999
        %s2002 = vtos %v2001
        %s2003 = smul.f32 %s1994, %s2002
        %v2004 = vstv %s2003
        %v2005 = vsub.f32 %v1977, %v2004
        %v2006 = vsub.f32 %v1980, %v2004
        %v2007 = vmul.f32 %v2005, %v2005
        %v2008 = vmul.f32 %v2006, %v2006
        %v2009 = vsel %vm1982, %v2007, 0.0
        %v2010 = vsel %vm1982, %v2008, 0.0
        %v2011 = vadd.f32 %v2009, %v2010
        %2012 = vadd.xlane.f32.xlu0 %v2011
        %v2013 = vpop.xlane.xlu0 %2012
        %v2014 = vrot.slane %v2013, 4
        %v2015 = vadd.f32 %v2013, %v2014
        %v2016 = vrot.slane %v2015, 2
        %v2017 = vadd.f32 %v2015, %v2016
        %v2018 = vrot.slane %v2017, 1
        %v2019 = vadd.f32 %v2017, %v2018
        %s2020 = vtos %v2019
        %v2021 = vrcp.pop 128.0
        %v2022 = vmul.f32 128.0, %v2021
        %v2023 = vsub.f32 1.0, %v2022
        %v2024 = vmul.f32 %v2021, %v2023
        %v2025 = vadd.f32 %v2021, %v2024
        %vm2026 = vweird.f32 %v2021
        %v2027 = vsel %vm2026, %v2021, %v2025
        %s2028 = vtos %v2027
        %s2029 = smul.f32 %s2020, %s2028
        %s2030 = sadd.f32 %s2029, 1e-05
        %v2031 = vstv %s2030
        %v2032 = vrsqrt.pop %v2031
        %v2033 = vmul.f32 %v2032, %v2031
        %v2034 = vmul.f32 %v2033, %v2032
        %v2035 = vmul.f32 0.5, %v2034
        %v2036 = vsub.f32 1.5, %v2035
        %v2037 = vmul.f32 %v2032, %v2036
        %vm2038 = vweird.f32 %v2031
        %vm2039 = vweird.f32 %v2032
        %vm2040 = vmor %vm2038, %vm2039
        %v2041 = vsel %vm2040, %v2032, %v2037
        %s2042 = vtos %v2041
        %v2043 = vstv %s2042
        %v2044 = vmul.f32 %v2005, %v2043
        %v2045 = vmul.f32 %v2006, %v2043
        %v2046 = vmul.f32 %v2044, %v1769
        %v2047 = vmul.f32 %v2045, %v1770
        %v2048 = vadd.f32 %v2046, %v1771
        %v2049 = vadd.f32 %v2047, %v1772
        %v2051 = vsel %vm1982, %v2048, 0
        %v2054 = vsel %vm1982, %v2049, 0
        %2056 = vmatpush.msra.mxu0 0.0
        %2057 = vmatpush.msra.mxu0 0.0
        %2058 = vmatpush.msra.mxu0 0.0
        %2059 = vmatpush.msra.mxu0 0.0
        %2060 = vmatpush.msra.mxu0 0.0
        %2061 = vmatpush.msra.mxu0 0.0
        %2062 = vmatpush.msra.mxu0 0.0
        %2063 = vmatpush.msra.mxu0 0.0
        %2064 = vmatpush.msra.mxu0 0.0
        %2065 = vmatpush.msra.mxu0 0.0
        %2066 = vmatpush.msra.mxu0 0.0
        %2067 = vmatpush.msra.mxu0 0.0
        %2068 = vmatpush.msra.mxu0 0.0
        %2069 = vmatpush.msra.mxu0 0.0
        %2070 = vmatpush.msra.mxu0 0.0
        %2071 = vmatpush.msra.mxu0 %v1773
        %2072 = vmatmul.f32.gmra.mxu0 %v2051
        %v2073 = vpop.f32.mrf.mxu0
        %v2074 = vadd.f32 0.0, %v2073
        %2075 = vmatmul.f32.gmra.mxu0 %v2054
        %v2076 = vpop.f32.mrf.mxu0
        %v2077 = vadd.f32 0.0, %v2076
        %2078 = vdwg.mxu0
        %v2080 = vsel %vm1800, %v1889, 0
        %v2083 = vsel %vm1800, %v1890, 0
        %v2086 = vsel %vm1800, %v1891, 0
        %v2089 = vsel %vm1800, %v1892, 0
        %v2092 = vsel %vm1800, %v1893, 0
        %v2095 = vsel %vm1800, %v1894, 0
        %v2098 = vsel %vm1800, %v1895, 0
        %v2101 = vsel %vm1800, %v1896, 0
        %2103 = vmatpush.msra.mxu0 0.0
        %2104 = vmatpush.msra.mxu0 0.0
        %2105 = vmatpush.msra.mxu0 0.0
        %2106 = vmatpush.msra.mxu0 0.0
        %2107 = vmatpush.msra.mxu0 0.0
        %2108 = vmatpush.msra.mxu0 0.0
        %2109 = vmatpush.msra.mxu0 0.0
        %2110 = vmatpush.msra.mxu0 0.0
        %2111 = vmatpush.msra.mxu0 0.0
        %2112 = vmatpush.msra.mxu0 0.0
        %2113 = vmatpush.msra.mxu0 0.0
        %2114 = vmatpush.msra.mxu0 0.0
        %2115 = vmatpush.msra.mxu0 0.0
        %2116 = vmatpush.msra.mxu0 0.0
        %2117 = vmatpush.msra.mxu0 %v2077
        %2118 = vmatpush.msra.mxu0 %v2074
        %2119 = vmatmul.f32.gmra.mxu0 %v2080
        %v2120 = vpop.f32.mrf.mxu0
        %v2121 = vadd.f32 0.0, %v2120
        %2122 = vmatmul.f32.gmra.mxu0 %v2083
        %v2123 = vpop.f32.mrf.mxu0
        %v2124 = vadd.f32 0.0, %v2123
        %2125 = vmatmul.f32.gmra.mxu0 %v2086
        %v2126 = vpop.f32.mrf.mxu0
        %v2127 = vadd.f32 0.0, %v2126
        %2128 = vmatmul.f32.gmra.mxu0 %v2089
        %v2129 = vpop.f32.mrf.mxu0
        %v2130 = vadd.f32 0.0, %v2129
        %2131 = vmatmul.f32.gmra.mxu0 %v2092
        %v2132 = vpop.f32.mrf.mxu0
        %v2133 = vadd.f32 0.0, %v2132
        %2134 = vmatmul.f32.gmra.mxu0 %v2095
        %v2135 = vpop.f32.mrf.mxu0
        %v2136 = vadd.f32 0.0, %v2135
        %2137 = vmatmul.f32.gmra.mxu0 %v2098
        %v2138 = vpop.f32.mrf.mxu0
        %v2139 = vadd.f32 0.0, %v2138
        %2140 = vmatmul.f32.gmra.mxu0 %v2101
        %v2141 = vpop.f32.mrf.mxu0
        %v2142 = vadd.f32 0.0, %v2141
        %2143 = vdwg.mxu0
        %s2144 = sld [smem:[#allocation2 + $0x1]]
        %s2145 = smax.f32 %s2144, 0.1
        %s2146 = smin.f32 %s2145, 5.0
        %v2147 = vstv %s2146
        %v2148 = vrcp.pop %v2147
        %v2149 = vmul.f32 %v2147, %v2148
        %v2150 = vsub.f32 1.0, %v2149
        %v2151 = vmul.f32 %v2148, %v2150
        %v2152 = vadd.f32 %v2148, %v2151
        %vm2153 = vweird.f32 %v2147
        %vm2154 = vweird.f32 %v2148
        %vm2155 = vmor %vm2153, %vm2154
        %v2156 = vsel %vm2155, %v2148, %v2152
        %v2157 = vand.u32 2147483647, %v2147
        %vm2158 = vcmp.eq.f32.partialorder %v2157, 8.507059e+37
        %v2159 = vand.u32 %v2147, 2147483648
        %v2160 = vor.u32 1.1754944e-38, %v2159
        %v2161 = vsel %vm2158, %v2160, %v2156
        %v2162 = vmul.f32 %v1738, %v2161
        %v2163 = vmul.f32 %v1741, %v2161
        %v2164 = vmul.f32 %v1744, %v2161
        %v2165 = vmul.f32 %v1747, %v2161
        %v2166 = vmul.f32 %v1750, %v2161
        %v2167 = vmul.f32 %v1753, %v2161
        %v2168 = vmul.f32 %v1756, %v2161
        %v2169 = vmul.f32 %v1759, %v2161
        %vm2170 = vcmask 261248
        %v2171 = vsel %vm2170, %v2162, -inf
        %2172 = vmax.xlane.f32.xlu0 %v2171
        %v2173 = vpop.xlane.xlu0 %2172
        %v2174 = vsel %vm2170, %v2163, -inf
        %2175 = vmax.xlane.f32.xlu0 %v2174
        %v2176 = vpop.xlane.xlu0 %2175
        %v2177 = vsel %vm2170, %v2164, -inf
        %2178 = vmax.xlane.f32.xlu0 %v2177
        %v2179 = vpop.xlane.xlu0 %2178
        %v2180 = vsel %vm2170, %v2165, -inf
        %2181 = vmax.xlane.f32.xlu0 %v2180
        %v2182 = vpop.xlane.xlu0 %2181
        %v2183 = vsel %vm2170, %v2166, -inf
        %2184 = vmax.xlane.f32.xlu0 %v2183
        %v2185 = vpop.xlane.xlu0 %2184
        %v2186 = vsel %vm2170, %v2167, -inf
        %2187 = vmax.xlane.f32.xlu0 %v2186
        %v2188 = vpop.xlane.xlu0 %2187
        %v2189 = vsel %vm2170, %v2168, -inf
        %2190 = vmax.xlane.f32.xlu0 %v2189
        %v2191 = vpop.xlane.xlu0 %2190
        %v2192 = vsel %vm2170, %v2169, -inf
        %2193 = vmax.xlane.f32.xlu0 %v2192
        %v2194 = vpop.xlane.xlu0 %2193
        %v2195 = vsub.f32 %v2162, %v2173
        %v2196 = vsub.f32 %v2163, %v2176
        %v2197 = vsub.f32 %v2164, %v2179
        %v2198 = vsub.f32 %v2165, %v2182
        %v2199 = vsub.f32 %v2166, %v2185
        %v2200 = vsub.f32 %v2167, %v2188
        %v2201 = vsub.f32 %v2168, %v2191
        %v2202 = vsub.f32 %v2169, %v2194
        %v2203 = vmul.f32 %v2195, 1.442695
        %v2204 = vpow.pop %v2203
        %v2205 = vmul.f32 %v2196, 1.442695
        %v2206 = vpow.pop %v2205
        %v2207 = vmul.f32 %v2197, 1.442695
        %v2208 = vpow.pop %v2207
        %v2209 = vmul.f32 %v2198, 1.442695
        %v2210 = vpow.pop %v2209
        %v2211 = vmul.f32 %v2199, 1.442695
        %v2212 = vpow.pop %v2211
        %v2213 = vmul.f32 %v2200, 1.442695
        %v2214 = vpow.pop %v2213
        %v2215 = vmul.f32 %v2201, 1.442695
        %v2216 = vpow.pop %v2215
        %v2217 = vmul.f32 %v2202, 1.442695
        %v2218 = vpow.pop %v2217
        %2227 = vrot.lane.b32.xlu0 %v2204, 112
        %v2228 = vpop.permute.xlu0 %2227
        %2229 = vrot.lane.b32.xlu0 %v2206, 112
        %v2230 = vpop.permute.xlu0 %2229
        %2231 = vrot.lane.b32.xlu0 %v2208, 112
        %v2232 = vpop.permute.xlu0 %2231
        %2233 = vrot.lane.b32.xlu0 %v2210, 112
        %v2234 = vpop.permute.xlu0 %2233
        %2235 = vrot.lane.b32.xlu0 %v2212, 112
        %v2236 = vpop.permute.xlu0 %2235
        %2237 = vrot.lane.b32.xlu0 %v2214, 112
        %v2238 = vpop.permute.xlu0 %2237
        %2239 = vrot.lane.b32.xlu0 %v2216, 112
        %v2240 = vpop.permute.xlu0 %2239
        %2241 = vrot.lane.b32.xlu0 %v2218, 112
        %v2242 = vpop.permute.xlu0 %2241
        %v2251 = vsel %vm1800, %v2228, 0.0
        %2252 = vadd.xlane.f32.xlu0 %v2251
        %v2253 = vpop.xlane.xlu0 %2252
        %v2254 = vsel %vm1800, %v2230, 0.0
        %2255 = vadd.xlane.f32.xlu0 %v2254
        %v2256 = vpop.xlane.xlu0 %2255
        %v2257 = vsel %vm1800, %v2232, 0.0
        %2258 = vadd.xlane.f32.xlu0 %v2257
        %v2259 = vpop.xlane.xlu0 %2258
        %v2260 = vsel %vm1800, %v2234, 0.0
        %2261 = vadd.xlane.f32.xlu0 %v2260
        %v2262 = vpop.xlane.xlu0 %2261
        %v2263 = vsel %vm1800, %v2236, 0.0
        %2264 = vadd.xlane.f32.xlu0 %v2263
        %v2265 = vpop.xlane.xlu0 %2264
        %v2266 = vsel %vm1800, %v2238, 0.0
        %2267 = vadd.xlane.f32.xlu0 %v2266
        %v2268 = vpop.xlane.xlu0 %2267
        %v2269 = vsel %vm1800, %v2240, 0.0
        %2270 = vadd.xlane.f32.xlu0 %v2269
        %v2271 = vpop.xlane.xlu0 %2270
        %v2272 = vsel %vm1800, %v2242, 0.0
        %2273 = vadd.xlane.f32.xlu0 %v2272
        %v2274 = vpop.xlane.xlu0 %2273
        %v2275 = vrcp.pop %v2253
        %v2276 = vrcp.pop %v2256
        %v2277 = vrcp.pop %v2259
        %v2278 = vrcp.pop %v2262
        %v2279 = vrcp.pop %v2265
        %v2280 = vrcp.pop %v2268
        %v2281 = vrcp.pop %v2271
        %v2282 = vrcp.pop %v2274
        %v2283 = vmul.f32 %v2204, %v2275
        %v2284 = vmul.f32 %v2206, %v2276
        %v2285 = vmul.f32 %v2208, %v2277
        %v2286 = vmul.f32 %v2210, %v2278
        %v2287 = vmul.f32 %v2212, %v2279
        %v2288 = vmul.f32 %v2214, %v2280
        %v2289 = vmul.f32 %v2216, %v2281
        %v2290 = vmul.f32 %v2218, %v2282
        %2299 = vrot.lane.b32.xlu0 %v1761, 16
        %v2300 = vpop.permute.xlu0 %2299
        %2301 = vrot.lane.b32.xlu0 %v1762, 16
        %v2302 = vpop.permute.xlu0 %2301
        %2303 = vrot.lane.b32.xlu0 %v1763, 16
        %v2304 = vpop.permute.xlu0 %2303
        %2305 = vrot.lane.b32.xlu0 %v1764, 16
        %v2306 = vpop.permute.xlu0 %2305
        %2307 = vrot.lane.b32.xlu0 %v1765, 16
        %v2308 = vpop.permute.xlu0 %2307
        %2309 = vrot.lane.b32.xlu0 %v1766, 16
        %v2310 = vpop.permute.xlu0 %2309
        %2311 = vrot.lane.b32.xlu0 %v1767, 16
        %v2312 = vpop.permute.xlu0 %2311
        %2313 = vrot.lane.b32.xlu0 %v1768, 16
        %v2314 = vpop.permute.xlu0 %2313
        %v2323 = vmul.f32 %v2283, %v2300
        %v2324 = vmul.f32 %v2284, %v2302
        %v2325 = vmul.f32 %v2285, %v2304
        %v2326 = vmul.f32 %v2286, %v2306
        %v2327 = vmul.f32 %v2287, %v2308
        %v2328 = vmul.f32 %v2288, %v2310
        %v2329 = vmul.f32 %v2289, %v2312
        %v2330 = vmul.f32 %v2290, %v2314
        %2339 = vrot.lane.b32.xlu0 %v2323, 112
        %v2340 = vpop.permute.xlu0 %2339
        %2341 = vrot.lane.b32.xlu0 %v2324, 112
        %v2342 = vpop.permute.xlu0 %2341
        %2343 = vrot.lane.b32.xlu0 %v2325, 112
        %v2344 = vpop.permute.xlu0 %2343
        %2345 = vrot.lane.b32.xlu0 %v2326, 112
        %v2346 = vpop.permute.xlu0 %2345
        %2347 = vrot.lane.b32.xlu0 %v2327, 112
        %v2348 = vpop.permute.xlu0 %2347
        %2349 = vrot.lane.b32.xlu0 %v2328, 112
        %v2350 = vpop.permute.xlu0 %2349
        %2351 = vrot.lane.b32.xlu0 %v2329, 112
        %v2352 = vpop.permute.xlu0 %2351
        %2353 = vrot.lane.b32.xlu0 %v2330, 112
        %v2354 = vpop.permute.xlu0 %2353
        %2363 = vxpose.xlu0.b32.start [1/16] %v2340, 128
        %2364 = vxpose.xlu0.b32.cont [2/16] %v2342, 128
        %2365 = vxpose.xlu0.b32.cont [3/16] %v2344, 128
        %2366 = vxpose.xlu0.b32.cont [4/16] %v2346, 128
        %2367 = vxpose.xlu0.b32.cont [5/16] %v2348, 128
        %2368 = vxpose.xlu0.b32.cont [6/16] %v2350, 128
        %2369 = vxpose.xlu0.b32.cont [7/16] %v2352, 128
        %2370 = vxpose.xlu0.b32.cont [8/16] %v2354, 128
        %2371 = vxpose.xlu0.b32.cont [9/16] 0.0, 128
        %2372 = vxpose.xlu0.b32.cont [10/16] 0.0, 128
        %2373 = vxpose.xlu0.b32.cont [11/16] 0.0, 128
        %2374 = vxpose.xlu0.b32.cont [12/16] 0.0, 128
        %2375 = vxpose.xlu0.b32.cont [13/16] 0.0, 128
        %2376 = vxpose.xlu0.b32.cont [14/16] 0.0, 128
        %2377 = vxpose.xlu0.b32.cont [15/16] 0.0, 128
        %2378 = vxpose.xlu0.b32.end [16/16] 0.0, 128
        %v2379 = vpop.trf.xlu0
        %v2380 = vpop.trf.xlu0
        %v2381 = vpop.trf.xlu0
        %v2382 = vpop.trf.xlu0
        %v2383 = vpop.trf.xlu0
        %v2384 = vpop.trf.xlu0
        %v2385 = vpop.trf.xlu0
        %v2386 = vpop.trf.xlu0
        %v2387 = vpop.trf.xlu0
        %v2388 = vpop.trf.xlu0
        %v2389 = vpop.trf.xlu0
        %v2390 = vpop.trf.xlu0
        %v2391 = vpop.trf.xlu0
        %v2392 = vpop.trf.xlu0
        %v2393 = vpop.trf.xlu0
        %v2394 = vpop.trf.xlu0
        %2395 = vrot.lane.b32.xlu0 %v1665, 88
        %v2396 = vpop.permute.xlu0 %2395
        %2397 = vrot.lane.b32.xlu0 %v1668, 88
        %v2398 = vpop.permute.xlu0 %2397
        %2399 = vrot.lane.b32.xlu0 %v1671, 88
        %v2400 = vpop.permute.xlu0 %2399
        %2401 = vrot.lane.b32.xlu0 %v1674, 88
        %v2402 = vpop.permute.xlu0 %2401
        %2403 = vrot.lane.b32.xlu0 %v1677, 88
        %v2404 = vpop.permute.xlu0 %2403
        %2405 = vrot.lane.b32.xlu0 %v1680, 88
        %v2406 = vpop.permute.xlu0 %2405
        %2407 = vrot.lane.b32.xlu0 %v1683, 88
        %v2408 = vpop.permute.xlu0 %2407
        %2409 = vrot.lane.b32.xlu0 %v1686, 88
        %v2410 = vpop.permute.xlu0 %2409
        %v2420 = vsel %vm1459, %v2379, 0
        %v2423 = vsel %vm1459, %v2380, 0
        %2425 = vmatpush.msra.mxu0 0.0
        %2426 = vmatpush.msra.mxu0 0.0
        %2427 = vmatpush.msra.mxu0 0.0
        %2428 = vmatpush.msra.mxu0 0.0
        %2429 = vmatpush.msra.mxu0 0.0
        %2430 = vmatpush.msra.mxu0 0.0
        %2431 = vmatpush.msra.mxu0 0.0
        %2432 = vmatpush.msra.mxu0 0.0
        %2433 = vmatpush.msra.mxu0 %v2410
        %2434 = vmatpush.msra.mxu0 %v2408
        %2435 = vmatpush.msra.mxu0 %v2406
        %2436 = vmatpush.msra.mxu0 %v2404
        %2437 = vmatpush.msra.mxu0 %v2402
        %2438 = vmatpush.msra.mxu0 %v2400
        %2439 = vmatpush.msra.mxu0 %v2398
        %2440 = vmatpush.msra.mxu0 %v2396
        %2441 = vmatmul.f32.gmra.mxu0 %v2420
        %v2442 = vpop.f32.mrf.mxu0
        %v2443 = vadd.f32 0.0, %v2442
        %2444 = vmatmul.f32.gmra.mxu0 %v2423
        %v2445 = vpop.f32.mrf.mxu0
        %v2446 = vadd.f32 0.0, %v2445
        %2447 = vdwg.mxu0
        %v2448 = vsel %vm1982, %v2443, 0.0
        %v2449 = vsel %vm1982, %v2446, 0.0
        %v2450 = vadd.f32 %v2448, %v2449
        %2451 = vadd.xlane.f32.xlu0 %v2450
        %v2452 = vpop.xlane.xlu0 %2451
        %v2453 = vrot.slane %v2452, 4
        %v2454 = vadd.f32 %v2452, %v2453
        %v2455 = vrot.slane %v2454, 2
        %v2456 = vadd.f32 %v2454, %v2455
        %v2457 = vrot.slane %v2456, 1
        %v2458 = vadd.f32 %v2456, %v2457
        %s2459 = vtos %v2458
        %v2460 = vrcp.pop 128.0
        %v2461 = vmul.f32 128.0, %v2460
        %v2462 = vsub.f32 1.0, %v2461
        %v2463 = vmul.f32 %v2460, %v2462
        %v2464 = vadd.f32 %v2460, %v2463
        %vm2465 = vweird.f32 %v2460
        %v2466 = vsel %vm2465, %v2460, %v2464
        %s2467 = vtos %v2466
        %s2468 = smul.f32 %s2459, %s2467
        %v2469 = vstv %s2468
        %v2470 = vsub.f32 %v2443, %v2469
        %v2471 = vsub.f32 %v2446, %v2469
        %v2472 = vmul.f32 %v2470, %v2470
        %v2473 = vmul.f32 %v2471, %v2471
        %v2474 = vsel %vm1982, %v2472, 0.0
        %v2475 = vsel %vm1982, %v2473, 0.0
        %v2476 = vadd.f32 %v2474, %v2475
        %2477 = vadd.xlane.f32.xlu0 %v2476
        %v2478 = vpop.xlane.xlu0 %2477
        %v2479 = vrot.slane %v2478, 4
        %v2480 = vadd.f32 %v2478, %v2479
        %v2481 = vrot.slane %v2480, 2
        %v2482 = vadd.f32 %v2480, %v2481
        %v2483 = vrot.slane %v2482, 1
        %v2484 = vadd.f32 %v2482, %v2483
        %s2485 = vtos %v2484
        %v2486 = vrcp.pop 128.0
        %v2487 = vmul.f32 128.0, %v2486
        %v2488 = vsub.f32 1.0, %v2487
        %v2489 = vmul.f32 %v2486, %v2488
        %v2490 = vadd.f32 %v2486, %v2489
        %vm2491 = vweird.f32 %v2486
        %v2492 = vsel %vm2491, %v2486, %v2490
        %s2493 = vtos %v2492
        %s2494 = smul.f32 %s2485, %s2493
        %s2495 = sadd.f32 %s2494, 1e-05
        %v2496 = vstv %s2495
        %v2497 = vrsqrt.pop %v2496
        %v2498 = vmul.f32 %v2497, %v2496
        %v2499 = vmul.f32 %v2498, %v2497
        %v2500 = vmul.f32 0.5, %v2499
        %v2501 = vsub.f32 1.5, %v2500
        %v2502 = vmul.f32 %v2497, %v2501
        %vm2503 = vweird.f32 %v2496
        %vm2504 = vweird.f32 %v2497
        %vm2505 = vmor %vm2503, %vm2504
        %v2506 = vsel %vm2505, %v2497, %v2502
        %s2507 = vtos %v2506
        %v2508 = vstv %s2507
        %v2509 = vmul.f32 %v2470, %v2508
        %v2510 = vmul.f32 %v2471, %v2508
        %v2511 = vmul.f32 %v2509, %v1769
        %v2512 = vmul.f32 %v2510, %v1770
        %v2513 = vadd.f32 %v2511, %v1771
        %v2514 = vadd.f32 %v2512, %v1772
        %v2516 = vsel %vm1982, %v2513, 0
        %v2519 = vsel %vm1982, %v2514, 0
        %2521 = vmatpush.msra.mxu0 0.0
        %2522 = vmatpush.msra.mxu0 0.0
        %2523 = vmatpush.msra.mxu0 0.0
        %2524 = vmatpush.msra.mxu0 0.0
        %2525 = vmatpush.msra.mxu0 0.0
        %2526 = vmatpush.msra.mxu0 0.0
        %2527 = vmatpush.msra.mxu0 0.0
        %2528 = vmatpush.msra.mxu0 0.0
        %2529 = vmatpush.msra.mxu0 0.0
        %2530 = vmatpush.msra.mxu0 0.0
        %2531 = vmatpush.msra.mxu0 0.0
        %2532 = vmatpush.msra.mxu0 0.0
        %2533 = vmatpush.msra.mxu0 0.0
        %2534 = vmatpush.msra.mxu0 0.0
        %2535 = vmatpush.msra.mxu0 0.0
        %2536 = vmatpush.msra.mxu0 %v1773
        %2537 = vmatmul.f32.gmra.mxu0 %v2516
        %v2538 = vpop.f32.mrf.mxu0
        %v2539 = vadd.f32 0.0, %v2538
        %2540 = vmatmul.f32.gmra.mxu0 %v2519
        %v2541 = vpop.f32.mrf.mxu0
        %v2542 = vadd.f32 0.0, %v2541
        %2543 = vdwg.mxu0
        %v2544 = vsel %vm1800, %v2340, 0
        %v2546 = vsel %vm1800, %v2342, 0
        %v2548 = vsel %vm1800, %v2344, 0
        %v2550 = vsel %vm1800, %v2346, 0
        %v2552 = vsel %vm1800, %v2348, 0
        %v2554 = vsel %vm1800, %v2350, 0
        %v2556 = vsel %vm1800, %v2352, 0
        %v2558 = vsel %vm1800, %v2354, 0
        %2560 = vmatpush.msra.mxu0 0.0
        %2561 = vmatpush.msra.mxu0 0.0
        %2562 = vmatpush.msra.mxu0 0.0
        %2563 = vmatpush.msra.mxu0 0.0
        %2564 = vmatpush.msra.mxu0 0.0
        %2565 = vmatpush.msra.mxu0 0.0
        %2566 = vmatpush.msra.mxu0 0.0
        %2567 = vmatpush.msra.mxu0 0.0
        %2568 = vmatpush.msra.mxu0 0.0
        %2569 = vmatpush.msra.mxu0 0.0
        %2570 = vmatpush.msra.mxu0 0.0
        %2571 = vmatpush.msra.mxu0 0.0
        %2572 = vmatpush.msra.mxu0 0.0
        %2573 = vmatpush.msra.mxu0 0.0
        %2574 = vmatpush.msra.mxu0 %v2542
        %2575 = vmatpush.msra.mxu0 %v2539
        %2576 = vmatmul.f32.gmra.mxu0 %v2544
        %v2577 = vpop.f32.mrf.mxu0
        %v2578 = vadd.f32 0.0, %v2577
        %2579 = vmatmul.f32.gmra.mxu0 %v2546
        %v2580 = vpop.f32.mrf.mxu0
        %v2581 = vadd.f32 0.0, %v2580
        %2582 = vmatmul.f32.gmra.mxu0 %v2548
        %v2583 = vpop.f32.mrf.mxu0
        %v2584 = vadd.f32 0.0, %v2583
        %2585 = vmatmul.f32.gmra.mxu0 %v2550
        %v2586 = vpop.f32.mrf.mxu0
        %v2587 = vadd.f32 0.0, %v2586
        %2588 = vmatmul.f32.gmra.mxu0 %v2552
        %v2589 = vpop.f32.mrf.mxu0
        %v2590 = vadd.f32 0.0, %v2589
        %2591 = vmatmul.f32.gmra.mxu0 %v2554
        %v2592 = vpop.f32.mrf.mxu0
        %v2593 = vadd.f32 0.0, %v2592
        %2594 = vmatmul.f32.gmra.mxu0 %v2556
        %v2595 = vpop.f32.mrf.mxu0
        %v2596 = vadd.f32 0.0, %v2595
        %2597 = vmatmul.f32.gmra.mxu0 %v2558
        %v2598 = vpop.f32.mrf.mxu0
        %v2599 = vadd.f32 0.0, %v2598
        %2600 = vdwg.mxu0
        %s2601 = sld [smem:[#allocation2 + $0x2]]
        %s2602 = smax.f32 %s2601, 0.1
        %s2603 = smin.f32 %s2602, 5.0
        %v2604 = vstv %s2603
        %v2605 = vrcp.pop %v2604
        %v2606 = vmul.f32 %v2604, %v2605
        %v2607 = vsub.f32 1.0, %v2606
        %v2608 = vmul.f32 %v2605, %v2607
        %v2609 = vadd.f32 %v2605, %v2608
        %vm2610 = vweird.f32 %v2604
        %vm2611 = vweird.f32 %v2605
        %vm2612 = vmor %vm2610, %vm2611
        %v2613 = vsel %vm2612, %v2605, %v2609
        %v2614 = vand.u32 2147483647, %v2604
        %vm2615 = vcmp.eq.f32.partialorder %v2614, 8.507059e+37
        %v2616 = vand.u32 %v2604, 2147483648
        %v2617 = vor.u32 1.1754944e-38, %v2616
        %v2618 = vsel %vm2615, %v2617, %v2613
        %v2619 = vmul.f32 %v1738, %v2618
        %v2620 = vmul.f32 %v1741, %v2618
        %v2621 = vmul.f32 %v1744, %v2618
        %v2622 = vmul.f32 %v1747, %v2618
        %v2623 = vmul.f32 %v1750, %v2618
        %v2624 = vmul.f32 %v1753, %v2618
        %v2625 = vmul.f32 %v1756, %v2618
        %v2626 = vmul.f32 %v1759, %v2618
        %vm2627 = vcmask 392448
        %v2628 = vsel %vm2627, %v2619, -inf
        %2629 = vmax.xlane.f32.xlu0 %v2628
        %v2630 = vpop.xlane.xlu0 %2629
        %v2631 = vsel %vm2627, %v2620, -inf
        %2632 = vmax.xlane.f32.xlu0 %v2631
        %v2633 = vpop.xlane.xlu0 %2632
        %v2634 = vsel %vm2627, %v2621, -inf
        %2635 = vmax.xlane.f32.xlu0 %v2634
        %v2636 = vpop.xlane.xlu0 %2635
        %v2637 = vsel %vm2627, %v2622, -inf
        %2638 = vmax.xlane.f32.xlu0 %v2637
        %v2639 = vpop.xlane.xlu0 %2638
        %v2640 = vsel %vm2627, %v2623, -inf
        %2641 = vmax.xlane.f32.xlu0 %v2640
        %v2642 = vpop.xlane.xlu0 %2641
        %v2643 = vsel %vm2627, %v2624, -inf
        %2644 = vmax.xlane.f32.xlu0 %v2643
        %v2645 = vpop.xlane.xlu0 %2644
        %v2646 = vsel %vm2627, %v2625, -inf
        %2647 = vmax.xlane.f32.xlu0 %v2646
        %v2648 = vpop.xlane.xlu0 %2647
        %v2649 = vsel %vm2627, %v2626, -inf
        %2650 = vmax.xlane.f32.xlu0 %v2649
        %v2651 = vpop.xlane.xlu0 %2650
        %v2652 = vsub.f32 %v2619, %v2630
        %v2653 = vsub.f32 %v2620, %v2633
        %v2654 = vsub.f32 %v2621, %v2636
        %v2655 = vsub.f32 %v2622, %v2639
        %v2656 = vsub.f32 %v2623, %v2642
        %v2657 = vsub.f32 %v2624, %v2645
        %v2658 = vsub.f32 %v2625, %v2648
        %v2659 = vsub.f32 %v2626, %v2651
        %v2660 = vmul.f32 %v2652, 1.442695
        %v2661 = vpow.pop %v2660
        %v2662 = vmul.f32 %v2653, 1.442695
        %v2663 = vpow.pop %v2662
        %v2664 = vmul.f32 %v2654, 1.442695
        %v2665 = vpow.pop %v2664
        %v2666 = vmul.f32 %v2655, 1.442695
        %v2667 = vpow.pop %v2666
        %v2668 = vmul.f32 %v2656, 1.442695
        %v2669 = vpow.pop %v2668
        %v2670 = vmul.f32 %v2657, 1.442695
        %v2671 = vpow.pop %v2670
        %v2672 = vmul.f32 %v2658, 1.442695
        %v2673 = vpow.pop %v2672
        %v2674 = vmul.f32 %v2659, 1.442695
        %v2675 = vpow.pop %v2674
        %2684 = vrot.lane.b32.xlu0 %v2661, 96
        %v2685 = vpop.permute.xlu0 %2684
        %2686 = vrot.lane.b32.xlu0 %v2663, 96
        %v2687 = vpop.permute.xlu0 %2686
        %2688 = vrot.lane.b32.xlu0 %v2665, 96
        %v2689 = vpop.permute.xlu0 %2688
        %2690 = vrot.lane.b32.xlu0 %v2667, 96
        %v2691 = vpop.permute.xlu0 %2690
        %2692 = vrot.lane.b32.xlu0 %v2669, 96
        %v2693 = vpop.permute.xlu0 %2692
        %2694 = vrot.lane.b32.xlu0 %v2671, 96
        %v2695 = vpop.permute.xlu0 %2694
        %2696 = vrot.lane.b32.xlu0 %v2673, 96
        %v2697 = vpop.permute.xlu0 %2696
        %2698 = vrot.lane.b32.xlu0 %v2675, 96
        %v2699 = vpop.permute.xlu0 %2698
        %v2708 = vsel %vm1800, %v2685, 0.0
        %2709 = vadd.xlane.f32.xlu0 %v2708
        %v2710 = vpop.xlane.xlu0 %2709
        %v2711 = vsel %vm1800, %v2687, 0.0
        %2712 = vadd.xlane.f32.xlu0 %v2711
        %v2713 = vpop.xlane.xlu0 %2712
        %v2714 = vsel %vm1800, %v2689, 0.0
        %2715 = vadd.xlane.f32.xlu0 %v2714
        %v2716 = vpop.xlane.xlu0 %2715
        %v2717 = vsel %vm1800, %v2691, 0.0
        %2718 = vadd.xlane.f32.xlu0 %v2717
        %v2719 = vpop.xlane.xlu0 %2718
        %v2720 = vsel %vm1800, %v2693, 0.0
        %2721 = vadd.xlane.f32.xlu0 %v2720
        %v2722 = vpop.xlane.xlu0 %2721
        %v2723 = vsel %vm1800, %v2695, 0.0
        %2724 = vadd.xlane.f32.xlu0 %v2723
        %v2725 = vpop.xlane.xlu0 %2724
        %v2726 = vsel %vm1800, %v2697, 0.0
        %2727 = vadd.xlane.f32.xlu0 %v2726
        %v2728 = vpop.xlane.xlu0 %2727
        %v2729 = vsel %vm1800, %v2699, 0.0
        %2730 = vadd.xlane.f32.xlu0 %v2729
        %v2731 = vpop.xlane.xlu0 %2730
        %v2732 = vrcp.pop %v2710
        %v2733 = vrcp.pop %v2713
        %v2734 = vrcp.pop %v2716
        %v2735 = vrcp.pop %v2719
        %v2736 = vrcp.pop %v2722
        %v2737 = vrcp.pop %v2725
        %v2738 = vrcp.pop %v2728
        %v2739 = vrcp.pop %v2731
        %v2740 = vmul.f32 %v2661, %v2732
        %v2741 = vmul.f32 %v2663, %v2733
        %v2742 = vmul.f32 %v2665, %v2734
        %v2743 = vmul.f32 %v2667, %v2735
        %v2744 = vmul.f32 %v2669, %v2736
        %v2745 = vmul.f32 %v2671, %v2737
        %v2746 = vmul.f32 %v2673, %v2738
        %v2747 = vmul.f32 %v2675, %v2739
        %2748 = vrot.lane.b32.xlu0 %v1761, 32
        %v2749 = vpop.permute.xlu0 %2748
        %2750 = vrot.lane.b32.xlu0 %v1762, 32
        %v2751 = vpop.permute.xlu0 %2750
        %2752 = vrot.lane.b32.xlu0 %v1763, 32
        %v2753 = vpop.permute.xlu0 %2752
        %2754 = vrot.lane.b32.xlu0 %v1764, 32
        %v2755 = vpop.permute.xlu0 %2754
        %2756 = vrot.lane.b32.xlu0 %v1765, 32
        %v2757 = vpop.permute.xlu0 %2756
        %2758 = vrot.lane.b32.xlu0 %v1766, 32
        %v2759 = vpop.permute.xlu0 %2758
        %2760 = vrot.lane.b32.xlu0 %v1767, 32
        %v2761 = vpop.permute.xlu0 %2760
        %2762 = vrot.lane.b32.xlu0 %v1768, 32
        %v2763 = vpop.permute.xlu0 %2762
        %v2772 = vmul.f32 %v2740, %v2749
        %v2773 = vmul.f32 %v2741, %v2751
        %v2774 = vmul.f32 %v2742, %v2753
        %v2775 = vmul.f32 %v2743, %v2755
        %v2776 = vmul.f32 %v2744, %v2757
        %v2777 = vmul.f32 %v2745, %v2759
        %v2778 = vmul.f32 %v2746, %v2761
        %v2779 = vmul.f32 %v2747, %v2763
        %2788 = vrot.lane.b32.xlu0 %v2772, 96
        %v2789 = vpop.permute.xlu0 %2788
        %2790 = vrot.lane.b32.xlu0 %v2773, 96
        %v2791 = vpop.permute.xlu0 %2790
        %2792 = vrot.lane.b32.xlu0 %v2774, 96
        %v2793 = vpop.permute.xlu0 %2792
        %2794 = vrot.lane.b32.xlu0 %v2775, 96
        %v2795 = vpop.permute.xlu0 %2794
        %2796 = vrot.lane.b32.xlu0 %v2776, 96
        %v2797 = vpop.permute.xlu0 %2796
        %2798 = vrot.lane.b32.xlu0 %v2777, 96
        %v2799 = vpop.permute.xlu0 %2798
        %2800 = vrot.lane.b32.xlu0 %v2778, 96
        %v2801 = vpop.permute.xlu0 %2800
        %2802 = vrot.lane.b32.xlu0 %v2779, 96
        %v2803 = vpop.permute.xlu0 %2802
        %2812 = vxpose.xlu0.b32.start [1/16] %v2789, 128
        %2813 = vxpose.xlu0.b32.cont [2/16] %v2791, 128
        %2814 = vxpose.xlu0.b32.cont [3/16] %v2793, 128
        %2815 = vxpose.xlu0.b32.cont [4/16] %v2795, 128
        %2816 = vxpose.xlu0.b32.cont [5/16] %v2797, 128
        %2817 = vxpose.xlu0.b32.cont [6/16] %v2799, 128
        %2818 = vxpose.xlu0.b32.cont [7/16] %v2801, 128
        %2819 = vxpose.xlu0.b32.cont [8/16] %v2803, 128
        %2820 = vxpose.xlu0.b32.cont [9/16] 0.0, 128
        %2821 = vxpose.xlu0.b32.cont [10/16] 0.0, 128
        %2822 = vxpose.xlu0.b32.cont [11/16] 0.0, 128
        %2823 = vxpose.xlu0.b32.cont [12/16] 0.0, 128
        %2824 = vxpose.xlu0.b32.cont [13/16] 0.0, 128
        %2825 = vxpose.xlu0.b32.cont [14/16] 0.0, 128
        %2826 = vxpose.xlu0.b32.cont [15/16] 0.0, 128
        %2827 = vxpose.xlu0.b32.end [16/16] 0.0, 128
        %v2828 = vpop.trf.xlu0
        %v2829 = vpop.trf.xlu0
        %v2830 = vpop.trf.xlu0
        %v2831 = vpop.trf.xlu0
        %v2832 = vpop.trf.xlu0
        %v2833 = vpop.trf.xlu0
        %v2834 = vpop.trf.xlu0
        %v2835 = vpop.trf.xlu0
        %v2836 = vpop.trf.xlu0
        %v2837 = vpop.trf.xlu0
        %v2838 = vpop.trf.xlu0
        %v2839 = vpop.trf.xlu0
        %v2840 = vpop.trf.xlu0
        %v2841 = vpop.trf.xlu0
        %v2842 = vpop.trf.xlu0
        %v2843 = vpop.trf.xlu0
        %2844 = vrot.lane.b32.xlu0 %v1665, 80
        %v2845 = vpop.permute.xlu0 %2844
        %2846 = vrot.lane.b32.xlu0 %v1668, 80
        %v2847 = vpop.permute.xlu0 %2846
        %2848 = vrot.lane.b32.xlu0 %v1671, 80
        %v2849 = vpop.permute.xlu0 %2848
        %2850 = vrot.lane.b32.xlu0 %v1674, 80
        %v2851 = vpop.permute.xlu0 %2850
        %2852 = vrot.lane.b32.xlu0 %v1677, 80
        %v2853 = vpop.permute.xlu0 %2852
        %2854 = vrot.lane.b32.xlu0 %v1680, 80
        %v2855 = vpop.permute.xlu0 %2854
        %2856 = vrot.lane.b32.xlu0 %v1683, 80
        %v2857 = vpop.permute.xlu0 %2856
        %2858 = vrot.lane.b32.xlu0 %v1686, 80
        %v2859 = vpop.permute.xlu0 %2858
        %v2869 = vsel %vm1459, %v2828, 0
        %v2872 = vsel %vm1459, %v2829, 0
        %2874 = vmatpush.msra.mxu0 0.0
        %2875 = vmatpush.msra.mxu0 0.0
        %2876 = vmatpush.msra.mxu0 0.0
        %2877 = vmatpush.msra.mxu0 0.0
        %2878 = vmatpush.msra.mxu0 0.0
        %2879 = vmatpush.msra.mxu0 0.0
        %2880 = vmatpush.msra.mxu0 0.0
        %2881 = vmatpush.msra.mxu0 0.0
        %2882 = vmatpush.msra.mxu0 %v2859
        %2883 = vmatpush.msra.mxu0 %v2857
        %2884 = vmatpush.msra.mxu0 %v2855
        %2885 = vmatpush.msra.mxu0 %v2853
        %2886 = vmatpush.msra.mxu0 %v2851
        %2887 = vmatpush.msra.mxu0 %v2849
        %2888 = vmatpush.msra.mxu0 %v2847
        %2889 = vmatpush.msra.mxu0 %v2845
        %2890 = vmatmul.f32.gmra.mxu0 %v2869
        %v2891 = vpop.f32.mrf.mxu0
        %v2892 = vadd.f32 0.0, %v2891
        %2893 = vmatmul.f32.gmra.mxu0 %v2872
        %v2894 = vpop.f32.mrf.mxu0
        %v2895 = vadd.f32 0.0, %v2894
        %2896 = vdwg.mxu0
        %v2897 = vsel %vm1982, %v2892, 0.0
        %v2898 = vsel %vm1982, %v2895, 0.0
        %v2899 = vadd.f32 %v2897, %v2898
        %2900 = vadd.xlane.f32.xlu0 %v2899
        %v2901 = vpop.xlane.xlu0 %2900
        %v2902 = vrot.slane %v2901, 4
        %v2903 = vadd.f32 %v2901, %v2902
        %v2904 = vrot.slane %v2903, 2
        %v2905 = vadd.f32 %v2903, %v2904
        %v2906 = vrot.slane %v2905, 1
        %v2907 = vadd.f32 %v2905, %v2906
        %s2908 = vtos %v2907
        %v2909 = vrcp.pop 128.0
        %v2910 = vmul.f32 128.0, %v2909
        %v2911 = vsub.f32 1.0, %v2910
        %v2912 = vmul.f32 %v2909, %v2911
        %v2913 = vadd.f32 %v2909, %v2912
        %vm2914 = vweird.f32 %v2909
        %v2915 = vsel %vm2914, %v2909, %v2913
        %s2916 = vtos %v2915
        %s2917 = smul.f32 %s2908, %s2916
        %v2918 = vstv %s2917
        %v2919 = vsub.f32 %v2892, %v2918
        %v2920 = vsub.f32 %v2895, %v2918
        %v2921 = vmul.f32 %v2919, %v2919
        %v2922 = vmul.f32 %v2920, %v2920
        %v2923 = vsel %vm1982, %v2921, 0.0
        %v2924 = vsel %vm1982, %v2922, 0.0
        %v2925 = vadd.f32 %v2923, %v2924
        %2926 = vadd.xlane.f32.xlu0 %v2925
        %v2927 = vpop.xlane.xlu0 %2926
        %v2928 = vrot.slane %v2927, 4
        %v2929 = vadd.f32 %v2927, %v2928
        %v2930 = vrot.slane %v2929, 2
        %v2931 = vadd.f32 %v2929, %v2930
        %v2932 = vrot.slane %v2931, 1
        %v2933 = vadd.f32 %v2931, %v2932
        %s2934 = vtos %v2933
        %v2935 = vrcp.pop 128.0
        %v2936 = vmul.f32 128.0, %v2935
        %v2937 = vsub.f32 1.0, %v2936
        %v2938 = vmul.f32 %v2935, %v2937
        %v2939 = vadd.f32 %v2935, %v2938
        %vm2940 = vweird.f32 %v2935
        %v2941 = vsel %vm2940, %v2935, %v2939
        %s2942 = vtos %v2941
        %s2943 = smul.f32 %s2934, %s2942
        %s2944 = sadd.f32 %s2943, 1e-05
        %v2945 = vstv %s2944
        %v2946 = vrsqrt.pop %v2945
        %v2947 = vmul.f32 %v2946, %v2945
        %v2948 = vmul.f32 %v2947, %v2946
        %v2949 = vmul.f32 0.5, %v2948
        %v2950 = vsub.f32 1.5, %v2949
        %v2951 = vmul.f32 %v2946, %v2950
        %vm2952 = vweird.f32 %v2945
        %vm2953 = vweird.f32 %v2946
        %vm2954 = vmor %vm2952, %vm2953
        %v2955 = vsel %vm2954, %v2946, %v2951
        %s2956 = vtos %v2955
        %v2957 = vstv %s2956
        %v2958 = vmul.f32 %v2919, %v2957
        %v2959 = vmul.f32 %v2920, %v2957
        %v2960 = vmul.f32 %v2958, %v1769
        %v2961 = vmul.f32 %v2959, %v1770
        %v2962 = vadd.f32 %v2960, %v1771
        %v2963 = vadd.f32 %v2961, %v1772
        %v2965 = vsel %vm1982, %v2962, 0
        %v2968 = vsel %vm1982, %v2963, 0
        %2970 = vmatpush.msra.mxu0 0.0
        %2971 = vmatpush.msra.mxu0 0.0
        %2972 = vmatpush.msra.mxu0 0.0
        %2973 = vmatpush.msra.mxu0 0.0
        %2974 = vmatpush.msra.mxu0 0.0
        %2975 = vmatpush.msra.mxu0 0.0
        %2976 = vmatpush.msra.mxu0 0.0
        %2977 = vmatpush.msra.mxu0 0.0
        %2978 = vmatpush.msra.mxu0 0.0
        %2979 = vmatpush.msra.mxu0 0.0
        %2980 = vmatpush.msra.mxu0 0.0
        %2981 = vmatpush.msra.mxu0 0.0
        %2982 = vmatpush.msra.mxu0 0.0
        %2983 = vmatpush.msra.mxu0 0.0
        %2984 = vmatpush.msra.mxu0 0.0
        %2985 = vmatpush.msra.mxu0 %v1773
        %2986 = vmatmul.f32.gmra.mxu0 %v2965
        %v2987 = vpop.f32.mrf.mxu0
        %v2988 = vadd.f32 0.0, %v2987
        %2989 = vmatmul.f32.gmra.mxu0 %v2968
        %v2990 = vpop.f32.mrf.mxu0
        %v2991 = vadd.f32 0.0, %v2990
        %2992 = vdwg.mxu0
        %v2993 = vsel %vm1800, %v2789, 0
        %v2995 = vsel %vm1800, %v2791, 0
        %v2997 = vsel %vm1800, %v2793, 0
        %v2999 = vsel %vm1800, %v2795, 0
        %v3001 = vsel %vm1800, %v2797, 0
        %v3003 = vsel %vm1800, %v2799, 0
        %v3005 = vsel %vm1800, %v2801, 0
        %v3007 = vsel %vm1800, %v2803, 0
        %3009 = vmatpush.msra.mxu0 0.0
        %3010 = vmatpush.msra.mxu0 0.0
        %3011 = vmatpush.msra.mxu0 0.0
        %3012 = vmatpush.msra.mxu0 0.0
        %3013 = vmatpush.msra.mxu0 0.0
        %3014 = vmatpush.msra.mxu0 0.0
        %3015 = vmatpush.msra.mxu0 0.0
        %3016 = vmatpush.msra.mxu0 0.0
        %3017 = vmatpush.msra.mxu0 0.0
        %3018 = vmatpush.msra.mxu0 0.0
        %3019 = vmatpush.msra.mxu0 0.0
        %3020 = vmatpush.msra.mxu0 0.0
        %3021 = vmatpush.msra.mxu0 0.0
        %3022 = vmatpush.msra.mxu0 0.0
        %3023 = vmatpush.msra.mxu0 %v2991
        %3024 = vmatpush.msra.mxu0 %v2988
        %3025 = vmatmul.f32.gmra.mxu0 %v2993
        %v3026 = vpop.f32.mrf.mxu0
        %v3027 = vadd.f32 0.0, %v3026
        %3028 = vmatmul.f32.gmra.mxu0 %v2995
        %v3029 = vpop.f32.mrf.mxu0
        %v3030 = vadd.f32 0.0, %v3029
        %3031 = vmatmul.f32.gmra.mxu0 %v2997
        %v3032 = vpop.f32.mrf.mxu0
        %v3033 = vadd.f32 0.0, %v3032
        %3034 = vmatmul.f32.gmra.mxu0 %v2999
        %v3035 = vpop.f32.mrf.mxu0
        %v3036 = vadd.f32 0.0, %v3035
        %3037 = vmatmul.f32.gmra.mxu0 %v3001
        %v3038 = vpop.f32.mrf.mxu0
        %v3039 = vadd.f32 0.0, %v3038
        %3040 = vmatmul.f32.gmra.mxu0 %v3003
        %v3041 = vpop.f32.mrf.mxu0
        %v3042 = vadd.f32 0.0, %v3041
        %3043 = vmatmul.f32.gmra.mxu0 %v3005
        %v3044 = vpop.f32.mrf.mxu0
        %v3045 = vadd.f32 0.0, %v3044
        %3046 = vmatmul.f32.gmra.mxu0 %v3007
        %v3047 = vpop.f32.mrf.mxu0
        %v3048 = vadd.f32 0.0, %v3047
        %3049 = vdwg.mxu0
        %s3050 = sld [smem:[#allocation2 + $0x3]]
        %s3051 = smax.f32 %s3050, 0.1
        %s3052 = smin.f32 %s3051, 5.0
        %v3053 = vstv %s3052
        %v3054 = vrcp.pop %v3053
        %v3055 = vmul.f32 %v3053, %v3054
        %v3056 = vsub.f32 1.0, %v3055
        %v3057 = vmul.f32 %v3054, %v3056
        %v3058 = vadd.f32 %v3054, %v3057
        %vm3059 = vweird.f32 %v3053
        %vm3060 = vweird.f32 %v3054
        %vm3061 = vmor %vm3059, %vm3060
        %v3062 = vsel %vm3061, %v3054, %v3058
        %v3063 = vand.u32 2147483647, %v3053
        %vm3064 = vcmp.eq.f32.partialorder %v3063, 8.507059e+37
        %v3065 = vand.u32 %v3053, 2147483648
        %v3066 = vor.u32 1.1754944e-38, %v3065
        %v3067 = vsel %vm3064, %v3066, %v3062
        %v3068 = vmul.f32 %v1738, %v3067
        %v3069 = vmul.f32 %v1741, %v3067
        %v3070 = vmul.f32 %v1744, %v3067
        %v3071 = vmul.f32 %v1747, %v3067
        %v3072 = vmul.f32 %v1750, %v3067
        %v3073 = vmul.f32 %v1753, %v3067
        %v3074 = vmul.f32 %v1756, %v3067
        %v3075 = vmul.f32 %v1759, %v3067
        %vm3076 = vcmask 523648
        %v3077 = vsel %vm3076, %v3068, -inf
        %3078 = vmax.xlane.f32.xlu0 %v3077
        %v3079 = vpop.xlane.xlu0 %3078
        %v3080 = vsel %vm3076, %v3069, -inf
        %3081 = vmax.xlane.f32.xlu0 %v3080
        %v3082 = vpop.xlane.xlu0 %3081
        %v3083 = vsel %vm3076, %v3070, -inf
        %3084 = vmax.xlane.f32.xlu0 %v3083
        %v3085 = vpop.xlane.xlu0 %3084
        %v3086 = vsel %vm3076, %v3071, -inf
        %3087 = vmax.xlane.f32.xlu0 %v3086
        %v3088 = vpop.xlane.xlu0 %3087
        %v3089 = vsel %vm3076, %v3072, -inf
        %3090 = vmax.xlane.f32.xlu0 %v3089
        %v3091 = vpop.xlane.xlu0 %3090
        %v3092 = vsel %vm3076, %v3073, -inf
        %3093 = vmax.xlane.f32.xlu0 %v3092
        %v3094 = vpop.xlane.xlu0 %3093
        %v3095 = vsel %vm3076, %v3074, -inf
        %3096 = vmax.xlane.f32.xlu0 %v3095
        %v3097 = vpop.xlane.xlu0 %3096
        %v3098 = vsel %vm3076, %v3075, -inf
        %3099 = vmax.xlane.f32.xlu0 %v3098
        %v3100 = vpop.xlane.xlu0 %3099
        %v3101 = vsub.f32 %v3068, %v3079
        %v3102 = vsub.f32 %v3069, %v3082
        %v3103 = vsub.f32 %v3070, %v3085
        %v3104 = vsub.f32 %v3071, %v3088
        %v3105 = vsub.f32 %v3072, %v3091
        %v3106 = vsub.f32 %v3073, %v3094
        %v3107 = vsub.f32 %v3074, %v3097
        %v3108 = vsub.f32 %v3075, %v3100
        %v3109 = vmul.f32 %v3101, 1.442695
        %v3110 = vpow.pop %v3109
        %v3111 = vmul.f32 %v3102, 1.442695
        %v3112 = vpow.pop %v3111
        %v3113 = vmul.f32 %v3103, 1.442695
        %v3114 = vpow.pop %v3113
        %v3115 = vmul.f32 %v3104, 1.442695
        %v3116 = vpow.pop %v3115
        %v3117 = vmul.f32 %v3105, 1.442695
        %v3118 = vpow.pop %v3117
        %v3119 = vmul.f32 %v3106, 1.442695
        %v3120 = vpow.pop %v3119
        %v3121 = vmul.f32 %v3107, 1.442695
        %v3122 = vpow.pop %v3121
        %v3123 = vmul.f32 %v3108, 1.442695
        %v3124 = vpow.pop %v3123
        %3133 = vrot.lane.b32.xlu0 %v3110, 80
        %v3134 = vpop.permute.xlu0 %3133
        %3135 = vrot.lane.b32.xlu0 %v3112, 80
        %v3136 = vpop.permute.xlu0 %3135
        %3137 = vrot.lane.b32.xlu0 %v3114, 80
        %v3138 = vpop.permute.xlu0 %3137
        %3139 = vrot.lane.b32.xlu0 %v3116, 80
        %v3140 = vpop.permute.xlu0 %3139
        %3141 = vrot.lane.b32.xlu0 %v3118, 80
        %v3142 = vpop.permute.xlu0 %3141
        %3143 = vrot.lane.b32.xlu0 %v3120, 80
        %v3144 = vpop.permute.xlu0 %3143
        %3145 = vrot.lane.b32.xlu0 %v3122, 80
        %v3146 = vpop.permute.xlu0 %3145
        %3147 = vrot.lane.b32.xlu0 %v3124, 80
        %v3148 = vpop.permute.xlu0 %3147
        %v3157 = vsel %vm1800, %v3134, 0.0
        %3158 = vadd.xlane.f32.xlu0 %v3157
        %v3159 = vpop.xlane.xlu0 %3158
        %v3160 = vsel %vm1800, %v3136, 0.0
        %3161 = vadd.xlane.f32.xlu0 %v3160
        %v3162 = vpop.xlane.xlu0 %3161
        %v3163 = vsel %vm1800, %v3138, 0.0
        %3164 = vadd.xlane.f32.xlu0 %v3163
        %v3165 = vpop.xlane.xlu0 %3164
        %v3166 = vsel %vm1800, %v3140, 0.0
        %3167 = vadd.xlane.f32.xlu0 %v3166
        %v3168 = vpop.xlane.xlu0 %3167
        %v3169 = vsel %vm1800, %v3142, 0.0
        %3170 = vadd.xlane.f32.xlu0 %v3169
        %v3171 = vpop.xlane.xlu0 %3170
        %v3172 = vsel %vm1800, %v3144, 0.0
        %3173 = vadd.xlane.f32.xlu0 %v3172
        %v3174 = vpop.xlane.xlu0 %3173
        %v3175 = vsel %vm1800, %v3146, 0.0
        %3176 = vadd.xlane.f32.xlu0 %v3175
        %v3177 = vpop.xlane.xlu0 %3176
        %v3178 = vsel %vm1800, %v3148, 0.0
        %3179 = vadd.xlane.f32.xlu0 %v3178
        %v3180 = vpop.xlane.xlu0 %3179
        %v3181 = vrcp.pop %v3159
        %v3182 = vrcp.pop %v3162
        %v3183 = vrcp.pop %v3165
        %v3184 = vrcp.pop %v3168
        %v3185 = vrcp.pop %v3171
        %v3186 = vrcp.pop %v3174
        %v3187 = vrcp.pop %v3177
        %v3188 = vrcp.pop %v3180
        %v3189 = vmul.f32 %v3110, %v3181
        %v3190 = vmul.f32 %v3112, %v3182
        %v3191 = vmul.f32 %v3114, %v3183
        %v3192 = vmul.f32 %v3116, %v3184
        %v3193 = vmul.f32 %v3118, %v3185
        %v3194 = vmul.f32 %v3120, %v3186
        %v3195 = vmul.f32 %v3122, %v3187
        %v3196 = vmul.f32 %v3124, %v3188
        %3197 = vrot.lane.b32.xlu0 %v1761, 48
        %v3198 = vpop.permute.xlu0 %3197
        %3199 = vrot.lane.b32.xlu0 %v1762, 48
        %v3200 = vpop.permute.xlu0 %3199
        %3201 = vrot.lane.b32.xlu0 %v1763, 48
        %v3202 = vpop.permute.xlu0 %3201
        %3203 = vrot.lane.b32.xlu0 %v1764, 48
        %v3204 = vpop.permute.xlu0 %3203
        %3205 = vrot.lane.b32.xlu0 %v1765, 48
        %v3206 = vpop.permute.xlu0 %3205
        %3207 = vrot.lane.b32.xlu0 %v1766, 48
        %v3208 = vpop.permute.xlu0 %3207
        %3209 = vrot.lane.b32.xlu0 %v1767, 48
        %v3210 = vpop.permute.xlu0 %3209
        %3211 = vrot.lane.b32.xlu0 %v1768, 48
        %v3212 = vpop.permute.xlu0 %3211
        %v3221 = vmul.f32 %v3189, %v3198
        %v3222 = vmul.f32 %v3190, %v3200
        %v3223 = vmul.f32 %v3191, %v3202
        %v3224 = vmul.f32 %v3192, %v3204
        %v3225 = vmul.f32 %v3193, %v3206
        %v3226 = vmul.f32 %v3194, %v3208
        %v3227 = vmul.f32 %v3195, %v3210
        %v3228 = vmul.f32 %v3196, %v3212
        %3237 = vrot.lane.b32.xlu0 %v3221, 80
        %v3238 = vpop.permute.xlu0 %3237
        %3239 = vrot.lane.b32.xlu0 %v3222, 80
        %v3240 = vpop.permute.xlu0 %3239
        %3241 = vrot.lane.b32.xlu0 %v3223, 80
        %v3242 = vpop.permute.xlu0 %3241
        %3243 = vrot.lane.b32.xlu0 %v3224, 80
        %v3244 = vpop.permute.xlu0 %3243
        %3245 = vrot.lane.b32.xlu0 %v3225, 80
        %v3246 = vpop.permute.xlu0 %3245
        %3247 = vrot.lane.b32.xlu0 %v3226, 80
        %v3248 = vpop.permute.xlu0 %3247
        %3249 = vrot.lane.b32.xlu0 %v3227, 80
        %v3250 = vpop.permute.xlu0 %3249
        %3251 = vrot.lane.b32.xlu0 %v3228, 80
        %v3252 = vpop.permute.xlu0 %3251
        %3261 = vxpose.xlu0.b32.start [1/16] %v3238, 128
        %3262 = vxpose.xlu0.b32.cont [2/16] %v3240, 128
        %3263 = vxpose.xlu0.b32.cont [3/16] %v3242, 128
        %3264 = vxpose.xlu0.b32.cont [4/16] %v3244, 128
        %3265 = vxpose.xlu0.b32.cont [5/16] %v3246, 128
        %3266 = vxpose.xlu0.b32.cont [6/16] %v3248, 128
        %3267 = vxpose.xlu0.b32.cont [7/16] %v3250, 128
        %3268 = vxpose.xlu0.b32.cont [8/16] %v3252, 128
        %3269 = vxpose.xlu0.b32.cont [9/16] 0.0, 128
        %3270 = vxpose.xlu0.b32.cont [10/16] 0.0, 128
        %3271 = vxpose.xlu0.b32.cont [11/16] 0.0, 128
        %3272 = vxpose.xlu0.b32.cont [12/16] 0.0, 128
        %3273 = vxpose.xlu0.b32.cont [13/16] 0.0, 128
        %3274 = vxpose.xlu0.b32.cont [14/16] 0.0, 128
        %3275 = vxpose.xlu0.b32.cont [15/16] 0.0, 128
        %3276 = vxpose.xlu0.b32.end [16/16] 0.0, 128
        %v3277 = vpop.trf.xlu0
        %v3278 = vpop.trf.xlu0
        %v3279 = vpop.trf.xlu0
        %v3280 = vpop.trf.xlu0
        %v3281 = vpop.trf.xlu0
        %v3282 = vpop.trf.xlu0
        %v3283 = vpop.trf.xlu0
        %v3284 = vpop.trf.xlu0
        %v3285 = vpop.trf.xlu0
        %v3286 = vpop.trf.xlu0
        %v3287 = vpop.trf.xlu0
        %v3288 = vpop.trf.xlu0
        %v3289 = vpop.trf.xlu0
        %v3290 = vpop.trf.xlu0
        %v3291 = vpop.trf.xlu0
        %v3292 = vpop.trf.xlu0
        %3293 = vrot.lane.b32.xlu0 %v1665, 72
        %v3294 = vpop.permute.xlu0 %3293
        %3295 = vrot.lane.b32.xlu0 %v1668, 72
        %v3296 = vpop.permute.xlu0 %3295
        %3297 = vrot.lane.b32.xlu0 %v1671, 72
        %v3298 = vpop.permute.xlu0 %3297
        %3299 = vrot.lane.b32.xlu0 %v1674, 72
        %v3300 = vpop.permute.xlu0 %3299
        %3301 = vrot.lane.b32.xlu0 %v1677, 72
        %v3302 = vpop.permute.xlu0 %3301
        %3303 = vrot.lane.b32.xlu0 %v1680, 72
        %v3304 = vpop.permute.xlu0 %3303
        %3305 = vrot.lane.b32.xlu0 %v1683, 72
        %v3306 = vpop.permute.xlu0 %3305
        %3307 = vrot.lane.b32.xlu0 %v1686, 72
        %v3308 = vpop.permute.xlu0 %3307
        %v3318 = vsel %vm1459, %v3277, 0
        %v3321 = vsel %vm1459, %v3278, 0
        %3323 = vmatpush.msra.mxu0 0.0
        %3324 = vmatpush.msra.mxu0 0.0
        %3325 = vmatpush.msra.mxu0 0.0
        %3326 = vmatpush.msra.mxu0 0.0
        %3327 = vmatpush.msra.mxu0 0.0
        %3328 = vmatpush.msra.mxu0 0.0
        %3329 = vmatpush.msra.mxu0 0.0
        %3330 = vmatpush.msra.mxu0 0.0
        %3331 = vmatpush.msra.mxu0 %v3308
        %3332 = vmatpush.msra.mxu0 %v3306
        %3333 = vmatpush.msra.mxu0 %v3304
        %3334 = vmatpush.msra.mxu0 %v3302
        %3335 = vmatpush.msra.mxu0 %v3300
        %3336 = vmatpush.msra.mxu0 %v3298
        %3337 = vmatpush.msra.mxu0 %v3296
        %3338 = vmatpush.msra.mxu0 %v3294
        %3339 = vmatmul.f32.gmra.mxu0 %v3318
        %v3340 = vpop.f32.mrf.mxu0
        %v3341 = vadd.f32 0.0, %v3340
        %3342 = vmatmul.f32.gmra.mxu0 %v3321
        %v3343 = vpop.f32.mrf.mxu0
        %v3344 = vadd.f32 0.0, %v3343
        %3345 = vdwg.mxu0
        %v3346 = vsel %vm1982, %v3341, 0.0
        %v3347 = vsel %vm1982, %v3344, 0.0
        %v3348 = vadd.f32 %v3346, %v3347
        %3349 = vadd.xlane.f32.xlu0 %v3348
        %v3350 = vpop.xlane.xlu0 %3349
        %v3351 = vrot.slane %v3350, 4
        %v3352 = vadd.f32 %v3350, %v3351
        %v3353 = vrot.slane %v3352, 2
        %v3354 = vadd.f32 %v3352, %v3353
        %v3355 = vrot.slane %v3354, 1
        %v3356 = vadd.f32 %v3354, %v3355
        %s3357 = vtos %v3356
        %v3358 = vrcp.pop 128.0
        %v3359 = vmul.f32 128.0, %v3358
        %v3360 = vsub.f32 1.0, %v3359
        %v3361 = vmul.f32 %v3358, %v3360
        %v3362 = vadd.f32 %v3358, %v3361
        %vm3363 = vweird.f32 %v3358
        %v3364 = vsel %vm3363, %v3358, %v3362
        %s3365 = vtos %v3364
        %s3366 = smul.f32 %s3357, %s3365
        %v3367 = vstv %s3366
        %v3368 = vsub.f32 %v3341, %v3367
        %v3369 = vsub.f32 %v3344, %v3367
        %v3370 = vmul.f32 %v3368, %v3368
        %v3371 = vmul.f32 %v3369, %v3369
        %v3372 = vsel %vm1982, %v3370, 0.0
        %v3373 = vsel %vm1982, %v3371, 0.0
        %v3374 = vadd.f32 %v3372, %v3373
        %3375 = vadd.xlane.f32.xlu0 %v3374
        %v3376 = vpop.xlane.xlu0 %3375
        %v3377 = vrot.slane %v3376, 4
        %v3378 = vadd.f32 %v3376, %v3377
        %v3379 = vrot.slane %v3378, 2
        %v3380 = vadd.f32 %v3378, %v3379
        %v3381 = vrot.slane %v3380, 1
        %v3382 = vadd.f32 %v3380, %v3381
        %s3383 = vtos %v3382
        %v3384 = vrcp.pop 128.0
        %v3385 = vmul.f32 128.0, %v3384
        %v3386 = vsub.f32 1.0, %v3385
        %v3387 = vmul.f32 %v3384, %v3386
        %v3388 = vadd.f32 %v3384, %v3387
        %vm3389 = vweird.f32 %v3384
        %v3390 = vsel %vm3389, %v3384, %v3388
        %s3391 = vtos %v3390
        %s3392 = smul.f32 %s3383, %s3391
        %s3393 = sadd.f32 %s3392, 1e-05
        %v3394 = vstv %s3393
        %v3395 = vrsqrt.pop %v3394
        %v3396 = vmul.f32 %v3395, %v3394
        %v3397 = vmul.f32 %v3396, %v3395
        %v3398 = vmul.f32 0.5, %v3397
        %v3399 = vsub.f32 1.5, %v3398
        %v3400 = vmul.f32 %v3395, %v3399
        %vm3401 = vweird.f32 %v3394
        %vm3402 = vweird.f32 %v3395
        %vm3403 = vmor %vm3401, %vm3402
        %v3404 = vsel %vm3403, %v3395, %v3400
        %s3405 = vtos %v3404
        %v3406 = vstv %s3405
        %v3407 = vmul.f32 %v3368, %v3406
        %v3408 = vmul.f32 %v3369, %v3406
        %v3409 = vmul.f32 %v3407, %v1769
        %v3410 = vmul.f32 %v3408, %v1770
        %v3411 = vadd.f32 %v3409, %v1771
        %v3412 = vadd.f32 %v3410, %v1772
        %v3414 = vsel %vm1982, %v3411, 0
        %v3417 = vsel %vm1982, %v3412, 0
        %3419 = vmatpush.msra.mxu0 0.0
        %3420 = vmatpush.msra.mxu0 0.0
        %3421 = vmatpush.msra.mxu0 0.0
        %3422 = vmatpush.msra.mxu0 0.0
        %3423 = vmatpush.msra.mxu0 0.0
        %3424 = vmatpush.msra.mxu0 0.0
        %3425 = vmatpush.msra.mxu0 0.0
        %3426 = vmatpush.msra.mxu0 0.0
        %3427 = vmatpush.msra.mxu0 0.0
        %3428 = vmatpush.msra.mxu0 0.0
        %3429 = vmatpush.msra.mxu0 0.0
        %3430 = vmatpush.msra.mxu0 0.0
        %3431 = vmatpush.msra.mxu0 0.0
        %3432 = vmatpush.msra.mxu0 0.0
        %3433 = vmatpush.msra.mxu0 0.0
        %3434 = vmatpush.msra.mxu0 %v1773
        %3435 = vmatmul.f32.gmra.mxu0 %v3414
        %v3436 = vpop.f32.mrf.mxu0
        %v3437 = vadd.f32 0.0, %v3436
        %3438 = vmatmul.f32.gmra.mxu0 %v3417
        %v3439 = vpop.f32.mrf.mxu0
        %v3440 = vadd.f32 0.0, %v3439
        %3441 = vdwg.mxu0
        %v3442 = vsel %vm1800, %v3238, 0
        %v3444 = vsel %vm1800, %v3240, 0
        %v3446 = vsel %vm1800, %v3242, 0
        %v3448 = vsel %vm1800, %v3244, 0
        %v3450 = vsel %vm1800, %v3246, 0
        %v3452 = vsel %vm1800, %v3248, 0
        %v3454 = vsel %vm1800, %v3250, 0
        %v3456 = vsel %vm1800, %v3252, 0
        %3458 = vmatpush.msra.mxu0 0.0
        %3459 = vmatpush.msra.mxu0 0.0
        %3460 = vmatpush.msra.mxu0 0.0
        %3461 = vmatpush.msra.mxu0 0.0
        %3462 = vmatpush.msra.mxu0 0.0
        %3463 = vmatpush.msra.mxu0 0.0
        %3464 = vmatpush.msra.mxu0 0.0
        %3465 = vmatpush.msra.mxu0 0.0
        %3466 = vmatpush.msra.mxu0 0.0
        %3467 = vmatpush.msra.mxu0 0.0
        %3468 = vmatpush.msra.mxu0 0.0
        %3469 = vmatpush.msra.mxu0 0.0
        %3470 = vmatpush.msra.mxu0 0.0
        %3471 = vmatpush.msra.mxu0 0.0
        %3472 = vmatpush.msra.mxu0 %v3440
        %3473 = vmatpush.msra.mxu0 %v3437
        %3474 = vmatmul.f32.gmra.mxu0 %v3442
        %v3475 = vpop.f32.mrf.mxu0
        %v3476 = vadd.f32 0.0, %v3475
        %3477 = vmatmul.f32.gmra.mxu0 %v3444
        %v3478 = vpop.f32.mrf.mxu0
        %v3479 = vadd.f32 0.0, %v3478
        %3480 = vmatmul.f32.gmra.mxu0 %v3446
        %v3481 = vpop.f32.mrf.mxu0
        %v3482 = vadd.f32 0.0, %v3481
        %3483 = vmatmul.f32.gmra.mxu0 %v3448
        %v3484 = vpop.f32.mrf.mxu0
        %v3485 = vadd.f32 0.0, %v3484
        %3486 = vmatmul.f32.gmra.mxu0 %v3450
        %v3487 = vpop.f32.mrf.mxu0
        %v3488 = vadd.f32 0.0, %v3487
        %3489 = vmatmul.f32.gmra.mxu0 %v3452
        %v3490 = vpop.f32.mrf.mxu0
        %v3491 = vadd.f32 0.0, %v3490
        %3492 = vmatmul.f32.gmra.mxu0 %v3454
        %v3493 = vpop.f32.mrf.mxu0
        %v3494 = vadd.f32 0.0, %v3493
        %3495 = vmatmul.f32.gmra.mxu0 %v3456
        %v3496 = vpop.f32.mrf.mxu0
        %v3497 = vadd.f32 0.0, %v3496
        %3498 = vdwg.mxu0
        %3507 = vrot.lane.b32.xlu0 %v2578, 8
        %v3508 = vpop.permute.xlu0 %3507
        %3509 = vrot.lane.b32.xlu0 %v2581, 8
        %v3510 = vpop.permute.xlu0 %3509
        %3511 = vrot.lane.b32.xlu0 %v2584, 8
        %v3512 = vpop.permute.xlu0 %3511
        %3513 = vrot.lane.b32.xlu0 %v2587, 8
        %v3514 = vpop.permute.xlu0 %3513
        %3515 = vrot.lane.b32.xlu0 %v2590, 8
        %v3516 = vpop.permute.xlu0 %3515
        %3517 = vrot.lane.b32.xlu0 %v2593, 8
        %v3518 = vpop.permute.xlu0 %3517
        %3519 = vrot.lane.b32.xlu0 %v2596, 8
        %v3520 = vpop.permute.xlu0 %3519
        %3521 = vrot.lane.b32.xlu0 %v2599, 8
        %v3522 = vpop.permute.xlu0 %3521
        %3539 = vrot.lane.b32.xlu0 %v3027, 16
        %v3540 = vpop.permute.xlu0 %3539
        %3541 = vrot.lane.b32.xlu0 %v3030, 16
        %v3542 = vpop.permute.xlu0 %3541
        %3543 = vrot.lane.b32.xlu0 %v3033, 16
        %v3544 = vpop.permute.xlu0 %3543
        %3545 = vrot.lane.b32.xlu0 %v3036, 16
        %v3546 = vpop.permute.xlu0 %3545
        %3547 = vrot.lane.b32.xlu0 %v3039, 16
        %v3548 = vpop.permute.xlu0 %3547
        %3549 = vrot.lane.b32.xlu0 %v3042, 16
        %v3550 = vpop.permute.xlu0 %3549
        %3551 = vrot.lane.b32.xlu0 %v3045, 16
        %v3552 = vpop.permute.xlu0 %3551
        %3553 = vrot.lane.b32.xlu0 %v3048, 16
        %v3554 = vpop.permute.xlu0 %3553
        %3571 = vrot.lane.b32.xlu0 %v3476, 24
        %v3572 = vpop.permute.xlu0 %3571
        %3573 = vrot.lane.b32.xlu0 %v3479, 24
        %v3574 = vpop.permute.xlu0 %3573
        %3575 = vrot.lane.b32.xlu0 %v3482, 24
        %v3576 = vpop.permute.xlu0 %3575
        %3577 = vrot.lane.b32.xlu0 %v3485, 24
        %v3578 = vpop.permute.xlu0 %3577
        %3579 = vrot.lane.b32.xlu0 %v3488, 24
        %v3580 = vpop.permute.xlu0 %3579
        %3581 = vrot.lane.b32.xlu0 %v3491, 24
        %v3582 = vpop.permute.xlu0 %3581
        %3583 = vrot.lane.b32.xlu0 %v3494, 24
        %v3584 = vpop.permute.xlu0 %3583
        %3585 = vrot.lane.b32.xlu0 %v3497, 24
        %v3586 = vpop.permute.xlu0 %3585
        %v3595 = vsel %vm1982, %v2121, %v3508
        %v3596 = vsel %vm1982, %v2124, %v3510
        %v3597 = vsel %vm1982, %v2127, %v3512
        %v3598 = vsel %vm1982, %v2130, %v3514
        %v3599 = vsel %vm1982, %v2133, %v3516
        %v3600 = vsel %vm1982, %v2136, %v3518
        %v3601 = vsel %vm1982, %v2139, %v3520
        %v3602 = vsel %vm1982, %v2142, %v3522
        %v3603 = vsel %vm1800, %v3595, %v3540
        %v3604 = vsel %vm1800, %v3596, %v3542
        %v3605 = vsel %vm1800, %v3597, %v3544
        %v3606 = vsel %vm1800, %v3598, %v3546
        %v3607 = vsel %vm1800, %v3599, %v3548
        %v3608 = vsel %vm1800, %v3600, %v3550
        %v3609 = vsel %vm1800, %v3601, %v3552
        %v3610 = vsel %vm1800, %v3602, %v3554
        %vm3611 = vcmask 195584
        %v3612 = vsel %vm3611, %v3603, %v3572
        %v3613 = vsel %vm3611, %v3604, %v3574
        %v3614 = vsel %vm3611, %v3605, %v3576
        %v3615 = vsel %vm3611, %v3606, %v3578
        %v3616 = vsel %vm3611, %v3607, %v3580
        %v3617 = vsel %vm3611, %v3608, %v3582
        %v3618 = vsel %vm3611, %v3609, %v3584
        %v3619 = vsel %vm3611, %v3610, %v3586
        %v3620 = vld [vmem:[%s13] sm:$0xff]
        %v3621 = vld [vmem:[%s13 + $0x8] sm:$0xff]
        %v3622 = vld [vmem:[%s13 + $0x10] sm:$0xff]
        %v3623 = vld [vmem:[%s13 + $0x18] sm:$0xff]
        %v3625 = vsel %vm679, %v3612, 0
        %v3628 = vsel %vm679, %v3613, 0
        %v3631 = vsel %vm679, %v3614, 0
        %v3634 = vsel %vm679, %v3615, 0
        %v3637 = vsel %vm679, %v3616, 0
        %v3640 = vsel %vm679, %v3617, 0
        %v3643 = vsel %vm679, %v3618, 0
        %v3646 = vsel %vm679, %v3619, 0
        %3648 = vmatpush.msra.mxu0 0.0
        %3649 = vmatpush.msra.mxu0 0.0
        %3650 = vmatpush.msra.mxu0 0.0
        %3651 = vmatpush.msra.mxu0 0.0
        %3652 = vmatpush.msra.mxu0 0.0
        %3653 = vmatpush.msra.mxu0 0.0
        %3654 = vmatpush.msra.mxu0 0.0
        %3655 = vmatpush.msra.mxu0 0.0
        %3656 = vmatpush.msra.mxu0 0.0
        %3657 = vmatpush.msra.mxu0 0.0
        %3658 = vmatpush.msra.mxu0 0.0
        %3659 = vmatpush.msra.mxu0 0.0
        %3660 = vmatpush.msra.mxu0 %v3623
        %3661 = vmatpush.msra.mxu0 %v3622
        %3662 = vmatpush.msra.mxu0 %v3621
        %3663 = vmatpush.msra.mxu0 %v3620
        %3664 = vmatmul.f32.gmra.mxu0 %v3625
        %v3665 = vpop.f32.mrf.mxu0
        %v3666 = vadd.f32 0.0, %v3665
        %3667 = vmatmul.f32.gmra.mxu0 %v3628
        %v3668 = vpop.f32.mrf.mxu0
        %v3669 = vadd.f32 0.0, %v3668
        %3670 = vmatmul.f32.gmra.mxu0 %v3631
        %v3671 = vpop.f32.mrf.mxu0
        %v3672 = vadd.f32 0.0, %v3671
        %3673 = vmatmul.f32.gmra.mxu0 %v3634
        %v3674 = vpop.f32.mrf.mxu0
        %v3675 = vadd.f32 0.0, %v3674
        %3676 = vmatmul.f32.gmra.mxu0 %v3637
        %v3677 = vpop.f32.mrf.mxu0
        %v3678 = vadd.f32 0.0, %v3677
        %3679 = vmatmul.f32.gmra.mxu0 %v3640
        %v3680 = vpop.f32.mrf.mxu0
        %v3681 = vadd.f32 0.0, %v3680
        %3682 = vmatmul.f32.gmra.mxu0 %v3643
        %v3683 = vpop.f32.mrf.mxu0
        %v3684 = vadd.f32 0.0, %v3683
        %3685 = vmatmul.f32.gmra.mxu0 %v3646
        %v3686 = vpop.f32.mrf.mxu0
        %v3687 = vadd.f32 0.0, %v3686
        %3688 = vdwg.mxu0
        %v3689 = vadd.f32 %v671, %v3666
        %v3690 = vadd.f32 %v672, %v3669
        %v3691 = vadd.f32 %v673, %v3672
        %v3692 = vadd.f32 %v674, %v3675
        %v3693 = vadd.f32 %v675, %v3678
        %v3694 = vadd.f32 %v676, %v3681
        %v3695 = vadd.f32 %v677, %v3684
        %v3696 = vadd.f32 %v678, %v3687
        %v3697 = vld [vmem:[%s14] sm:$0x1]
        %v3699 = vperm.slane %v3697, 0
        %v3701 = vadd.f32 %v3689, %v3699
        %v3702 = vadd.f32 %v3690, %v3699
        %v3703 = vadd.f32 %v3691, %v3699
        %v3704 = vadd.f32 %v3692, %v3699
        %v3705 = vadd.f32 %v3693, %v3699
        %v3706 = vadd.f32 %v3694, %v3699
        %v3707 = vadd.f32 %v3695, %v3699
        %v3708 = vadd.f32 %v3696, %v3699
        %v3709 = vsel %vm679, %v3701, 0.0
        %3710 = vadd.xlane.f32.xlu0 %v3709
        %v3711 = vpop.xlane.xlu0 %3710
        %v3712 = vsel %vm679, %v3702, 0.0
        %3713 = vadd.xlane.f32.xlu0 %v3712
        %v3714 = vpop.xlane.xlu0 %3713
        %v3715 = vsel %vm679, %v3703, 0.0
        %3716 = vadd.xlane.f32.xlu0 %v3715
        %v3717 = vpop.xlane.xlu0 %3716
        %v3718 = vsel %vm679, %v3704, 0.0
        %3719 = vadd.xlane.f32.xlu0 %v3718
        %v3720 = vpop.xlane.xlu0 %3719
        %v3721 = vsel %vm679, %v3705, 0.0
        %3722 = vadd.xlane.f32.xlu0 %v3721
        %v3723 = vpop.xlane.xlu0 %3722
        %v3724 = vsel %vm679, %v3706, 0.0
        %3725 = vadd.xlane.f32.xlu0 %v3724
        %v3726 = vpop.xlane.xlu0 %3725
        %v3727 = vsel %vm679, %v3707, 0.0
        %3728 = vadd.xlane.f32.xlu0 %v3727
        %v3729 = vpop.xlane.xlu0 %3728
        %v3730 = vsel %vm679, %v3708, 0.0
        %3731 = vadd.xlane.f32.xlu0 %v3730
        %v3732 = vpop.xlane.xlu0 %3731
        %v3733 = vmul.f32 %v3711, %v710
        %v3734 = vmul.f32 %v3714, %v710
        %v3735 = vmul.f32 %v3717, %v710
        %v3736 = vmul.f32 %v3720, %v710
        %v3737 = vmul.f32 %v3723, %v710
        %v3738 = vmul.f32 %v3726, %v710
        %v3739 = vmul.f32 %v3729, %v710
        %v3740 = vmul.f32 %v3732, %v710
        %v3741 = vsub.f32 %v3701, %v3733
        %v3742 = vsub.f32 %v3702, %v3734
        %v3743 = vsub.f32 %v3703, %v3735
        %v3744 = vsub.f32 %v3704, %v3736
        %v3745 = vsub.f32 %v3705, %v3737
        %v3746 = vsub.f32 %v3706, %v3738
        %v3747 = vsub.f32 %v3707, %v3739
        %v3748 = vsub.f32 %v3708, %v3740
        %v3749 = vmul.f32 %v3741, %v3741
        %v3750 = vmul.f32 %v3742, %v3742
        %v3751 = vmul.f32 %v3743, %v3743
        %v3752 = vmul.f32 %v3744, %v3744
        %v3753 = vmul.f32 %v3745, %v3745
        %v3754 = vmul.f32 %v3746, %v3746
        %v3755 = vmul.f32 %v3747, %v3747
        %v3756 = vmul.f32 %v3748, %v3748
        %v3757 = vsel %vm679, %v3749, 0.0
        %3758 = vadd.xlane.f32.xlu0 %v3757
        %v3759 = vpop.xlane.xlu0 %3758
        %v3760 = vsel %vm679, %v3750, 0.0
        %3761 = vadd.xlane.f32.xlu0 %v3760
        %v3762 = vpop.xlane.xlu0 %3761
        %v3763 = vsel %vm679, %v3751, 0.0
        %3764 = vadd.xlane.f32.xlu0 %v3763
        %v3765 = vpop.xlane.xlu0 %3764
        %v3766 = vsel %vm679, %v3752, 0.0
        %3767 = vadd.xlane.f32.xlu0 %v3766
        %v3768 = vpop.xlane.xlu0 %3767
        %v3769 = vsel %vm679, %v3753, 0.0
        %3770 = vadd.xlane.f32.xlu0 %v3769
        %v3771 = vpop.xlane.xlu0 %3770
        %v3772 = vsel %vm679, %v3754, 0.0
        %3773 = vadd.xlane.f32.xlu0 %v3772
        %v3774 = vpop.xlane.xlu0 %3773
        %v3775 = vsel %vm679, %v3755, 0.0
        %3776 = vadd.xlane.f32.xlu0 %v3775
        %v3777 = vpop.xlane.xlu0 %3776
        %v3778 = vsel %vm679, %v3756, 0.0
        %3779 = vadd.xlane.f32.xlu0 %v3778
        %v3780 = vpop.xlane.xlu0 %3779
        %v3781 = vmul.f32 %v3759, %v710
        %v3782 = vmul.f32 %v3762, %v710
        %v3783 = vmul.f32 %v3765, %v710
        %v3784 = vmul.f32 %v3768, %v710
        %v3785 = vmul.f32 %v3771, %v710
        %v3786 = vmul.f32 %v3774, %v710
        %v3787 = vmul.f32 %v3777, %v710
        %v3788 = vmul.f32 %v3780, %v710
        %v3789 = vadd.f32 %v3781, 1e-05
        %v3790 = vadd.f32 %v3782, 1e-05
        %v3791 = vadd.f32 %v3783, 1e-05
        %v3792 = vadd.f32 %v3784, 1e-05
        %v3793 = vadd.f32 %v3785, 1e-05
        %v3794 = vadd.f32 %v3786, 1e-05
        %v3795 = vadd.f32 %v3787, 1e-05
        %v3796 = vadd.f32 %v3788, 1e-05
        %v3797 = vrsqrt.pop %v3789
        %v3798 = vmul.f32 %v3797, %v3789
        %v3799 = vmul.f32 %v3798, %v3797
        %v3800 = vmul.f32 0.5, %v3799
        %v3801 = vsub.f32 1.5, %v3800
        %v3802 = vmul.f32 %v3797, %v3801
        %vm3803 = vweird.f32 %v3789
        %vm3804 = vweird.f32 %v3797
        %vm3805 = vmor %vm3803, %vm3804
        %v3806 = vsel %vm3805, %v3797, %v3802
        %v3807 = vrsqrt.pop %v3790
        %v3808 = vmul.f32 %v3807, %v3790
        %v3809 = vmul.f32 %v3808, %v3807
        %v3810 = vmul.f32 0.5, %v3809
        %v3811 = vsub.f32 1.5, %v3810
        %v3812 = vmul.f32 %v3807, %v3811
        %vm3813 = vweird.f32 %v3790
        %vm3814 = vweird.f32 %v3807
        %vm3815 = vmor %vm3813, %vm3814
        %v3816 = vsel %vm3815, %v3807, %v3812
        %v3817 = vrsqrt.pop %v3791
        %v3818 = vmul.f32 %v3817, %v3791
        %v3819 = vmul.f32 %v3818, %v3817
        %v3820 = vmul.f32 0.5, %v3819
        %v3821 = vsub.f32 1.5, %v3820
        %v3822 = vmul.f32 %v3817, %v3821
        %vm3823 = vweird.f32 %v3791
        %vm3824 = vweird.f32 %v3817
        %vm3825 = vmor %vm3823, %vm3824
        %v3826 = vsel %vm3825, %v3817, %v3822
        %v3827 = vrsqrt.pop %v3792
        %v3828 = vmul.f32 %v3827, %v3792
        %v3829 = vmul.f32 %v3828, %v3827
        %v3830 = vmul.f32 0.5, %v3829
        %v3831 = vsub.f32 1.5, %v3830
        %v3832 = vmul.f32 %v3827, %v3831
        %vm3833 = vweird.f32 %v3792
        %vm3834 = vweird.f32 %v3827
        %vm3835 = vmor %vm3833, %vm3834
        %v3836 = vsel %vm3835, %v3827, %v3832
        %v3837 = vrsqrt.pop %v3793
        %v3838 = vmul.f32 %v3837, %v3793
        %v3839 = vmul.f32 %v3838, %v3837
        %v3840 = vmul.f32 0.5, %v3839
        %v3841 = vsub.f32 1.5, %v3840
        %v3842 = vmul.f32 %v3837, %v3841
        %vm3843 = vweird.f32 %v3793
        %vm3844 = vweird.f32 %v3837
        %vm3845 = vmor %vm3843, %vm3844
        %v3846 = vsel %vm3845, %v3837, %v3842
        %v3847 = vrsqrt.pop %v3794
        %v3848 = vmul.f32 %v3847, %v3794
        %v3849 = vmul.f32 %v3848, %v3847
        %v3850 = vmul.f32 0.5, %v3849
        %v3851 = vsub.f32 1.5, %v3850
        %v3852 = vmul.f32 %v3847, %v3851
        %vm3853 = vweird.f32 %v3794
        %vm3854 = vweird.f32 %v3847
        %vm3855 = vmor %vm3853, %vm3854
        %v3856 = vsel %vm3855, %v3847, %v3852
        %v3857 = vrsqrt.pop %v3795
        %v3858 = vmul.f32 %v3857, %v3795
        %v3859 = vmul.f32 %v3858, %v3857
        %v3860 = vmul.f32 0.5, %v3859
        %v3861 = vsub.f32 1.5, %v3860
        %v3862 = vmul.f32 %v3857, %v3861
        %vm3863 = vweird.f32 %v3795
        %vm3864 = vweird.f32 %v3857
        %vm3865 = vmor %vm3863, %vm3864
        %v3866 = vsel %vm3865, %v3857, %v3862
        %v3867 = vrsqrt.pop %v3796
        %v3868 = vmul.f32 %v3867, %v3796
        %v3869 = vmul.f32 %v3868, %v3867
        %v3870 = vmul.f32 0.5, %v3869
        %v3871 = vsub.f32 1.5, %v3870
        %v3872 = vmul.f32 %v3867, %v3871
        %vm3873 = vweird.f32 %v3796
        %vm3874 = vweird.f32 %v3867
        %vm3875 = vmor %vm3873, %vm3874
        %v3876 = vsel %vm3875, %v3867, %v3872
        %v3877 = vmul.f32 %v3741, %v3806
        %v3878 = vmul.f32 %v3742, %v3816
        %v3879 = vmul.f32 %v3743, %v3826
        %v3880 = vmul.f32 %v3744, %v3836
        %v3881 = vmul.f32 %v3745, %v3846
        %v3882 = vmul.f32 %v3746, %v3856
        %v3883 = vmul.f32 %v3747, %v3866
        %v3884 = vmul.f32 %v3748, %v3876
        %v3885 = vld [vmem:[%s15] sm:$0x1]
        %v3887 = vperm.slane %v3885, 0
        %v3889 = vmul.f32 %v3877, %v3887
        %v3890 = vmul.f32 %v3878, %v3887
        %v3891 = vmul.f32 %v3879, %v3887
        %v3892 = vmul.f32 %v3880, %v3887
        %v3893 = vmul.f32 %v3881, %v3887
        %v3894 = vmul.f32 %v3882, %v3887
        %v3895 = vmul.f32 %v3883, %v3887
        %v3896 = vmul.f32 %v3884, %v3887
        %v3897 = vld [vmem:[%s16] sm:$0x1]
        %v3899 = vperm.slane %v3897, 0
        %v3901 = vadd.f32 %v3889, %v3899
        %v3902 = vadd.f32 %v3890, %v3899
        %v3903 = vadd.f32 %v3891, %v3899
        %v3904 = vadd.f32 %v3892, %v3899
        %v3905 = vadd.f32 %v3893, %v3899
        %v3906 = vadd.f32 %v3894, %v3899
        %v3907 = vadd.f32 %v3895, %v3899
        %v3908 = vadd.f32 %v3896, %v3899
        %v3909 = vld [vmem:[%s17] sm:$0xff]
        %v3910 = vld [vmem:[%s17 + $0x8] sm:$0xff]
        %v3911 = vld [vmem:[%s17 + $0x10] sm:$0xff]
        %v3912 = vld [vmem:[%s17 + $0x18] sm:$0xff]
        %v3913 = vld [vmem:[%s18] sm:$0x1]
        %v3915 = vperm.slane %v3913, 0
        %v3918 = vsel %vm679, %v3901, 0
        %v3921 = vsel %vm679, %v3902, 0
        %v3924 = vsel %vm679, %v3903, 0
        %v3927 = vsel %vm679, %v3904, 0
        %v3930 = vsel %vm679, %v3905, 0
        %v3933 = vsel %vm679, %v3906, 0
        %v3936 = vsel %vm679, %v3907, 0
        %v3939 = vsel %vm679, %v3908, 0
        %3941 = vmatpush.msra.mxu0 0.0
        %3942 = vmatpush.msra.mxu0 0.0
        %3943 = vmatpush.msra.mxu0 0.0
        %3944 = vmatpush.msra.mxu0 0.0
        %3945 = vmatpush.msra.mxu0 0.0
        %3946 = vmatpush.msra.mxu0 0.0
        %3947 = vmatpush.msra.mxu0 0.0
        %3948 = vmatpush.msra.mxu0 0.0
        %3949 = vmatpush.msra.mxu0 0.0
        %3950 = vmatpush.msra.mxu0 0.0
        %3951 = vmatpush.msra.mxu0 0.0
        %3952 = vmatpush.msra.mxu0 0.0
        %3953 = vmatpush.msra.mxu0 %v3912
        %3954 = vmatpush.msra.mxu0 %v3911
        %3955 = vmatpush.msra.mxu0 %v3910
        %3956 = vmatpush.msra.mxu0 %v3909
        %3957 = vmatmul.f32.gmra.mxu0 %v3918
        %v3958 = vpop.f32.mrf.mxu0
        %v3959 = vadd.f32 %v3915, %v3958
        %3960 = vmatmul.f32.gmra.mxu0 %v3921
        %v3961 = vpop.f32.mrf.mxu0
        %v3962 = vadd.f32 %v3915, %v3961
        %3963 = vmatmul.f32.gmra.mxu0 %v3924
        %v3964 = vpop.f32.mrf.mxu0
        %v3965 = vadd.f32 %v3915, %v3964
        %3966 = vmatmul.f32.gmra.mxu0 %v3927
        %v3967 = vpop.f32.mrf.mxu0
        %v3968 = vadd.f32 %v3915, %v3967
        %3969 = vmatmul.f32.gmra.mxu0 %v3930
        %v3970 = vpop.f32.mrf.mxu0
        %v3971 = vadd.f32 %v3915, %v3970
        %3972 = vmatmul.f32.gmra.mxu0 %v3933
        %v3973 = vpop.f32.mrf.mxu0
        %v3974 = vadd.f32 %v3915, %v3973
        %3975 = vmatmul.f32.gmra.mxu0 %v3936
        %v3976 = vpop.f32.mrf.mxu0
        %v3977 = vadd.f32 %v3915, %v3976
        %3978 = vmatmul.f32.gmra.mxu0 %v3939
        %v3979 = vpop.f32.mrf.mxu0
        %v3980 = vadd.f32 %v3915, %v3979
        %3981 = vdwg.mxu0
        %v3982 = vmul.f32 %v3959, 0.5
        %v3983 = vmul.f32 %v3962, 0.5
        %v3984 = vmul.f32 %v3965, 0.5
        %v3985 = vmul.f32 %v3968, 0.5
        %v3986 = vmul.f32 %v3971, 0.5
        %v3987 = vmul.f32 %v3974, 0.5
        %v3988 = vmul.f32 %v3977, 0.5
        %v3989 = vmul.f32 %v3980, 0.5
        %v3990 = vmul.f32 %v3959, 0.044715
        %v3991 = vmul.f32 %v3962, 0.044715
        %v3992 = vmul.f32 %v3965, 0.044715
        %v3993 = vmul.f32 %v3968, 0.044715
        %v3994 = vmul.f32 %v3971, 0.044715
        %v3995 = vmul.f32 %v3974, 0.044715
        %v3996 = vmul.f32 %v3977, 0.044715
        %v3997 = vmul.f32 %v3980, 0.044715
        %v3998 = vmul.f32 %v3990, %v3959
        %v3999 = vmul.f32 %v3991, %v3962
        %v4000 = vmul.f32 %v3992, %v3965
        %v4001 = vmul.f32 %v3993, %v3968
        %v4002 = vmul.f32 %v3994, %v3971
        %v4003 = vmul.f32 %v3995, %v3974
        %v4004 = vmul.f32 %v3996, %v3977
        %v4005 = vmul.f32 %v3997, %v3980
        %v4006 = vmul.f32 %v3998, %v3959
        %v4007 = vmul.f32 %v3999, %v3962
        %v4008 = vmul.f32 %v4000, %v3965
        %v4009 = vmul.f32 %v4001, %v3968
        %v4010 = vmul.f32 %v4002, %v3971
        %v4011 = vmul.f32 %v4003, %v3974
        %v4012 = vmul.f32 %v4004, %v3977
        %v4013 = vmul.f32 %v4005, %v3980
        %v4014 = vadd.f32 %v3959, %v4006
        %v4015 = vadd.f32 %v3962, %v4007
        %v4016 = vadd.f32 %v3965, %v4008
        %v4017 = vadd.f32 %v3968, %v4009
        %v4018 = vadd.f32 %v3971, %v4010
        %v4019 = vadd.f32 %v3974, %v4011
        %v4020 = vadd.f32 %v3977, %v4012
        %v4021 = vadd.f32 %v3980, %v4013
        %v4022 = vmul.f32 %v4014, 0.7978846
        %v4023 = vmul.f32 %v4015, 0.7978846
        %v4024 = vmul.f32 %v4016, 0.7978846
        %v4025 = vmul.f32 %v4017, 0.7978846
        %v4026 = vmul.f32 %v4018, 0.7978846
        %v4027 = vmul.f32 %v4019, 0.7978846
        %v4028 = vmul.f32 %v4020, 0.7978846
        %v4029 = vmul.f32 %v4021, 0.7978846
        %v4030 = vtanh.pop %v4022
        %v4031 = vtanh.pop %v4023
        %v4032 = vtanh.pop %v4024
        %v4033 = vtanh.pop %v4025
        %v4034 = vtanh.pop %v4026
        %v4035 = vtanh.pop %v4027
        %v4036 = vtanh.pop %v4028
        %v4037 = vtanh.pop %v4029
        %v4038 = vadd.f32 %v4030, 1.0
        %v4039 = vadd.f32 %v4031, 1.0
        %v4040 = vadd.f32 %v4032, 1.0
        %v4041 = vadd.f32 %v4033, 1.0
        %v4042 = vadd.f32 %v4034, 1.0
        %v4043 = vadd.f32 %v4035, 1.0
        %v4044 = vadd.f32 %v4036, 1.0
        %v4045 = vadd.f32 %v4037, 1.0
        %v4046 = vmul.f32 %v3982, %v4038
        %v4047 = vmul.f32 %v3983, %v4039
        %v4048 = vmul.f32 %v3984, %v4040
        %v4049 = vmul.f32 %v3985, %v4041
        %v4050 = vmul.f32 %v3986, %v4042
        %v4051 = vmul.f32 %v3987, %v4043
        %v4052 = vmul.f32 %v3988, %v4044
        %v4053 = vmul.f32 %v3989, %v4045
        %v4054 = vld [vmem:[%s19] sm:$0xff]
        %v4055 = vld [vmem:[%s19 + $0x8] sm:$0xff]
        %v4056 = vld [vmem:[%s19 + $0x10] sm:$0xff]
        %v4057 = vld [vmem:[%s19 + $0x18] sm:$0xff]
        %v4058 = vld [vmem:[%s19 + $0x20] sm:$0xff]
        %v4059 = vld [vmem:[%s19 + $0x28] sm:$0xff]
        %v4060 = vld [vmem:[%s19 + $0x30] sm:$0xff]
        %v4061 = vld [vmem:[%s19 + $0x38] sm:$0xff]
        %v4062 = vld [vmem:[%s19 + $0x40] sm:$0xff]
        %v4063 = vld [vmem:[%s19 + $0x48] sm:$0xff]
        %v4064 = vld [vmem:[%s19 + $0x50] sm:$0xff]
        %v4065 = vld [vmem:[%s19 + $0x58] sm:$0xff]
        %v4066 = vld [vmem:[%s19 + $0x60] sm:$0xff]
        %v4067 = vld [vmem:[%s19 + $0x68] sm:$0xff]
        %v4068 = vld [vmem:[%s19 + $0x70] sm:$0xff]
        %v4069 = vld [vmem:[%s19 + $0x78] sm:$0xff]
        %v4070 = vld [vmem:[%s20] sm:$0x1]
        %v4072 = vperm.slane %v4070, 0
        %4074 = vmatpush.msra.mxu0 %v4069
        %4075 = vmatpush.msra.mxu0 %v4068
        %4076 = vmatpush.msra.mxu0 %v4067
        %4077 = vmatpush.msra.mxu0 %v4066
        %4078 = vmatpush.msra.mxu0 %v4065
        %4079 = vmatpush.msra.mxu0 %v4064
        %4080 = vmatpush.msra.mxu0 %v4063
        %4081 = vmatpush.msra.mxu0 %v4062
        %4082 = vmatpush.msra.mxu0 %v4061
        %4083 = vmatpush.msra.mxu0 %v4060
        %4084 = vmatpush.msra.mxu0 %v4059
        %4085 = vmatpush.msra.mxu0 %v4058
        %4086 = vmatpush.msra.mxu0 %v4057
        %4087 = vmatpush.msra.mxu0 %v4056
        %4088 = vmatpush.msra.mxu0 %v4055
        %4089 = vmatpush.msra.mxu0 %v4054
        %4090 = vmatmul.f32.gmra.mxu0 %v4046
        %v4091 = vpop.f32.mrf.mxu0
        %v4092 = vadd.f32 %v4072, %v4091
        %4093 = vmatmul.f32.gmra.mxu0 %v4047
        %v4094 = vpop.f32.mrf.mxu0
        %v4095 = vadd.f32 %v4072, %v4094
        %4096 = vmatmul.f32.gmra.mxu0 %v4048
        %v4097 = vpop.f32.mrf.mxu0
        %v4098 = vadd.f32 %v4072, %v4097
        %4099 = vmatmul.f32.gmra.mxu0 %v4049
        %v4100 = vpop.f32.mrf.mxu0
        %v4101 = vadd.f32 %v4072, %v4100
        %4102 = vmatmul.f32.gmra.mxu0 %v4050
        %v4103 = vpop.f32.mrf.mxu0
        %v4104 = vadd.f32 %v4072, %v4103
        %4105 = vmatmul.f32.gmra.mxu0 %v4051
        %v4106 = vpop.f32.mrf.mxu0
        %v4107 = vadd.f32 %v4072, %v4106
        %4108 = vmatmul.f32.gmra.mxu0 %v4052
        %v4109 = vpop.f32.mrf.mxu0
        %v4110 = vadd.f32 %v4072, %v4109
        %4111 = vmatmul.f32.gmra.mxu0 %v4053
        %v4112 = vpop.f32.mrf.mxu0
        %v4113 = vadd.f32 %v4072, %v4112
        %4114 = vdwg.mxu0
        %v4115 = vadd.f32 %v4092, %v3701
        %v4116 = vadd.f32 %v4095, %v3702
        %v4117 = vadd.f32 %v4098, %v3703
        %v4118 = vadd.f32 %v4101, %v3704
        %v4119 = vadd.f32 %v4104, %v3705
        %v4120 = vadd.f32 %v4107, %v3706
        %v4121 = vadd.f32 %v4110, %v3707
        %v4122 = vadd.f32 %v4113, %v3708
        %4123 = vst.msk [vmem:[%s670] sm:$0xff] %vm679, %v4115
        %4124 = vst.msk [vmem:[%s670 + $0x8] sm:$0xff] %vm679, %v4116
        %4125 = vst.msk [vmem:[%s670 + $0x10] sm:$0xff] %vm679, %v4117
        %4126 = vst.msk [vmem:[%s670 + $0x18] sm:$0xff] %vm679, %v4118
        %4127 = vst.msk [vmem:[%s670 + $0x20] sm:$0xff] %vm679, %v4119
        %4128 = vst.msk [vmem:[%s670 + $0x28] sm:$0xff] %vm679, %v4120
        %4129 = vst.msk [vmem:[%s670 + $0x30] sm:$0xff] %vm679, %v4121
        %4130 = vst.msk [vmem:[%s670 + $0x38] sm:$0xff] %vm679, %v4122
        %p4131 = scmp.lt.s32.totalorder %s33, 1
        %s4132 = scalar_select %p4131, %s33, 1
        %s4133 = smul.addr %s4132, 8
        %s4134 = smul.addr %s4133, 8
        %s4135 = scalar_lea.vmem %s21, %s4134
        // Predicated region
        $region109: #{tpu_custom_call.1} parent=103 // pred_check
          %p4136 = pneg %p497
        $region110: #{tpu_custom_call.1} parent=103 // pred_check_branch
          %4138 = sbr.rel (%p4136) target = $region112
        $region111: #{tpu_custom_call.1} parent=103 // pred_region
          _
        $region112: #{tpu_custom_call.1} parent=103 // pred_fallthru
          _
      $region104: #{tpu_custom_call.1} parent=5 // pred_fallthru
        _
      %p4139 = scmp.le.s32.totalorder 2, %s28
      // Predicated region
      $region113: #{tpu_custom_call.1} parent=5 // pred_check
        %p4140 = pneg %p4139
      $region114: #{tpu_custom_call.1} parent=5 // pred_check_branch
        %4142 = sbr.rel (%p4140) target = $region116
      $region115: #{tpu_custom_call.1} parent=5 // pred_region
        %s4143 = ssub.s32 %s28, 2
        // Predicated region
        $region117: #{tpu_custom_call.1} parent=115 // pred_check
          %p4144 = pneg %p503
        $region118: #{tpu_custom_call.1} parent=115 // pred_check_branch
          %4146 = sbr.rel (%p4144) target = $region120
        $region119: #{tpu_custom_call.1} parent=115 // pred_region
          %p4147 = scmp.lt.s32.totalorder %s34, 1
          %s4148 = scalar_select %p4147, %s34, 1
          %s4149 = smul.addr %s4148, 8
          %s4150 = smul.addr %s4149, 8
          %s4151 = scalar_lea.vmem %s21, %s4150
        $region120: #{tpu_custom_call.1} parent=115 // pred_fallthru
          _
      $region116: #{tpu_custom_call.1} parent=5 // pred_fallthru
        _
    $region6: #{tpu_custom_call.1} parent=1 // loop_footer
      %s32 = sadd.s32 1, %s28
    $region7: #{tpu_custom_call.1} parent=1 // loop_footer_branch
      %27 = sbr.rel target = $region3
    $region8: #{tpu_custom_call.1} parent=1 // loop_exit
      _
    %4152 = vsyncpa [#allocation3], 1
    %s4153 = scalar_lea.sflag [#allocation3], 1
    %4154 = vsyncpa %s4153, 1

</llo_original>
